<compile_context>
chip_gen: v7x
topology: tpu7x:2x2x1
jax: 0.10.0
libtpu: 0.0.40
codegen_flags: <defaults>
</compile_context>

<pallas_src>
import functools

import jax
import jax.numpy as jnp
from jax.experimental import pallas as pl
from jax.experimental.pallas import tpu as pltpu


def _nar_decoder_kernel(enc_ref, dec_q_ref, base_ref,
                        w_enc_ref, w_att_ref, w_out_c_ref,
                        logits_ref, ctx_ref, *, attn_dtype):
    """One batch-block (Bb samples) per grid step.

    enc_ref    : (Bb, L, Denc)   encoder outputs for this batch block
    dec_q_ref  : (T, A)          dec_proj(pos) + b_dec + b_enc   (batch-invariant)
    base_ref   : (T, Vpad)       hidden @ W_out_h + b_out        (batch-invariant)
    w_enc_ref  : (Denc, A)
    w_att_ref  : (1, A)
    w_out_c_ref: (Denc, Vpad)
    logits_ref : (Bb, T, Vpad)   lane-dense output block
    ctx_ref    : (Bb, T, Denc)   VMEM scratch for the attention context
    """
    Bb, L, Denc = enc_ref.shape
    T, A = dec_q_ref.shape
    Vp = base_ref.shape[-1]

    enc3 = enc_ref[...]                                   # (Bb, L, Denc) f32
    enc2 = enc3.reshape(Bb * L, Denc)                     # free merge (L % 8 == 0, Denc full)

    # enc_proj for the whole batch block in one MXU matmul (b_enc folded into dec_q).
    enc_p = jnp.dot(enc2, w_enc_ref[...],
                    preferred_element_type=jnp.float32)   # (Bb*L, A)

    # Elementwise / tanh path dtype: bf16 on v6e/v7x, f32 on v5e.
    enc_pc = enc_p.reshape(Bb, L, A).astype(attn_dtype)   # (Bb, L, A)
    dec_q = dec_q_ref[...].astype(attn_dtype)             # (T, A)
    w_att = w_att_ref[...].astype(attn_dtype)             # (1, A)

    # Per-decoding-step loop: live additive-attention slice stays at
    # (Bb, L, A) (fits the vreg file) instead of the old (Bb, T, L, A) spill.
    for t in range(T):
        comb = jnp.tanh(enc_pc + dec_q[t][None, None, :])                   # (Bb, L, A)
        scores = jnp.sum(comb * w_att[None, :, :], axis=-1,
                         dtype=jnp.float32)                                  # (Bb, L) f32 accum
        m = jnp.max(scores, axis=-1, keepdims=True)
        e = jnp.exp(scores - m)
        attn = e * pl.reciprocal(jnp.sum(e, axis=-1, keepdims=True),
                                 approx=True)                                # (Bb, L)
        # context[b] = sum_l attn[b, l] * enc[b, l, :]  -- VPU weighted sum
        # (avoids degenerate M=1/K=16 batched matmuls and any enc relayout).
        ctx_ref[:, t, :] = jnp.sum(attn[:, :, None] * enc3, axis=1)          # (Bb, Denc)

    # fc_out: hidden@W_h + b_out is the precomputed `base`; only the
    # batch-dependent context@W_c half is computed, for the whole block at once.
    ctx2 = ctx_ref[...].reshape(Bb * T, Denc)
    out2 = jnp.dot(ctx2, w_out_c_ref[...],
                   preferred_element_type=jnp.float32)                       # (Bb*T, Vpad)
    logits_ref[...] = out2.reshape(Bb, T, Vp) + base_ref[...][None, :, :]


def _attn_compute_dtype():
    """bf16 elementwise path only where the VPU/EUP support it (v6e / v7x)."""
    try:
        kind = jax.devices()[0].device_kind.lower()
    except Exception:
        return jnp.float32
    return jnp.bfloat16 if ("v6" in kind or "v7" in kind) else jnp.float32


def nar_decoder_forward(encoder_outputs, params, *, max_len, block_b=16):
    """Returns (logits [B, T, V], preds [B, T]) -- the target_seq=None path."""
    B, L, Denc = encoder_outputs.shape
    T = max_len
    A = params["w_dec"].shape[1]
    V = params["b_out"].shape[1]
    Vp = ((V + 127) // 128) * 128                      # lane-dense vocab padding

    attn_dtype = _attn_compute_dtype()

    # --- batch-invariant precompute (once, not once per batch element) ---
    pos = params["pos_embedding"][:T]                                   # (T, E)  dropout = identity (eval)
    dec_q = pos @ params["w_dec"] + params["b_dec"] + params["b_enc"]   # (T, A)  b_enc folded in (exact)
    hidden = pos @ params["w_hid"] + params["b_hid"]                    # (T, H)  dropout = identity (eval)
    base = hidden @ params["w_out_h"] + params["b_out"]                 # (T, V)
    base_p = jnp.pad(base, ((0, 0), (0, Vp - V)))                       # (T, Vpad)
    w_out_c_p = jnp.pad(params["w_out_c"], ((0, 0), (0, Vp - V)))       # (Denc, Vpad)
    # b_att is dropped: softmax shift-invariance => it never affects
    # attn_weights / context / logits / preds.

    # --- balance-aware batch blocking ---
    n_blk = pl.cdiv(B, block_b)
    if B >= 2:
        n_blk = max(n_blk, 2)          # let the parallel axis span both v7x TCs
    Bb = pl.cdiv(B, n_blk)             # balanced blocks -> minimal padded rows (v5e)
    n_blk = pl.cdiv(B, Bb)
    B_pad = n_blk * Bb
    enc_in = encoder_outputs
    if B_pad != B:
        enc_in = jnp.pad(encoder_outputs, ((0, B_pad - B), (0, 0), (0, 0)))

    def _const_spec(shape):
        n = len(shape)
        return pl.BlockSpec(shape, lambda b, n=n: (0,) * n)

    grid_spec = pltpu.PrefetchScalarGridSpec(
        num_scalar_prefetch=0,
        grid=(n_blk,),
        in_specs=[
            pl.BlockSpec((Bb, L, Denc), lambda b: (b, 0, 0)),   # encoder outputs (tiled over batch)
            _const_spec((T, A)),                                 # dec_q (+ b_dec + b_enc), resident
            _const_spec((T, Vp)),                                # base logits, resident
            _const_spec((Denc, A)),                              # w_enc
            _const_spec((1, A)),                                 # w_att
            _const_spec((Denc, Vp)),                             # w_out_c (vocab-padded)
        ],
        out_specs=pl.BlockSpec((Bb, T, Vp), lambda b: (b, 0, 0)),
        scratch_shapes=[pltpu.VMEM((Bb, T, Denc), jnp.float32)],
    )

    logits_pad = pl.pallas_call(
        functools.partial(_nar_decoder_kernel, attn_dtype=attn_dtype),
        out_shape=jax.ShapeDtypeStruct((B_pad, T, Vp), jnp.float32),
        grid_spec=grid_spec,
        compiler_params=pltpu.CompilerParams(
            dimension_semantics=("parallel",),        # batch blocks across TCs (v7x megacore)
            vmem_limit_bytes=32 * 1024 * 1024,        # explicit budget; fits v5e/v6e/v7x
        ),
    )(enc_in, dec_q, base_p,
      params["w_enc"], params["w_att"], w_out_c_p)

    logits = logits_pad[:B, :, :V]                           # strip batch + vocab padding
    preds = jnp.argmax(logits, axis=-1).astype(jnp.int32)    # argmax in the wrapper, not the kernel
    return logits, preds


def nar_decoder_ref(enc, params, T):
    """Pure-JAX reference of the PyTorch forward (eval mode, target_seq=None)."""
    pos = params["pos_embedding"][:T]                                    # (T, E)
    enc_p = enc @ params["w_enc"] + params["b_enc"][0]                   # (B, L, A)
    dec_q = pos @ params["w_dec"] + params["b_dec"][0]                   # (T, A)
    comb = jnp.tanh(enc_p[:, None, :, :] + dec_q[None, :, None, :])      # (B, T, L, A)
    scores = jnp.einsum('btla,a->btl', comb, params["w_att"][0]) + params["b_att"][0, 0]
    attn = jax.nn.softmax(scores, axis=-1)
    context = jnp.einsum('btl,bld->btd', attn, enc)                      # (B, T, Denc)
    hidden = pos @ params["w_hid"] + params["b_hid"][0]                  # (T, H)
    logits = ((hidden @ params["w_out_h"])[None]
              + context @ params["w_out_c"] + params["b_out"][0])
    preds = jnp.argmax(logits, axis=-1).astype(jnp.int32)
    return logits, preds


def init_params(key, *, hidden_size, enc_output_dim, vocab_size,
                embedding_dim, attention_dim, max_len):
    ks = jax.random.split(key, 12)
    s = 0.1
    return {
        "pos_embedding": jax.random.normal(ks[0], (max_len, embedding_dim), jnp.float32),
        "w_enc": s * jax.random.normal(ks[1], (enc_output_dim, attention_dim), jnp.float32),
        "b_enc": s * jax.random.normal(ks[2], (1, attention_dim), jnp.float32),
        "w_dec": s * jax.random.normal(ks[3], (embedding_dim, attention_dim), jnp.float32),
        "b_dec": s * jax.random.normal(ks[4], (1, attention_dim), jnp.float32),
        "w_att": s * jax.random.normal(ks[5], (1, attention_dim), jnp.float32),
        "b_att": s * jax.random.normal(ks[6], (1, 1), jnp.float32),
        "w_hid": s * jax.random.normal(ks[7], (embedding_dim, hidden_size), jnp.float32),
        "b_hid": s * jax.random.normal(ks[8], (1, hidden_size), jnp.float32),
        "w_out_h": s * jax.random.normal(ks[9], (hidden_size, vocab_size), jnp.float32),
        "w_out_c": s * jax.random.normal(ks[10], (enc_output_dim, vocab_size), jnp.float32),
        "b_out": s * jax.random.normal(ks[11], (1, vocab_size), jnp.float32),
    }


if __name__ == "__main__":
    # Small shapes consistent with the module's forward.  embedding/attention
    # dims use the module defaults (128) so the attention intermediate is
    # lane-dense.  B=10 exercises the balance-aware blocking (two blocks of 5,
    # zero padding, one per v7x TensorCore).
    B, L = 10, 16                # batch, encoder sequence length
    hidden_size = 32
    enc_output_dim = 32
    vocab_size = 20
    embedding_dim = 128          # module default
    attention_dim = 128          # module default
    max_len = 8                  # decoding steps T (target_seq=None path)

    key = jax.random.PRNGKey(0)
    k_enc, k_par = jax.random.split(key)
    encoder_outputs = jax.random.normal(k_enc, (B, L, enc_output_dim), jnp.float32)
    params = init_params(k_par,
                         hidden_size=hidden_size, enc_output_dim=enc_output_dim,
                         vocab_size=vocab_size, embedding_dim=embedding_dim,
                         attention_dim=attention_dim, max_len=max_len)

    fwd = jax.jit(nar_decoder_forward, static_argnames=("max_len", "block_b"))
    logits, preds = fwd(encoder_outputs, params, max_len=max_len)
    logits, preds = jax.block_until_ready((logits, preds))

    ref_logits, ref_preds = nar_decoder_ref(encoder_outputs, params, max_len)

    assert logits.shape == (B, max_len, vocab_size)
    assert preds.shape == (B, max_len)

    # Tolerances: approx-reciprocal softmax always; looser when the bf16
    # elementwise path is active (v6e / v7x).
    bf16_path = _attn_compute_dtype() == jnp.bfloat16
    tol = 2e-2 if bf16_path else 2e-3
    margin = 5e-2 if bf16_path else 5e-3
    assert jnp.allclose(logits, ref_logits, rtol=tol, atol=tol), "logits mismatch"
    # argmax agreement up to numerical tolerance (exact except for near-ties
    # smaller than the approximation error).
    pred_vals = jnp.take_along_axis(ref_logits, preds[..., None], axis=-1)[..., 0]
    assert bool(jnp.all(pred_vals >= ref_logits.max(axis=-1) - margin)), "preds mismatch"

    print("KERNEL_OK")
</pallas_src>

<mosaic_0001>
module attributes {stable_mosaic.version = 11 : i64} {
  func.func @_nar_decoder_kernel(%arg0: i32, %arg1: memref<5x16x32xf32, #tpu.memory_space<vmem>>, %arg2: memref<8x128xf32, #tpu.memory_space<vmem>>, %arg3: memref<8x128xf32, #tpu.memory_space<vmem>>, %arg4: memref<32x128xf32, #tpu.memory_space<vmem>>, %arg5: memref<1x128xf32, #tpu.memory_space<vmem>>, %arg6: memref<32x128xf32, #tpu.memory_space<vmem>>, %arg7: memref<5x8x128xf32, #tpu.memory_space<vmem>>, %arg8: memref<5x8x32xf32, #tpu.memory_space<vmem>>) attributes {dimension_semantics = [#tpu.dimension_semantics<parallel>], iteration_bounds = array<i64: 2>, scalar_prefetch = 0 : i64, scratch_operands = 1 : i64, tpu.core_type = #tpu.core_type<tc>, window_params = [{transform_indices = @transform_0, window_bounds = array<i64: 5, 16, 32>}, {pipeline_mode = #tpu.pipeline_mode<synchronous>, transform_indices = @transform_1, window_bounds = array<i64: 8, 128>}, {pipeline_mode = #tpu.pipeline_mode<synchronous>, transform_indices = @transform_2, window_bounds = array<i64: 8, 128>}, {pipeline_mode = #tpu.pipeline_mode<synchronous>, transform_indices = @transform_3, window_bounds = array<i64: 32, 128>}, {pipeline_mode = #tpu.pipeline_mode<synchronous>, transform_indices = @transform_4, window_bounds = array<i64: 1, 128>}, {pipeline_mode = #tpu.pipeline_mode<synchronous>, transform_indices = @transform_5, window_bounds = array<i64: 32, 128>}, {transform_indices = @transform_6, window_bounds = array<i64: 5, 8, 128>}]} {
    %c0 = arith.constant 0 : index
    %c0_0 = arith.constant 0 : index
    %c0_1 = arith.constant 0 : index
    %0 = vector.load %arg1[%c0, %c0_0, %c0_1] : memref<5x16x32xf32, #tpu.memory_space<vmem>>, vector<5x16x32xf32>
    %1 = vector.shape_cast %0 : vector<5x16x32xf32> to vector<80x32xf32>
    %c0_2 = arith.constant 0 : index
    %c0_3 = arith.constant 0 : index
    %2 = vector.load %arg4[%c0_2, %c0_3] : memref<32x128xf32, #tpu.memory_space<vmem>>, vector<32x128xf32>
    %cst = arith.constant dense<0.000000e+00> : vector<80x128xf32>
    %3 = tpu.matmul %1, %2, %cst {dimension_numbers = #tpu.dot_dimension_numbers<[1], [0], [0], [1], [0, 0, 1, 1], [], []>} : vector<80x32xf32>, vector<32x128xf32>, vector<80x128xf32> -> vector<80x128xf32>
    %4 = vector.shape_cast %3 : vector<80x128xf32> to vector<5x16x128xf32>
    %c0_4 = arith.constant 0 : index
    %c0_5 = arith.constant 0 : index
    %5 = vector.load %arg2[%c0_4, %c0_5] : memref<8x128xf32, #tpu.memory_space<vmem>>, vector<8x128xf32>
    %c0_6 = arith.constant 0 : index
    %c0_7 = arith.constant 0 : index
    %6 = vector.load %arg5[%c0_6, %c0_7] : memref<1x128xf32, #tpu.memory_space<vmem>>, vector<1x128xf32>
    %7 = vector.extract_strided_slice %5 {offsets = [0, 0], sizes = [1, 128], strides = [1, 1]} : vector<8x128xf32> to vector<1x128xf32>
    %8 = vector.shape_cast %7 : vector<1x128xf32> to vector<128xf32>
    %9 = vector.shape_cast %8 : vector<128xf32> to vector<1x1x128xf32>
    %10 = vector.broadcast %9 : vector<1x1x128xf32> to vector<5x16x128xf32>
    %11 = arith.addf %4, %10 : vector<5x16x128xf32>
    %12 = math.tanh %11 : vector<5x16x128xf32>
    %13 = vector.shape_cast %6 : vector<1x128xf32> to vector<1x1x128xf32>
    %14 = vector.broadcast %13 : vector<1x1x128xf32> to vector<5x16x128xf32>
    %15 = arith.mulf %12, %14 : vector<5x16x128xf32>
    %cst_8 = arith.constant dense<0.000000e+00> : vector<5x16xf32>
    %16 = vector.multi_reduction <add>, %15, %cst_8 [2] : vector<5x16x128xf32> to vector<5x16xf32>
    %cst_9 = arith.constant dense<0xFF800000> : vector<5xf32>
    %17 = vector.multi_reduction <maximumf>, %16, %cst_9 [1] : vector<5x16xf32> to vector<5xf32>
    %18 = vector.shape_cast %17 : vector<5xf32> to vector<5x1xf32>
    %19 = vector.broadcast %18 : vector<5x1xf32> to vector<5x16xf32>
    %20 = arith.subf %16, %19 : vector<5x16xf32>
    %21 = math.exp %20 : vector<5x16xf32>
    %cst_10 = arith.constant dense<0.000000e+00> : vector<5xf32>
    %22 = vector.multi_reduction <add>, %21, %cst_10 [1] : vector<5x16xf32> to vector<5xf32>
    %23 = vector.shape_cast %22 : vector<5xf32> to vector<5x1xf32>
    %24 = tpu.reciprocal %23 {approx = true} : vector<5x1xf32> -> vector<5x1xf32>
    %25 = vector.broadcast %24 : vector<5x1xf32> to vector<5x16xf32>
    %26 = arith.mulf %21, %25 : vector<5x16xf32>
    %27 = vector.shape_cast %26 : vector<5x16xf32> to vector<5x16x1xf32>
    %28 = vector.broadcast %27 : vector<5x16x1xf32> to vector<5x16x32xf32>
    %29 = arith.mulf %28, %0 : vector<5x16x32xf32>
    %cst_11 = arith.constant dense<0.000000e+00> : vector<5x32xf32>
    %30 = vector.multi_reduction <add>, %29, %cst_11 [1] : vector<5x16x32xf32> to vector<5x32xf32>
    %c0_12 = arith.constant 0 : index
    %c0_13 = arith.constant 0 : index
    %c0_14 = arith.constant 0 : index
    %31 = vector.load %arg8[%c0_12, %c0_13, %c0_14] : memref<5x8x32xf32, #tpu.memory_space<vmem>>, vector<5x1x32xf32>
    %32 = vector.shape_cast %31 : vector<5x1x32xf32> to vector<5x32xf32>
    %33 = vector.shape_cast %30 : vector<5x32xf32> to vector<5x1x32xf32>
    tpu.vector_store %arg8[%c0_12, %c0_13, %c0_14], %33 {strides = array<i32>} : memref<5x8x32xf32, #tpu.memory_space<vmem>>, vector<5x1x32xf32>,
    %34 = vector.extract_strided_slice %5 {offsets = [1, 0], sizes = [1, 128], strides = [1, 1]} : vector<8x128xf32> to vector<1x128xf32>
    %35 = vector.shape_cast %34 : vector<1x128xf32> to vector<128xf32>
    %36 = vector.shape_cast %35 : vector<128xf32> to vector<1x1x128xf32>
    %37 = vector.broadcast %36 : vector<1x1x128xf32> to vector<5x16x128xf32>
    %38 = arith.addf %4, %37 : vector<5x16x128xf32>
    %39 = math.tanh %38 : vector<5x16x128xf32>
    %40 = vector.shape_cast %6 : vector<1x128xf32> to vector<1x1x128xf32>
    %41 = vector.broadcast %40 : vector<1x1x128xf32> to vector<5x16x128xf32>
    %42 = arith.mulf %39, %41 : vector<5x16x128xf32>
    %cst_15 = arith.constant dense<0.000000e+00> : vector<5x16xf32>
    %43 = vector.multi_reduction <add>, %42, %cst_15 [2] : vector<5x16x128xf32> to vector<5x16xf32>
    %cst_16 = arith.constant dense<0xFF800000> : vector<5xf32>
    %44 = vector.multi_reduction <maximumf>, %43, %cst_16 [1] : vector<5x16xf32> to vector<5xf32>
    %45 = vector.shape_cast %44 : vector<5xf32> to vector<5x1xf32>
    %46 = vector.broadcast %45 : vector<5x1xf32> to vector<5x16xf32>
    %47 = arith.subf %43, %46 : vector<5x16xf32>
    %48 = math.exp %47 : vector<5x16xf32>
    %cst_17 = arith.constant dense<0.000000e+00> : vector<5xf32>
    %49 = vector.multi_reduction <add>, %48, %cst_17 [1] : vector<5x16xf32> to vector<5xf32>
    %50 = vector.shape_cast %49 : vector<5xf32> to vector<5x1xf32>
    %51 = tpu.reciprocal %50 {approx = true} : vector<5x1xf32> -> vector<5x1xf32>
    %52 = vector.broadcast %51 : vector<5x1xf32> to vector<5x16xf32>
    %53 = arith.mulf %48, %52 : vector<5x16xf32>
    %54 = vector.shape_cast %53 : vector<5x16xf32> to vector<5x16x1xf32>
    %55 = vector.broadcast %54 : vector<5x16x1xf32> to vector<5x16x32xf32>
    %56 = arith.mulf %55, %0 : vector<5x16x32xf32>
    %cst_18 = arith.constant dense<0.000000e+00> : vector<5x32xf32>
    %57 = vector.multi_reduction <add>, %56, %cst_18 [1] : vector<5x16x32xf32> to vector<5x32xf32>
    %c0_19 = arith.constant 0 : index
    %c1 = arith.constant 1 : index
    %c0_20 = arith.constant 0 : index
    %58 = vector.load %arg8[%c0_19, %c1, %c0_20] : memref<5x8x32xf32, #tpu.memory_space<vmem>>, vector<5x1x32xf32>
    %59 = vector.shape_cast %58 : vector<5x1x32xf32> to vector<5x32xf32>
    %60 = vector.shape_cast %57 : vector<5x32xf32> to vector<5x1x32xf32>
    tpu.vector_store %arg8[%c0_19, %c1, %c0_20], %60 {strides = array<i32>} : memref<5x8x32xf32, #tpu.memory_space<vmem>>, vector<5x1x32xf32>,
    %61 = vector.extract_strided_slice %5 {offsets = [2, 0], sizes = [1, 128], strides = [1, 1]} : vector<8x128xf32> to vector<1x128xf32>
    %62 = vector.shape_cast %61 : vector<1x128xf32> to vector<128xf32>
    %63 = vector.shape_cast %62 : vector<128xf32> to vector<1x1x128xf32>
    %64 = vector.broadcast %63 : vector<1x1x128xf32> to vector<5x16x128xf32>
    %65 = arith.addf %4, %64 : vector<5x16x128xf32>
    %66 = math.tanh %65 : vector<5x16x128xf32>
    %67 = vector.shape_cast %6 : vector<1x128xf32> to vector<1x1x128xf32>
    %68 = vector.broadcast %67 : vector<1x1x128xf32> to vector<5x16x128xf32>
    %69 = arith.mulf %66, %68 : vector<5x16x128xf32>
    %cst_21 = arith.constant dense<0.000000e+00> : vector<5x16xf32>
    %70 = vector.multi_reduction <add>, %69, %cst_21 [2] : vector<5x16x128xf32> to vector<5x16xf32>
    %cst_22 = arith.constant dense<0xFF800000> : vector<5xf32>
    %71 = vector.multi_reduction <maximumf>, %70, %cst_22 [1] : vector<5x16xf32> to vector<5xf32>
    %72 = vector.shape_cast %71 : vector<5xf32> to vector<5x1xf32>
    %73 = vector.broadcast %72 : vector<5x1xf32> to vector<5x16xf32>
    %74 = arith.subf %70, %73 : vector<5x16xf32>
    %75 = math.exp %74 : vector<5x16xf32>
    %cst_23 = arith.constant dense<0.000000e+00> : vector<5xf32>
    %76 = vector.multi_reduction <add>, %75, %cst_23 [1] : vector<5x16xf32> to vector<5xf32>
    %77 = vector.shape_cast %76 : vector<5xf32> to vector<5x1xf32>
    %78 = tpu.reciprocal %77 {approx = true} : vector<5x1xf32> -> vector<5x1xf32>
    %79 = vector.broadcast %78 : vector<5x1xf32> to vector<5x16xf32>
    %80 = arith.mulf %75, %79 : vector<5x16xf32>
    %81 = vector.shape_cast %80 : vector<5x16xf32> to vector<5x16x1xf32>
    %82 = vector.broadcast %81 : vector<5x16x1xf32> to vector<5x16x32xf32>
    %83 = arith.mulf %82, %0 : vector<5x16x32xf32>
    %cst_24 = arith.constant dense<0.000000e+00> : vector<5x32xf32>
    %84 = vector.multi_reduction <add>, %83, %cst_24 [1] : vector<5x16x32xf32> to vector<5x32xf32>
    %c0_25 = arith.constant 0 : index
    %c2 = arith.constant 2 : index
    %c0_26 = arith.constant 0 : index
    %85 = vector.load %arg8[%c0_25, %c2, %c0_26] : memref<5x8x32xf32, #tpu.memory_space<vmem>>, vector<5x1x32xf32>
    %86 = vector.shape_cast %85 : vector<5x1x32xf32> to vector<5x32xf32>
    %87 = vector.shape_cast %84 : vector<5x32xf32> to vector<5x1x32xf32>
    tpu.vector_store %arg8[%c0_25, %c2, %c0_26], %87 {strides = array<i32>} : memref<5x8x32xf32, #tpu.memory_space<vmem>>, vector<5x1x32xf32>,
    %88 = vector.extract_strided_slice %5 {offsets = [3, 0], sizes = [1, 128], strides = [1, 1]} : vector<8x128xf32> to vector<1x128xf32>
    %89 = vector.shape_cast %88 : vector<1x128xf32> to vector<128xf32>
    %90 = vector.shape_cast %89 : vector<128xf32> to vector<1x1x128xf32>
    %91 = vector.broadcast %90 : vector<1x1x128xf32> to vector<5x16x128xf32>
    %92 = arith.addf %4, %91 : vector<5x16x128xf32>
    %93 = math.tanh %92 : vector<5x16x128xf32>
    %94 = vector.shape_cast %6 : vector<1x128xf32> to vector<1x1x128xf32>
    %95 = vector.broadcast %94 : vector<1x1x128xf32> to vector<5x16x128xf32>
    %96 = arith.mulf %93, %95 : vector<5x16x128xf32>
    %cst_27 = arith.constant dense<0.000000e+00> : vector<5x16xf32>
    %97 = vector.multi_reduction <add>, %96, %cst_27 [2] : vector<5x16x128xf32> to vector<5x16xf32>
    %cst_28 = arith.constant dense<0xFF800000> : vector<5xf32>
    %98 = vector.multi_reduction <maximumf>, %97, %cst_28 [1] : vector<5x16xf32> to vector<5xf32>
    %99 = vector.shape_cast %98 : vector<5xf32> to vector<5x1xf32>
    %100 = vector.broadcast %99 : vector<5x1xf32> to vector<5x16xf32>
    %101 = arith.subf %97, %100 : vector<5x16xf32>
    %102 = math.exp %101 : vector<5x16xf32>
    %cst_29 = arith.constant dense<0.000000e+00> : vector<5xf32>
    %103 = vector.multi_reduction <add>, %102, %cst_29 [1] : vector<5x16xf32> to vector<5xf32>
    %104 = vector.shape_cast %103 : vector<5xf32> to vector<5x1xf32>
    %105 = tpu.reciprocal %104 {approx = true} : vector<5x1xf32> -> vector<5x1xf32>
    %106 = vector.broadcast %105 : vector<5x1xf32> to vector<5x16xf32>
    %107 = arith.mulf %102, %106 : vector<5x16xf32>
    %108 = vector.shape_cast %107 : vector<5x16xf32> to vector<5x16x1xf32>
    %109 = vector.broadcast %108 : vector<5x16x1xf32> to vector<5x16x32xf32>
    %110 = arith.mulf %109, %0 : vector<5x16x32xf32>
    %cst_30 = arith.constant dense<0.000000e+00> : vector<5x32xf32>
    %111 = vector.multi_reduction <add>, %110, %cst_30 [1] : vector<5x16x32xf32> to vector<5x32xf32>
    %c0_31 = arith.constant 0 : index
    %c3 = arith.constant 3 : index
    %c0_32 = arith.constant 0 : index
    %112 = vector.load %arg8[%c0_31, %c3, %c0_32] : memref<5x8x32xf32, #tpu.memory_space<vmem>>, vector<5x1x32xf32>
    %113 = vector.shape_cast %112 : vector<5x1x32xf32> to vector<5x32xf32>
    %114 = vector.shape_cast %111 : vector<5x32xf32> to vector<5x1x32xf32>
    tpu.vector_store %arg8[%c0_31, %c3, %c0_32], %114 {strides = array<i32>} : memref<5x8x32xf32, #tpu.memory_space<vmem>>, vector<5x1x32xf32>,
    %115 = vector.extract_strided_slice %5 {offsets = [4, 0], sizes = [1, 128], strides = [1, 1]} : vector<8x128xf32> to vector<1x128xf32>
    %116 = vector.shape_cast %115 : vector<1x128xf32> to vector<128xf32>
    %117 = vector.shape_cast %116 : vector<128xf32> to vector<1x1x128xf32>
    %118 = vector.broadcast %117 : vector<1x1x128xf32> to vector<5x16x128xf32>
    %119 = arith.addf %4, %118 : vector<5x16x128xf32>
    %120 = math.tanh %119 : vector<5x16x128xf32>
    %121 = vector.shape_cast %6 : vector<1x128xf32> to vector<1x1x128xf32>
    %122 = vector.broadcast %121 : vector<1x1x128xf32> to vector<5x16x128xf32>
    %123 = arith.mulf %120, %122 : vector<5x16x128xf32>
    %cst_33 = arith.constant dense<0.000000e+00> : vector<5x16xf32>
    %124 = vector.multi_reduction <add>, %123, %cst_33 [2] : vector<5x16x128xf32> to vector<5x16xf32>
    %cst_34 = arith.constant dense<0xFF800000> : vector<5xf32>
    %125 = vector.multi_reduction <maximumf>, %124, %cst_34 [1] : vector<5x16xf32> to vector<5xf32>
    %126 = vector.shape_cast %125 : vector<5xf32> to vector<5x1xf32>
    %127 = vector.broadcast %126 : vector<5x1xf32> to vector<5x16xf32>
    %128 = arith.subf %124, %127 : vector<5x16xf32>
    %129 = math.exp %128 : vector<5x16xf32>
    %cst_35 = arith.constant dense<0.000000e+00> : vector<5xf32>
    %130 = vector.multi_reduction <add>, %129, %cst_35 [1] : vector<5x16xf32> to vector<5xf32>
    %131 = vector.shape_cast %130 : vector<5xf32> to vector<5x1xf32>
    %132 = tpu.reciprocal %131 {approx = true} : vector<5x1xf32> -> vector<5x1xf32>
    %133 = vector.broadcast %132 : vector<5x1xf32> to vector<5x16xf32>
    %134 = arith.mulf %129, %133 : vector<5x16xf32>
    %135 = vector.shape_cast %134 : vector<5x16xf32> to vector<5x16x1xf32>
    %136 = vector.broadcast %135 : vector<5x16x1xf32> to vector<5x16x32xf32>
    %137 = arith.mulf %136, %0 : vector<5x16x32xf32>
    %cst_36 = arith.constant dense<0.000000e+00> : vector<5x32xf32>
    %138 = vector.multi_reduction <add>, %137, %cst_36 [1] : vector<5x16x32xf32> to vector<5x32xf32>
    %c0_37 = arith.constant 0 : index
    %c4 = arith.constant 4 : index
    %c0_38 = arith.constant 0 : index
    %139 = vector.load %arg8[%c0_37, %c4, %c0_38] : memref<5x8x32xf32, #tpu.memory_space<vmem>>, vector<5x1x32xf32>
    %140 = vector.shape_cast %139 : vector<5x1x32xf32> to vector<5x32xf32>
    %141 = vector.shape_cast %138 : vector<5x32xf32> to vector<5x1x32xf32>
    tpu.vector_store %arg8[%c0_37, %c4, %c0_38], %141 {strides = array<i32>} : memref<5x8x32xf32, #tpu.memory_space<vmem>>, vector<5x1x32xf32>,
    %142 = vector.extract_strided_slice %5 {offsets = [5, 0], sizes = [1, 128], strides = [1, 1]} : vector<8x128xf32> to vector<1x128xf32>
    %143 = vector.shape_cast %142 : vector<1x128xf32> to vector<128xf32>
    %144 = vector.shape_cast %143 : vector<128xf32> to vector<1x1x128xf32>
    %145 = vector.broadcast %144 : vector<1x1x128xf32> to vector<5x16x128xf32>
    %146 = arith.addf %4, %145 : vector<5x16x128xf32>
    %147 = math.tanh %146 : vector<5x16x128xf32>
    %148 = vector.shape_cast %6 : vector<1x128xf32> to vector<1x1x128xf32>
    %149 = vector.broadcast %148 : vector<1x1x128xf32> to vector<5x16x128xf32>
    %150 = arith.mulf %147, %149 : vector<5x16x128xf32>
    %cst_39 = arith.constant dense<0.000000e+00> : vector<5x16xf32>
    %151 = vector.multi_reduction <add>, %150, %cst_39 [2] : vector<5x16x128xf32> to vector<5x16xf32>
    %cst_40 = arith.constant dense<0xFF800000> : vector<5xf32>
    %152 = vector.multi_reduction <maximumf>, %151, %cst_40 [1] : vector<5x16xf32> to vector<5xf32>
    %153 = vector.shape_cast %152 : vector<5xf32> to vector<5x1xf32>
    %154 = vector.broadcast %153 : vector<5x1xf32> to vector<5x16xf32>
    %155 = arith.subf %151, %154 : vector<5x16xf32>
    %156 = math.exp %155 : vector<5x16xf32>
    %cst_41 = arith.constant dense<0.000000e+00> : vector<5xf32>
    %157 = vector.multi_reduction <add>, %156, %cst_41 [1] : vector<5x16xf32> to vector<5xf32>
    %158 = vector.shape_cast %157 : vector<5xf32> to vector<5x1xf32>
    %159 = tpu.reciprocal %158 {approx = true} : vector<5x1xf32> -> vector<5x1xf32>
    %160 = vector.broadcast %159 : vector<5x1xf32> to vector<5x16xf32>
    %161 = arith.mulf %156, %160 : vector<5x16xf32>
    %162 = vector.shape_cast %161 : vector<5x16xf32> to vector<5x16x1xf32>
    %163 = vector.broadcast %162 : vector<5x16x1xf32> to vector<5x16x32xf32>
    %164 = arith.mulf %163, %0 : vector<5x16x32xf32>
    %cst_42 = arith.constant dense<0.000000e+00> : vector<5x32xf32>
    %165 = vector.multi_reduction <add>, %164, %cst_42 [1] : vector<5x16x32xf32> to vector<5x32xf32>
    %c0_43 = arith.constant 0 : index
    %c5 = arith.constant 5 : index
    %c0_44 = arith.constant 0 : index
    %166 = vector.load %arg8[%c0_43, %c5, %c0_44] : memref<5x8x32xf32, #tpu.memory_space<vmem>>, vector<5x1x32xf32>
    %167 = vector.shape_cast %166 : vector<5x1x32xf32> to vector<5x32xf32>
    %168 = vector.shape_cast %165 : vector<5x32xf32> to vector<5x1x32xf32>
    tpu.vector_store %arg8[%c0_43, %c5, %c0_44], %168 {strides = array<i32>} : memref<5x8x32xf32, #tpu.memory_space<vmem>>, vector<5x1x32xf32>,
    %169 = vector.extract_strided_slice %5 {offsets = [6, 0], sizes = [1, 128], strides = [1, 1]} : vector<8x128xf32> to vector<1x128xf32>
    %170 = vector.shape_cast %169 : vector<1x128xf32> to vector<128xf32>
    %171 = vector.shape_cast %170 : vector<128xf32> to vector<1x1x128xf32>
    %172 = vector.broadcast %171 : vector<1x1x128xf32> to vector<5x16x128xf32>
    %173 = arith.addf %4, %172 : vector<5x16x128xf32>
    %174 = math.tanh %173 : vector<5x16x128xf32>
    %175 = vector.shape_cast %6 : vector<1x128xf32> to vector<1x1x128xf32>
    %176 = vector.broadcast %175 : vector<1x1x128xf32> to vector<5x16x128xf32>
    %177 = arith.mulf %174, %176 : vector<5x16x128xf32>
    %cst_45 = arith.constant dense<0.000000e+00> : vector<5x16xf32>
    %178 = vector.multi_reduction <add>, %177, %cst_45 [2] : vector<5x16x128xf32> to vector<5x16xf32>
    %cst_46 = arith.constant dense<0xFF800000> : vector<5xf32>
    %179 = vector.multi_reduction <maximumf>, %178, %cst_46 [1] : vector<5x16xf32> to vector<5xf32>
    %180 = vector.shape_cast %179 : vector<5xf32> to vector<5x1xf32>
    %181 = vector.broadcast %180 : vector<5x1xf32> to vector<5x16xf32>
    %182 = arith.subf %178, %181 : vector<5x16xf32>
    %183 = math.exp %182 : vector<5x16xf32>
    %cst_47 = arith.constant dense<0.000000e+00> : vector<5xf32>
    %184 = vector.multi_reduction <add>, %183, %cst_47 [1] : vector<5x16xf32> to vector<5xf32>
    %185 = vector.shape_cast %184 : vector<5xf32> to vector<5x1xf32>
    %186 = tpu.reciprocal %185 {approx = true} : vector<5x1xf32> -> vector<5x1xf32>
    %187 = vector.broadcast %186 : vector<5x1xf32> to vector<5x16xf32>
    %188 = arith.mulf %183, %187 : vector<5x16xf32>
    %189 = vector.shape_cast %188 : vector<5x16xf32> to vector<5x16x1xf32>
    %190 = vector.broadcast %189 : vector<5x16x1xf32> to vector<5x16x32xf32>
    %191 = arith.mulf %190, %0 : vector<5x16x32xf32>
    %cst_48 = arith.constant dense<0.000000e+00> : vector<5x32xf32>
    %192 = vector.multi_reduction <add>, %191, %cst_48 [1] : vector<5x16x32xf32> to vector<5x32xf32>
    %c0_49 = arith.constant 0 : index
    %c6 = arith.constant 6 : index
    %c0_50 = arith.constant 0 : index
    %193 = vector.load %arg8[%c0_49, %c6, %c0_50] : memref<5x8x32xf32, #tpu.memory_space<vmem>>, vector<5x1x32xf32>
    %194 = vector.shape_cast %193 : vector<5x1x32xf32> to vector<5x32xf32>
    %195 = vector.shape_cast %192 : vector<5x32xf32> to vector<5x1x32xf32>
    tpu.vector_store %arg8[%c0_49, %c6, %c0_50], %195 {strides = array<i32>} : memref<5x8x32xf32, #tpu.memory_space<vmem>>, vector<5x1x32xf32>,
    %196 = vector.extract_strided_slice %5 {offsets = [7, 0], sizes = [1, 128], strides = [1, 1]} : vector<8x128xf32> to vector<1x128xf32>
    %197 = vector.shape_cast %196 : vector<1x128xf32> to vector<128xf32>
    %198 = vector.shape_cast %197 : vector<128xf32> to vector<1x1x128xf32>
    %199 = vector.broadcast %198 : vector<1x1x128xf32> to vector<5x16x128xf32>
    %200 = arith.addf %4, %199 : vector<5x16x128xf32>
    %201 = math.tanh %200 : vector<5x16x128xf32>
    %202 = vector.shape_cast %6 : vector<1x128xf32> to vector<1x1x128xf32>
    %203 = vector.broadcast %202 : vector<1x1x128xf32> to vector<5x16x128xf32>
    %204 = arith.mulf %201, %203 : vector<5x16x128xf32>
    %cst_51 = arith.constant dense<0.000000e+00> : vector<5x16xf32>
    %205 = vector.multi_reduction <add>, %204, %cst_51 [2] : vector<5x16x128xf32> to vector<5x16xf32>
    %cst_52 = arith.constant dense<0xFF800000> : vector<5xf32>
    %206 = vector.multi_reduction <maximumf>, %205, %cst_52 [1] : vector<5x16xf32> to vector<5xf32>
    %207 = vector.shape_cast %206 : vector<5xf32> to vector<5x1xf32>
    %208 = vector.broadcast %207 : vector<5x1xf32> to vector<5x16xf32>
    %209 = arith.subf %205, %208 : vector<5x16xf32>
    %210 = math.exp %209 : vector<5x16xf32>
    %cst_53 = arith.constant dense<0.000000e+00> : vector<5xf32>
    %211 = vector.multi_reduction <add>, %210, %cst_53 [1] : vector<5x16xf32> to vector<5xf32>
    %212 = vector.shape_cast %211 : vector<5xf32> to vector<5x1xf32>
    %213 = tpu.reciprocal %212 {approx = true} : vector<5x1xf32> -> vector<5x1xf32>
    %214 = vector.broadcast %213 : vector<5x1xf32> to vector<5x16xf32>
    %215 = arith.mulf %210, %214 : vector<5x16xf32>
    %216 = vector.shape_cast %215 : vector<5x16xf32> to vector<5x16x1xf32>
    %217 = vector.broadcast %216 : vector<5x16x1xf32> to vector<5x16x32xf32>
    %218 = arith.mulf %217, %0 : vector<5x16x32xf32>
    %cst_54 = arith.constant dense<0.000000e+00> : vector<5x32xf32>
    %219 = vector.multi_reduction <add>, %218, %cst_54 [1] : vector<5x16x32xf32> to vector<5x32xf32>
    %c0_55 = arith.constant 0 : index
    %c7 = arith.constant 7 : index
    %c0_56 = arith.constant 0 : index
    %220 = vector.load %arg8[%c0_55, %c7, %c0_56] : memref<5x8x32xf32, #tpu.memory_space<vmem>>, vector<5x1x32xf32>
    %221 = vector.shape_cast %220 : vector<5x1x32xf32> to vector<5x32xf32>
    %222 = vector.shape_cast %219 : vector<5x32xf32> to vector<5x1x32xf32>
    tpu.vector_store %arg8[%c0_55, %c7, %c0_56], %222 {strides = array<i32>} : memref<5x8x32xf32, #tpu.memory_space<vmem>>, vector<5x1x32xf32>,
    %c0_57 = arith.constant 0 : index
    %c0_58 = arith.constant 0 : index
    %c0_59 = arith.constant 0 : index
    %223 = vector.load %arg8[%c0_57, %c0_58, %c0_59] : memref<5x8x32xf32, #tpu.memory_space<vmem>>, vector<5x8x32xf32>
    %224 = vector.shape_cast %223 : vector<5x8x32xf32> to vector<40x32xf32>
    %c0_60 = arith.constant 0 : index
    %c0_61 = arith.constant 0 : index
    %225 = vector.load %arg6[%c0_60, %c0_61] : memref<32x128xf32, #tpu.memory_space<vmem>>, vector<32x128xf32>
    %cst_62 = arith.constant dense<0.000000e+00> : vector<40x128xf32>
    %226 = tpu.matmul %224, %225, %cst_62 {dimension_numbers = #tpu.dot_dimension_numbers<[1], [0], [0], [1], [0, 0, 1, 1], [], []>} : vector<40x32xf32>, vector<32x128xf32>, vector<40x128xf32> -> vector<40x128xf32>
    %227 = vector.shape_cast %226 : vector<40x128xf32> to vector<5x8x128xf32>
    %c0_63 = arith.constant 0 : index
    %c0_64 = arith.constant 0 : index
    %228 = vector.load %arg3[%c0_63, %c0_64] : memref<8x128xf32, #tpu.memory_space<vmem>>, vector<8x128xf32>
    %229 = vector.shape_cast %228 : vector<8x128xf32> to vector<1x8x128xf32>
    %230 = vector.broadcast %229 : vector<1x8x128xf32> to vector<5x8x128xf32>
    %231 = arith.addf %227, %230 : vector<5x8x128xf32>
    %c0_65 = arith.constant 0 : index
    %c0_66 = arith.constant 0 : index
    %c0_67 = arith.constant 0 : index
    %232 = vector.load %arg7[%c0_65, %c0_66, %c0_67] : memref<5x8x128xf32, #tpu.memory_space<vmem>>, vector<5x8x128xf32>
    tpu.vector_store %arg7[%c0_65, %c0_66, %c0_67], %231 {strides = array<i32>} : memref<5x8x128xf32, #tpu.memory_space<vmem>>, vector<5x8x128xf32>,
    return
  }
  func.func @transform_0(%arg0: i32) -> (i32, i32, i32) {
    %c0_i32 = arith.constant 0 : i32
    %c0_i32_0 = arith.constant 0 : i32
    %c0_i32_1 = arith.constant 0 : i32
    return %arg0, %c0_i32, %c0_i32_0 : i32, i32, i32
  }
  func.func @transform_1(%arg0: i32) -> (i32, i32) {
    %c0_i32 = arith.constant 0 : i32
    %c0_i32_0 = arith.constant 0 : i32
    %c0_i32_1 = arith.constant 0 : i32
    return %c0_i32, %c0_i32_0 : i32, i32
  }
  func.func @transform_2(%arg0: i32) -> (i32, i32) {
    %c0_i32 = arith.constant 0 : i32
    %c0_i32_0 = arith.constant 0 : i32
    %c0_i32_1 = arith.constant 0 : i32
    return %c0_i32, %c0_i32_0 : i32, i32
  }
  func.func @transform_3(%arg0: i32) -> (i32, i32) {
    %c0_i32 = arith.constant 0 : i32
    %c0_i32_0 = arith.constant 0 : i32
    %c0_i32_1 = arith.constant 0 : i32
    return %c0_i32, %c0_i32_0 : i32, i32
  }
  func.func @transform_4(%arg0: i32) -> (i32, i32) {
    %c0_i32 = arith.constant 0 : i32
    %c0_i32_0 = arith.constant 0 : i32
    %c0_i32_1 = arith.constant 0 : i32
    return %c0_i32, %c0_i32_0 : i32, i32
  }
  func.func @transform_5(%arg0: i32) -> (i32, i32) {
    %c0_i32 = arith.constant 0 : i32
    %c0_i32_0 = arith.constant 0 : i32
    %c0_i32_1 = arith.constant 0 : i32
    return %c0_i32, %c0_i32_0 : i32, i32
  }
  func.func @transform_6(%arg0: i32) -> (i32, i32, i32) {
    %c0_i32 = arith.constant 0 : i32
    %c0_i32_0 = arith.constant 0 : i32
    %c0_i32_1 = arith.constant 0 : i32
    return %arg0, %c0_i32, %c0_i32_0 : i32, i32, i32
  }
}

</mosaic_0001>

<llo_original>
// kernel: nar_decoder_forward.1
$region0: #{nar_decoder_forward.1}
  #allocation0 [shape = 'u32[]', space=smem, size = 0x4, offset = 0x4, fixed_abs, tag = 'smem constant byte address 0x4 - core index']
  #allocation1 [shape = 'u32[144,128]{1,0:T(1,128)}', space=vmem, size = 0x12000, scoped, tag = 'internal scratch']
  #allocation2 [shape = 'f32[5,8,32]{2,1,0:T(8,128)}', space=vmem, size = 0x5000, scoped, tag = 'scratch operand']
  %s0 = inlined_call_operand.vmem [shape: f32[10,16,32], index: 0, kind: input, shape index: {}]
  %s1 = inlined_call_operand.vmem [shape: f32[8,128], index: 1, kind: input, shape index: {}]
  %s2 = inlined_call_operand.vmem [shape: f32[8,128], index: 2, kind: input, shape index: {}]
  %s3 = inlined_call_operand.vmem [shape: f32[32,128], index: 3, kind: input, shape index: {}]
  %s4 = inlined_call_operand.vmem [shape: f32[1,128], index: 4, kind: input, shape index: {}]
  %s5 = inlined_call_operand.vmem [shape: f32[32,128], index: 5, kind: input, shape index: {}]
  %s6 = inlined_call_operand.vmem [shape: f32[10,8,128], index: 6, kind: output, shape index: {}]
  %s7 = sld [smem:[#allocation0]]
  $region57: #{nar_decoder_forward.1} parent=0
    _
  %s9 = ssub.s32 1, %s7
  %s10 = scalar_select 0, %s9, %s7
  loop: start=0, step=1, limit=4
  $region2: #{nar_decoder_forward.1} parent=0 // loop_pre_header
    _
  $region3: #{nar_decoder_forward.1} parent=0 // loop_header
    %s12 = sphi 0, %s16
    %p13 = scmp.ge.s32.totalorder %s12, 4
    %s22 = sphi 0, %s24
    %s25 = sphi 0, %s22
    %s26 = sphi 0, %s25
    %s42 = sphi 0, %s26
    %s46 = sphi 0, %s46
    %s48 = sphi 0, %s46
    %s49 = sphi 0, %s48
    %s63 = sphi 0, %s49
    %s67 = sphi 0, %s67
    %s69 = sphi 0, %s67
    %s70 = sphi 0, %s69
    %s84 = sphi 0, %s70
    %s88 = sphi 0, %s88
    %s90 = sphi 0, %s88
    %s91 = sphi 0, %s90
    %s105 = sphi 0, %s91
    %s109 = sphi 0, %s109
    %s111 = sphi 0, %s109
    %s112 = sphi 0, %s111
    %s126 = sphi 0, %s112
    %s130 = sphi 0, %s130
    %s132 = sphi 0, %s130
    %s133 = sphi 0, %s132
    %s147 = sphi 0, %s133
    %s153 = sphi 0, %s155
    %s156 = sphi 0, %s153
    %s157 = sphi 0, %s156
    %s173 = sphi 0, %s157
  $region4: #{nar_decoder_forward.1} parent=0 // loop_header_branch
    %15 = sbr.rel (%p13) target = $region8
  $region5: #{nar_decoder_forward.1} parent=0 // loop_body
    %s17 = ssub.s32 %s12, 1
    %s18 = ssub.s32 %s12, 2
    %s19 = sadd.s32 %s12, 1
    %s20 = ssub.s32 %s12, %s19
    %p21 = scmp.eq.s32.totalorder %s20, 0
    %s23 = sadd.s32 %s22, 1
    %s24 = scalar_select %p21, %s22, %s23
    %p27 = pneg %p21
    %p28 = scmp.eq.s32.totalorder %s12, 1
    %p29 = por %p27, %p28
    %p30 = scmp.ne.s32.totalorder %s22, %s25
    %p31 = scmp.eq.s32.totalorder %s12, 0
    %p32 = por %p30, %p31
    %p33 = scmp.ne.s32.totalorder %s22, %s25
    %p34 = scmp.eq.s32.totalorder %s17, 1
    %p35 = por %p33, %p34
    %p36 = scmp.ne.s32.totalorder %s25, %s26
    %p37 = scmp.eq.s32.totalorder %s17, 0
    %p38 = por %p36, %p37
    %p39 = scmp.ne.s32.totalorder %s25, %s26
    %p40 = scmp.eq.s32.totalorder %s18, 1
    %p41 = por %p39, %p40
    %p43 = scmp.ne.s32.totalorder %s26, %s42
    %p44 = scmp.eq.s32.totalorder %s18, 0
    %p45 = por %p43, %p44
    %s47 = sadd.s32 %s46, 1
    %p50 = scmp.eq.s32.totalorder %s12, 1
    %p51 = scmp.ne.s32.totalorder %s46, %s48
    %p52 = scmp.eq.s32.totalorder %s12, 0
    %p53 = por %p51, %p52
    %p54 = scmp.ne.s32.totalorder %s46, %s48
    %p55 = scmp.eq.s32.totalorder %s17, 1
    %p56 = por %p54, %p55
    %p57 = scmp.ne.s32.totalorder %s48, %s49
    %p58 = scmp.eq.s32.totalorder %s17, 0
    %p59 = por %p57, %p58
    %p60 = scmp.ne.s32.totalorder %s48, %s49
    %p61 = scmp.eq.s32.totalorder %s18, 1
    %p62 = por %p60, %p61
    %p64 = scmp.ne.s32.totalorder %s49, %s63
    %p65 = scmp.eq.s32.totalorder %s18, 0
    %p66 = por %p64, %p65
    %s68 = sadd.s32 %s67, 1
    %p71 = scmp.eq.s32.totalorder %s12, 1
    %p72 = scmp.ne.s32.totalorder %s67, %s69
    %p73 = scmp.eq.s32.totalorder %s12, 0
    %p74 = por %p72, %p73
    %p75 = scmp.ne.s32.totalorder %s67, %s69
    %p76 = scmp.eq.s32.totalorder %s17, 1
    %p77 = por %p75, %p76
    %p78 = scmp.ne.s32.totalorder %s69, %s70
    %p79 = scmp.eq.s32.totalorder %s17, 0
    %p80 = por %p78, %p79
    %p81 = scmp.ne.s32.totalorder %s69, %s70
    %p82 = scmp.eq.s32.totalorder %s18, 1
    %p83 = por %p81, %p82
    %p85 = scmp.ne.s32.totalorder %s70, %s84
    %p86 = scmp.eq.s32.totalorder %s18, 0
    %p87 = por %p85, %p86
    %s89 = sadd.s32 %s88, 1
    %p92 = scmp.eq.s32.totalorder %s12, 1
    %p93 = scmp.ne.s32.totalorder %s88, %s90
    %p94 = scmp.eq.s32.totalorder %s12, 0
    %p95 = por %p93, %p94
    %p96 = scmp.ne.s32.totalorder %s88, %s90
    %p97 = scmp.eq.s32.totalorder %s17, 1
    %p98 = por %p96, %p97
    %p99 = scmp.ne.s32.totalorder %s90, %s91
    %p100 = scmp.eq.s32.totalorder %s17, 0
    %p101 = por %p99, %p100
    %p102 = scmp.ne.s32.totalorder %s90, %s91
    %p103 = scmp.eq.s32.totalorder %s18, 1
    %p104 = por %p102, %p103
    %p106 = scmp.ne.s32.totalorder %s91, %s105
    %p107 = scmp.eq.s32.totalorder %s18, 0
    %p108 = por %p106, %p107
    %s110 = sadd.s32 %s109, 1
    %p113 = scmp.eq.s32.totalorder %s12, 1
    %p114 = scmp.ne.s32.totalorder %s109, %s111
    %p115 = scmp.eq.s32.totalorder %s12, 0
    %p116 = por %p114, %p115
    %p117 = scmp.ne.s32.totalorder %s109, %s111
    %p118 = scmp.eq.s32.totalorder %s17, 1
    %p119 = por %p117, %p118
    %p120 = scmp.ne.s32.totalorder %s111, %s112
    %p121 = scmp.eq.s32.totalorder %s17, 0
    %p122 = por %p120, %p121
    %p123 = scmp.ne.s32.totalorder %s111, %s112
    %p124 = scmp.eq.s32.totalorder %s18, 1
    %p125 = por %p123, %p124
    %p127 = scmp.ne.s32.totalorder %s112, %s126
    %p128 = scmp.eq.s32.totalorder %s18, 0
    %p129 = por %p127, %p128
    %s131 = sadd.s32 %s130, 1
    %p134 = scmp.eq.s32.totalorder %s12, 1
    %p135 = scmp.ne.s32.totalorder %s130, %s132
    %p136 = scmp.eq.s32.totalorder %s12, 0
    %p137 = por %p135, %p136
    %p138 = scmp.ne.s32.totalorder %s130, %s132
    %p139 = scmp.eq.s32.totalorder %s17, 1
    %p140 = por %p138, %p139
    %p141 = scmp.ne.s32.totalorder %s132, %s133
    %p142 = scmp.eq.s32.totalorder %s17, 0
    %p143 = por %p141, %p142
    %p144 = scmp.ne.s32.totalorder %s132, %s133
    %p145 = scmp.eq.s32.totalorder %s18, 1
    %p146 = por %p144, %p145
    %p148 = scmp.ne.s32.totalorder %s133, %s147
    %p149 = scmp.eq.s32.totalorder %s18, 0
    %p150 = por %p148, %p149
    %s151 = ssub.s32 %s12, %s19
    %p152 = scmp.eq.s32.totalorder %s151, 0
    %s154 = sadd.s32 %s153, 1
    %s155 = scalar_select %p152, %s153, %s154
    %p158 = pneg %p152
    %p159 = scmp.eq.s32.totalorder %s12, 1
    %p160 = por %p158, %p159
    %p161 = scmp.ne.s32.totalorder %s153, %s156
    %p162 = scmp.eq.s32.totalorder %s12, 0
    %p163 = por %p161, %p162
    %p164 = scmp.ne.s32.totalorder %s153, %s156
    %p165 = scmp.eq.s32.totalorder %s17, 1
    %p166 = por %p164, %p165
    %p167 = scmp.ne.s32.totalorder %s156, %s157
    %p168 = scmp.eq.s32.totalorder %s17, 0
    %p169 = por %p167, %p168
    %p170 = scmp.ne.s32.totalorder %s156, %s157
    %p171 = scmp.eq.s32.totalorder %s18, 1
    %p172 = por %p170, %p171
    %p174 = scmp.ne.s32.totalorder %s157, %s173
    %p175 = scmp.eq.s32.totalorder %s18, 0
    %p176 = por %p174, %p175
    %p177 = scmp.le.s32.totalorder 1, %s12
    %p178 = scmp.lt.s32.totalorder %s12, 3
    %p179 = pnand %p177, %p178
    %p180 = pneg %p179
    // Predicated region
    $region9: #{nar_decoder_forward.1} parent=5 // pred_check
      _
    $region10: #{nar_decoder_forward.1} parent=5 // pred_check_branch
      %182 = sbr.rel (%p179) target = $region12
    $region11: #{nar_decoder_forward.1} parent=5 // pred_region
      %s183 = ssub.s32 %s12, 1
      // Predicated region
      $region13: #{nar_decoder_forward.1} parent=11 // pred_check
        %p184 = pneg %p59
      $region14: #{nar_decoder_forward.1} parent=11 // pred_check_branch
        %186 = sbr.rel (%p184) target = $region16
      $region15: #{nar_decoder_forward.1} parent=11 // pred_region
        _
      $region16: #{nar_decoder_forward.1} parent=11 // pred_fallthru
        _
      // Predicated region
      $region17: #{nar_decoder_forward.1} parent=11 // pred_check
        %p187 = pneg %p80
      $region18: #{nar_decoder_forward.1} parent=11 // pred_check_branch
        %189 = sbr.rel (%p187) target = $region20
      $region19: #{nar_decoder_forward.1} parent=11 // pred_region
        _
      $region20: #{nar_decoder_forward.1} parent=11 // pred_fallthru
        _
      // Predicated region
      $region21: #{nar_decoder_forward.1} parent=11 // pred_check
        %p190 = pneg %p101
      $region22: #{nar_decoder_forward.1} parent=11 // pred_check_branch
        %192 = sbr.rel (%p190) target = $region24
      $region23: #{nar_decoder_forward.1} parent=11 // pred_region
        _
      $region24: #{nar_decoder_forward.1} parent=11 // pred_fallthru
        _
      // Predicated region
      $region25: #{nar_decoder_forward.1} parent=11 // pred_check
        %p193 = pneg %p122
      $region26: #{nar_decoder_forward.1} parent=11 // pred_check_branch
        %195 = sbr.rel (%p193) target = $region28
      $region27: #{nar_decoder_forward.1} parent=11 // pred_region
        _
      $region28: #{nar_decoder_forward.1} parent=11 // pred_fallthru
        _
      // Predicated region
      $region29: #{nar_decoder_forward.1} parent=11 // pred_check
        %p196 = pneg %p143
      $region30: #{nar_decoder_forward.1} parent=11 // pred_check_branch
        %198 = sbr.rel (%p196) target = $region32
      $region31: #{nar_decoder_forward.1} parent=11 // pred_region
        _
      $region32: #{nar_decoder_forward.1} parent=11 // pred_fallthru
        _
    $region12: #{nar_decoder_forward.1} parent=5 // pred_fallthru
      _
    %p199 = scmp.lt.s32.totalorder %s12, 2
    // Predicated region
    $region33: #{nar_decoder_forward.1} parent=5 // pred_check
      %p200 = pneg %p199
    $region34: #{nar_decoder_forward.1} parent=5 // pred_check_branch
      %202 = sbr.rel (%p200) target = $region36
    $region35: #{nar_decoder_forward.1} parent=5 // pred_region
      // Predicated region
      $region37: #{nar_decoder_forward.1} parent=35 // pred_check
        %p203 = pneg %p32
      $region38: #{nar_decoder_forward.1} parent=35 // pred_check_branch
        %205 = sbr.rel (%p203) target = $region40
      $region39: #{nar_decoder_forward.1} parent=35 // pred_region
        %s206 = smul.u32 5, %s12
        %p207 = scmp.lt.s32.totalorder %s206, 9
        %s208 = scalar_select %p207, %s206, 9
        %s209 = smul.addr %s208, 2
        %s210 = smul.addr %s209, 8
        %s211 = scalar_lea.vmem %s0, %s210
        %s212 = smul.u32 5, %s12
      $region40: #{nar_decoder_forward.1} parent=35 // pred_fallthru
        _
    $region36: #{nar_decoder_forward.1} parent=5 // pred_fallthru
      _
    %p213 = scmp.le.s32.totalorder 1, %s12
    %p214 = scmp.lt.s32.totalorder %s12, 3
    %p215 = pnand %p213, %p214
    %p216 = pneg %p215
    // Predicated region
    $region41: #{nar_decoder_forward.1} parent=5 // pred_check
      _
    $region42: #{nar_decoder_forward.1} parent=5 // pred_check_branch
      %218 = sbr.rel (%p215) target = $region44
    $region43: #{nar_decoder_forward.1} parent=5 // pred_region
      %s219 = ssub.s32 %s12, 1
      %s220 = smul.u32 5, %s17
      %p221 = scmp.lt.s32.totalorder %s220, 9
      %s222 = scalar_select %p221, %s220, 9
      %s223 = smul.addr %s222, 2
      %s224 = smul.addr %s223, 8
      %s225 = scalar_lea.vmem %s0, %s224
      %p226 = pneg %p38
      %p227 = pneg %p35
      %p228 = pneg %p59
      %p229 = pneg %p56
      %p230 = pneg %p80
      %p231 = pneg %p77
      %p232 = pneg %p101
      %p233 = pneg %p98
      %p234 = pneg %p122
      %p235 = pneg %p119
      %p236 = pneg %p143
      %p237 = pneg %p140
      %p238 = pneg %p169
      %p239 = pneg %p166
      %s240 = smul.u32 5, %s17
      %p241 = scmp.lt.s32.totalorder %s240, 9
      %s242 = scalar_select %p241, %s240, 9
      %s243 = smul.addr %s242, 8
      %s244 = scalar_lea.vmem %s6, %s243
      %s245 = smul.u32 5, %s17
      %p246 = scmp.lt.s32.totalorder %s245, 9
      %s247 = scalar_select %p246, %s245, 9
      %s248 = smul.addr %s247, 2
      %s249 = smul.addr %s248, 8
      %s250 = scalar_lea.vmem %s0, %s249
      %s251 = smul.u32 5, %s17
      %s252 = smul.u32 5, %s17
      %p253 = scmp.lt.s32.totalorder %s252, 9
      %s254 = scalar_select %p253, %s252, 9
      %s255 = smul.addr %s254, 8
      %s256 = scalar_lea.vmem %s6, %s255
      %s257 = smul.u32 5, %s17
      %v258 = vld [vmem:[%s250] sm:$0xff]
      %v259 = vld [vmem:[%s250 + $0x8] sm:$0xff]
      %v260 = vld [vmem:[%s250 + $0x10] sm:$0xff]
      %v261 = vld [vmem:[%s250 + $0x18] sm:$0xff]
      %v262 = vld [vmem:[%s250 + $0x20] sm:$0xff]
      %v263 = vld [vmem:[%s250 + $0x28] sm:$0xff]
      %v264 = vld [vmem:[%s250 + $0x30] sm:$0xff]
      %v265 = vld [vmem:[%s250 + $0x38] sm:$0xff]
      %v266 = vld [vmem:[%s250 + $0x40] sm:$0xff]
      %v267 = vld [vmem:[%s250 + $0x48] sm:$0xff]
      %v268 = vld [vmem:[%s3] sm:$0xff]
      %v269 = vld [vmem:[%s3 + $0x8] sm:$0xff]
      %v270 = vld [vmem:[%s3 + $0x10] sm:$0xff]
      %v271 = vld [vmem:[%s3 + $0x18] sm:$0xff]
      %vm272 = vcmask 261120
      %v274 = vsel %vm272, %v258, 0
      %v277 = vsel %vm272, %v259, 0
      %v280 = vsel %vm272, %v260, 0
      %v283 = vsel %vm272, %v261, 0
      %v286 = vsel %vm272, %v262, 0
      %v289 = vsel %vm272, %v263, 0
      %v292 = vsel %vm272, %v264, 0
      %v295 = vsel %vm272, %v265, 0
      %v298 = vsel %vm272, %v266, 0
      %v301 = vsel %vm272, %v267, 0
      %303 = vmatprep.subr.mxu0 0.0
      %304 = vmatpush1.msra.mxu0 %v268
      %305 = vmatprep.subr.mxu0 0.0
      %306 = vmatpush1.msra.mxu0 %v269
      %307 = vmatprep.subr.mxu0 0.0
      %308 = vmatpush1.msra.mxu0 %v270
      %309 = vmatprep.subr.mxu0 0.0
      %310 = vmatpush1.msra.mxu0 %v271
      %311 = vmatprep.subr.mxu0 0.0
      %312 = vmatpush1.msra.mxu0 0.0
      %313 = vmatprep.subr.mxu0 0.0
      %314 = vmatpush1.msra.mxu0 0.0
      %315 = vmatprep.subr.mxu0 0.0
      %316 = vmatpush1.msra.mxu0 0.0
      %317 = vmatprep.subr.mxu0 0.0
      %318 = vmatpush1.msra.mxu0 0.0
      %319 = vmatprep.subr.mxu0 0.0
      %320 = vmatpush1.msra.mxu0 0.0
      %321 = vmatprep.subr.mxu0 0.0
      %322 = vmatpush1.msra.mxu0 0.0
      %323 = vmatprep.subr.mxu0 0.0
      %324 = vmatpush1.msra.mxu0 0.0
      %325 = vmatprep.subr.mxu0 0.0
      %326 = vmatpush1.msra.mxu0 0.0
      %327 = vmatprep.subr.mxu0 0.0
      %328 = vmatpush1.msra.mxu0 0.0
      %329 = vmatprep.subr.mxu0 0.0
      %330 = vmatpush1.msra.mxu0 0.0
      %331 = vmatprep.subr.mxu0 0.0
      %332 = vmatpush1.msra.mxu0 0.0
      %333 = vmatprep.subr.mxu0 0.0
      %334 = vmatpush1.msra.mxu0 0.0
      %335 = vmatprep.subr.mxu0 0.0
      %336 = vmatpush1.msra.mxu0 0.0
      %337 = vmatprep.subr.mxu0 0.0
      %338 = vmatpush1.msra.mxu0 0.0
      %339 = vmatprep.subr.mxu0 0.0
      %340 = vmatpush1.msra.mxu0 0.0
      %341 = vmatprep.subr.mxu0 0.0
      %342 = vmatpush1.msra.mxu0 0.0
      %343 = vmatprep.subr.mxu0 0.0
      %344 = vmatpush1.msra.mxu0 0.0
      %345 = vmatprep.subr.mxu0 0.0
      %346 = vmatpush1.msra.mxu0 0.0
      %347 = vmatprep.subr.mxu0 0.0
      %348 = vmatpush1.msra.mxu0 0.0
      %349 = vmatprep.subr.mxu0 0.0
      %350 = vmatpush1.msra.mxu0 0.0
      %351 = vmatprep.subr.mxu0 0.0
      %352 = vmatpush1.msra.mxu0 0.0
      %353 = vmatprep.subr.mxu0 0.0
      %354 = vmatpush1.msra.mxu0 0.0
      %355 = vmatprep.subr.mxu0 0.0
      %356 = vmatpush1.msra.mxu0 0.0
      %357 = vmatprep.subr.mxu0 0.0
      %358 = vmatpush1.msra.mxu0 0.0
      %359 = vmatprep.subr.mxu0 0.0
      %360 = vmatpush1.msra.mxu0 0.0
      %361 = vmatprep.subr.mxu0 0.0
      %362 = vmatpush1.msra.mxu0 0.0
      %363 = vmatprep.subr.mxu0 0.0
      %364 = vmatpush1.msra.mxu0 0.0
      %365 = vmatprep.subr.mxu0 0.0
      %366 = vmatpush1.msra.mxu0 0.0
      %367 = vmatprep.mubr.f32.mxu0 0.0
      %368 = vmatmul.mubr.f32.gmra.mrb[0].mxu0 %v274
      %v369 = vpop.f32.mrb[0].mxu0
      %v370 = vadd.f32 0.0, %v369
      %v371 = vpop.f32.mrb[0].mxu0
      %372 = vmatprep.mubr.f32.mxu0 0.0
      %373 = vmatmul.mubr.f32.gmra.mrb[0].mxu0 %v277
      %v374 = vpop.f32.mrb[0].mxu0
      %v375 = vadd.f32 0.0, %v374
      %v376 = vpop.f32.mrb[0].mxu0
      %377 = vmatprep.mubr.f32.mxu0 0.0
      %378 = vmatmul.mubr.f32.gmra.mrb[0].mxu0 %v280
      %v379 = vpop.f32.mrb[0].mxu0
      %v380 = vadd.f32 0.0, %v379
      %v381 = vpop.f32.mrb[0].mxu0
      %382 = vmatprep.mubr.f32.mxu0 0.0
      %383 = vmatmul.mubr.f32.gmra.mrb[0].mxu0 %v283
      %v384 = vpop.f32.mrb[0].mxu0
      %v385 = vadd.f32 0.0, %v384
      %v386 = vpop.f32.mrb[0].mxu0
      %387 = vmatprep.mubr.f32.mxu0 0.0
      %388 = vmatmul.mubr.f32.gmra.mrb[0].mxu0 %v286
      %v389 = vpop.f32.mrb[0].mxu0
      %v390 = vadd.f32 0.0, %v389
      %v391 = vpop.f32.mrb[0].mxu0
      %392 = vmatprep.mubr.f32.mxu0 0.0
      %393 = vmatmul.mubr.f32.gmra.mrb[0].mxu0 %v289
      %v394 = vpop.f32.mrb[0].mxu0
      %v395 = vadd.f32 0.0, %v394
      %v396 = vpop.f32.mrb[0].mxu0
      %397 = vmatprep.mubr.f32.mxu0 0.0
      %398 = vmatmul.mubr.f32.gmra.mrb[0].mxu0 %v292
      %v399 = vpop.f32.mrb[0].mxu0
      %v400 = vadd.f32 0.0, %v399
      %v401 = vpop.f32.mrb[0].mxu0
      %402 = vmatprep.mubr.f32.mxu0 0.0
      %403 = vmatmul.mubr.f32.gmra.mrb[0].mxu0 %v295
      %v404 = vpop.f32.mrb[0].mxu0
      %v405 = vadd.f32 0.0, %v404
      %v406 = vpop.f32.mrb[0].mxu0
      %407 = vmatprep.mubr.f32.mxu0 0.0
      %408 = vmatmul.mubr.f32.gmra.mrb[0].mxu0 %v298
      %v409 = vpop.f32.mrb[0].mxu0
      %v410 = vadd.f32 0.0, %v409
      %v411 = vpop.f32.mrb[0].mxu0
      %412 = vmatprep.mubr.f32.mxu0 0.0
      %413 = vmatmul.mubr.f32.gmra.mrb[0].mxu0 %v301
      %v414 = vpop.f32.mrb[0].mxu0
      %v415 = vadd.f32 0.0, %v414
      %v416 = vpop.f32.mrb[0].mxu0
      %417 = vdwg.mxu0
      %v418 = vld [vmem:[%s1] sm:$0xff]
      %v419 = vld [vmem:[%s4] sm:$0x1]
      %v420 = vlaneseq
      %v421 = vshrl.u32 %v420, 7
      %v422 = vsub.s32 0, %v421
      %v423 = vrot.slane %v418, %v422
      %v424 = vadd.f32 %v370, %v423
      %v425 = vadd.f32 %v375, %v423
      %v426 = vadd.f32 %v380, %v423
      %v427 = vadd.f32 %v385, %v423
      %v428 = vadd.f32 %v390, %v423
      %v429 = vadd.f32 %v395, %v423
      %v430 = vadd.f32 %v400, %v423
      %v431 = vadd.f32 %v405, %v423
      %v432 = vadd.f32 %v410, %v423
      %v433 = vadd.f32 %v415, %v423
      %v434 = vtanh.pop %v424
      %v435 = vtanh.pop %v425
      %v436 = vtanh.pop %v426
      %v437 = vtanh.pop %v427
      %v438 = vtanh.pop %v428
      %v439 = vtanh.pop %v429
      %v440 = vtanh.pop %v430
      %v441 = vtanh.pop %v431
      %v442 = vtanh.pop %v432
      %v443 = vtanh.pop %v433
      %v445 = vlaneseq
      %v446 = vshrl.u32 %v445, 7
      %v447 = vsub.s32 0, %v446
      %v448 = vrot.slane %v419, %v447
      %v450 = vmul.f32 %v434, %v448
      %v451 = vmul.f32 %v435, %v448
      %v452 = vmul.f32 %v436, %v448
      %v453 = vmul.f32 %v437, %v448
      %v454 = vmul.f32 %v438, %v448
      %v455 = vmul.f32 %v439, %v448
      %v456 = vmul.f32 %v440, %v448
      %v457 = vmul.f32 %v441, %v448
      %v458 = vmul.f32 %v442, %v448
      %v459 = vmul.f32 %v443, %v448
      %460 = vadd.xlane.f32.xlu0 %v450
      %v461 = vpop.xlane.xlu0 %460
      %462 = vadd.xlane.f32.xlu0 %v451
      %v463 = vpop.xlane.xlu0 %462
      %464 = vadd.xlane.f32.xlu0 %v452
      %v465 = vpop.xlane.xlu0 %464
      %466 = vadd.xlane.f32.xlu0 %v453
      %v467 = vpop.xlane.xlu0 %466
      %468 = vadd.xlane.f32.xlu0 %v454
      %v469 = vpop.xlane.xlu0 %468
      %470 = vadd.xlane.f32.xlu0 %v455
      %v471 = vpop.xlane.xlu0 %470
      %472 = vadd.xlane.f32.xlu0 %v456
      %v473 = vpop.xlane.xlu0 %472
      %474 = vadd.xlane.f32.xlu0 %v457
      %v475 = vpop.xlane.xlu0 %474
      %476 = vadd.xlane.f32.xlu0 %v458
      %v477 = vpop.xlane.xlu0 %476
      %478 = vadd.xlane.f32.xlu0 %v459
      %v479 = vpop.xlane.xlu0 %478
      %v490 = vlaneseq
      %v491 = vand.u32 %v490, 127
      %v492 = vlaneseq
      %v493 = vshrl.u32 %v492, 7
      %v494 = vsub.s32 %v491, %v493
      %v495 = vrot.slane %v461, %v494
      %v496 = vadd.s32 %v491, 4294967288
      %v497 = vlaneseq
      %v498 = vshrl.u32 %v497, 7
      %v499 = vsub.s32 %v496, %v498
      %v500 = vrot.slane %v463, %v499
      %vm501 = vcmask 130112
      %v502 = vsel %vm501, %v500, %v495
      %v503 = vlaneseq
      %v504 = vshrl.u32 %v503, 7
      %v505 = vsub.s32 %v491, %v504
      %v506 = vrot.slane %v465, %v505
      %v507 = vlaneseq
      %v508 = vshrl.u32 %v507, 7
      %v509 = vsub.s32 %v496, %v508
      %v510 = vrot.slane %v467, %v509
      %v511 = vsel %vm501, %v510, %v506
      %v512 = vlaneseq
      %v513 = vshrl.u32 %v512, 7
      %v514 = vsub.s32 %v491, %v513
      %v515 = vrot.slane %v469, %v514
      %v516 = vlaneseq
      %v517 = vshrl.u32 %v516, 7
      %v518 = vsub.s32 %v496, %v517
      %v519 = vrot.slane %v471, %v518
      %v520 = vsel %vm501, %v519, %v515
      %v521 = vlaneseq
      %v522 = vshrl.u32 %v521, 7
      %v523 = vsub.s32 %v491, %v522
      %v524 = vrot.slane %v473, %v523
      %v525 = vlaneseq
      %v526 = vshrl.u32 %v525, 7
      %v527 = vsub.s32 %v496, %v526
      %v528 = vrot.slane %v475, %v527
      %v529 = vsel %vm501, %v528, %v524
      %v530 = vlaneseq
      %v531 = vshrl.u32 %v530, 7
      %v532 = vsub.s32 %v491, %v531
      %v533 = vrot.slane %v477, %v532
      %v534 = vlaneseq
      %v535 = vshrl.u32 %v534, 7
      %v536 = vsub.s32 %v496, %v535
      %v537 = vrot.slane %v479, %v536
      %v538 = vsel %vm501, %v537, %v533
      %vm539 = vcmask 1041409
      %v540 = vsel %vm539, %v511, %v502
      %vm541 = vcmask 1042434
      %v542 = vsel %vm541, %v520, %v540
      %vm543 = vcmask 1043459
      %v544 = vsel %vm543, %v529, %v542
      %vm545 = vcmask 1044484
      %v546 = vsel %vm545, %v538, %v544
      %vm548 = vcmask 126976
      %v549 = vsel %vm548, %v546, -inf
      %550 = vmax.xlane.f32.xlu0 %v549
      %v551 = vpop.xlane.xlu0 %550
      %v553 = vlaneseq
      %v554 = vshrl.u32 %v553, 7
      %v555 = vsub.s32 0, %v554
      %v556 = vrot.slane %v551, %v555
      %v557 = vlaneseq
      %v558 = vshrl.u32 %v557, 7
      %v559 = vsub.s32 1, %v558
      %v560 = vrot.slane %v551, %v559
      %v561 = vlaneseq
      %v562 = vshrl.u32 %v561, 7
      %v563 = vsub.s32 2, %v562
      %v564 = vrot.slane %v551, %v563
      %v565 = vlaneseq
      %v566 = vshrl.u32 %v565, 7
      %v567 = vsub.s32 3, %v566
      %v568 = vrot.slane %v551, %v567
      %v569 = vlaneseq
      %v570 = vshrl.u32 %v569, 7
      %v571 = vsub.s32 4, %v570
      %v572 = vrot.slane %v551, %v571
      %v578 = vsub.f32 %v461, %v556
      %v579 = vsub.f32 %v463, %v556
      %v580 = vsub.f32 %v465, %v560
      %v581 = vsub.f32 %v467, %v560
      %v582 = vsub.f32 %v469, %v564
      %v583 = vsub.f32 %v471, %v564
      %v584 = vsub.f32 %v473, %v568
      %v585 = vsub.f32 %v475, %v568
      %v586 = vsub.f32 %v477, %v572
      %v587 = vsub.f32 %v479, %v572
      %v588 = vmul.f32 %v578, 1.442695
      %v589 = vpow.pop %v588
      %v590 = vmul.f32 %v579, 1.442695
      %v591 = vpow.pop %v590
      %v592 = vmul.f32 %v580, 1.442695
      %v593 = vpow.pop %v592
      %v594 = vmul.f32 %v581, 1.442695
      %v595 = vpow.pop %v594
      %v596 = vmul.f32 %v582, 1.442695
      %v597 = vpow.pop %v596
      %v598 = vmul.f32 %v583, 1.442695
      %v599 = vpow.pop %v598
      %v600 = vmul.f32 %v584, 1.442695
      %v601 = vpow.pop %v600
      %v602 = vmul.f32 %v585, 1.442695
      %v603 = vpow.pop %v602
      %v604 = vmul.f32 %v586, 1.442695
      %v605 = vpow.pop %v604
      %v606 = vmul.f32 %v587, 1.442695
      %v607 = vpow.pop %v606
      %618 = vset.pattern.permute.xlu0 0
      %619 = vperm.xlu0 %618, %v589
      %v620 = vpop.permute.xlu0 %619
      %621 = vset.pattern.permute.xlu0 0
      %622 = vperm.xlu0 %621, %v591
      %v623 = vpop.permute.xlu0 %622
      %624 = vset.pattern.permute.xlu0 0
      %625 = vperm.xlu0 %624, %v593
      %v626 = vpop.permute.xlu0 %625
      %627 = vset.pattern.permute.xlu0 0
      %628 = vperm.xlu0 %627, %v595
      %v629 = vpop.permute.xlu0 %628
      %630 = vset.pattern.permute.xlu0 0
      %631 = vperm.xlu0 %630, %v597
      %v632 = vpop.permute.xlu0 %631
      %633 = vset.pattern.permute.xlu0 0
      %634 = vperm.xlu0 %633, %v599
      %v635 = vpop.permute.xlu0 %634
      %636 = vset.pattern.permute.xlu0 0
      %637 = vperm.xlu0 %636, %v601
      %v638 = vpop.permute.xlu0 %637
      %639 = vset.pattern.permute.xlu0 0
      %640 = vperm.xlu0 %639, %v603
      %v641 = vpop.permute.xlu0 %640
      %642 = vset.pattern.permute.xlu0 0
      %643 = vperm.xlu0 %642, %v605
      %v644 = vpop.permute.xlu0 %643
      %645 = vset.pattern.permute.xlu0 0
      %646 = vperm.xlu0 %645, %v607
      %v647 = vpop.permute.xlu0 %646
      %v648 = vlaneseq
      %v649 = vshrl.u32 %v648, 7
      %v650 = vsub.s32 %v491, %v649
      %v651 = vrot.slane %v620, %v650
      %v652 = vlaneseq
      %v653 = vshrl.u32 %v652, 7
      %v654 = vsub.s32 %v496, %v653
      %v655 = vrot.slane %v623, %v654
      %v656 = vsel %vm501, %v655, %v651
      %v657 = vlaneseq
      %v658 = vshrl.u32 %v657, 7
      %v659 = vsub.s32 %v491, %v658
      %v660 = vrot.slane %v626, %v659
      %v661 = vlaneseq
      %v662 = vshrl.u32 %v661, 7
      %v663 = vsub.s32 %v496, %v662
      %v664 = vrot.slane %v629, %v663
      %v665 = vsel %vm501, %v664, %v660
      %v666 = vlaneseq
      %v667 = vshrl.u32 %v666, 7
      %v668 = vsub.s32 %v491, %v667
      %v669 = vrot.slane %v632, %v668
      %v670 = vlaneseq
      %v671 = vshrl.u32 %v670, 7
      %v672 = vsub.s32 %v496, %v671
      %v673 = vrot.slane %v635, %v672
      %v674 = vsel %vm501, %v673, %v669
      %v675 = vlaneseq
      %v676 = vshrl.u32 %v675, 7
      %v677 = vsub.s32 %v491, %v676
      %v678 = vrot.slane %v638, %v677
      %v679 = vlaneseq
      %v680 = vshrl.u32 %v679, 7
      %v681 = vsub.s32 %v496, %v680
      %v682 = vrot.slane %v641, %v681
      %v683 = vsel %vm501, %v682, %v678
      %v684 = vlaneseq
      %v685 = vshrl.u32 %v684, 7
      %v686 = vsub.s32 %v491, %v685
      %v687 = vrot.slane %v644, %v686
      %v688 = vlaneseq
      %v689 = vshrl.u32 %v688, 7
      %v690 = vsub.s32 %v496, %v689
      %v691 = vrot.slane %v647, %v690
      %v692 = vsel %vm501, %v691, %v687
      %v693 = vsel %vm539, %v665, %v656
      %v694 = vsel %vm541, %v674, %v693
      %v695 = vsel %vm543, %v683, %v694
      %v696 = vsel %vm545, %v692, %v695
      %v698 = vsel %vm548, %v696, 0.0
      %699 = vadd.xlane.f32.xlu0 %v698
      %v700 = vpop.xlane.xlu0 %699
      %v701 = vrcp.pop %v700
      %v703 = vlaneseq
      %v704 = vshrl.u32 %v703, 7
      %v705 = vsub.s32 0, %v704
      %v706 = vrot.slane %v701, %v705
      %v707 = vlaneseq
      %v708 = vshrl.u32 %v707, 7
      %v709 = vsub.s32 1, %v708
      %v710 = vrot.slane %v701, %v709
      %v711 = vlaneseq
      %v712 = vshrl.u32 %v711, 7
      %v713 = vsub.s32 2, %v712
      %v714 = vrot.slane %v701, %v713
      %v715 = vlaneseq
      %v716 = vshrl.u32 %v715, 7
      %v717 = vsub.s32 3, %v716
      %v718 = vrot.slane %v701, %v717
      %v719 = vlaneseq
      %v720 = vshrl.u32 %v719, 7
      %v721 = vsub.s32 4, %v720
      %v722 = vrot.slane %v701, %v721
      %v728 = vmul.f32 %v589, %v706
      %v729 = vmul.f32 %v591, %v706
      %v730 = vmul.f32 %v593, %v710
      %v731 = vmul.f32 %v595, %v710
      %v732 = vmul.f32 %v597, %v714
      %v733 = vmul.f32 %v599, %v714
      %v734 = vmul.f32 %v601, %v718
      %v735 = vmul.f32 %v603, %v718
      %v736 = vmul.f32 %v605, %v722
      %v737 = vmul.f32 %v607, %v722
      %739 = vset.pattern.permute.xlu0 0
      %740 = vperm.xlu0 %739, %v728
      %v741 = vpop.permute.xlu0 %740
      %744 = vset.pattern.permute.xlu0 0
      %745 = vperm.xlu0 %744, %v729
      %v746 = vpop.permute.xlu0 %745
      %749 = vset.pattern.permute.xlu0 0
      %750 = vperm.xlu0 %749, %v730
      %v751 = vpop.permute.xlu0 %750
      %754 = vset.pattern.permute.xlu0 0
      %755 = vperm.xlu0 %754, %v731
      %v756 = vpop.permute.xlu0 %755
      %759 = vset.pattern.permute.xlu0 0
      %760 = vperm.xlu0 %759, %v732
      %v761 = vpop.permute.xlu0 %760
      %764 = vset.pattern.permute.xlu0 0
      %765 = vperm.xlu0 %764, %v733
      %v766 = vpop.permute.xlu0 %765
      %769 = vset.pattern.permute.xlu0 0
      %770 = vperm.xlu0 %769, %v734
      %v771 = vpop.permute.xlu0 %770
      %774 = vset.pattern.permute.xlu0 0
      %775 = vperm.xlu0 %774, %v735
      %v776 = vpop.permute.xlu0 %775
      %779 = vset.pattern.permute.xlu0 0
      %780 = vperm.xlu0 %779, %v736
      %v781 = vpop.permute.xlu0 %780
      %784 = vset.pattern.permute.xlu0 0
      %785 = vperm.xlu0 %784, %v737
      %v786 = vpop.permute.xlu0 %785
      %v788 = vmul.f32 %v741, %v258
      %v789 = vmul.f32 %v746, %v259
      %v790 = vmul.f32 %v751, %v260
      %v791 = vmul.f32 %v756, %v261
      %v792 = vmul.f32 %v761, %v262
      %v793 = vmul.f32 %v766, %v263
      %v794 = vmul.f32 %v771, %v264
      %v795 = vmul.f32 %v776, %v265
      %v796 = vmul.f32 %v781, %v266
      %v797 = vmul.f32 %v786, %v267
      %v798 = vsel %vm272, %v788, 0.0
      %v799 = vsel %vm272, %v789, 0.0
      %v800 = vadd.f32 %v798, %v799
      %v801 = vrot.slane %v800, 4
      %v802 = vadd.f32 %v800, %v801
      %v803 = vrot.slane %v802, 2
      %v804 = vadd.f32 %v802, %v803
      %v805 = vrot.slane %v804, 1
      %v806 = vadd.f32 %v804, %v805
      %v807 = vsel %vm272, %v790, 0.0
      %v808 = vsel %vm272, %v791, 0.0
      %v809 = vadd.f32 %v807, %v808
      %v810 = vrot.slane %v809, 4
      %v811 = vadd.f32 %v809, %v810
      %v812 = vrot.slane %v811, 2
      %v813 = vadd.f32 %v811, %v812
      %v814 = vrot.slane %v813, 1
      %v815 = vadd.f32 %v813, %v814
      %v816 = vsel %vm272, %v792, 0.0
      %v817 = vsel %vm272, %v793, 0.0
      %v818 = vadd.f32 %v816, %v817
      %v819 = vrot.slane %v818, 4
      %v820 = vadd.f32 %v818, %v819
      %v821 = vrot.slane %v820, 2
      %v822 = vadd.f32 %v820, %v821
      %v823 = vrot.slane %v822, 1
      %v824 = vadd.f32 %v822, %v823
      %v825 = vsel %vm272, %v794, 0.0
      %v826 = vsel %vm272, %v795, 0.0
      %v827 = vadd.f32 %v825, %v826
      %v828 = vrot.slane %v827, 4
      %v829 = vadd.f32 %v827, %v828
      %v830 = vrot.slane %v829, 2
      %v831 = vadd.f32 %v829, %v830
      %v832 = vrot.slane %v831, 1
      %v833 = vadd.f32 %v831, %v832
      %v834 = vsel %vm272, %v796, 0.0
      %v835 = vsel %vm272, %v797, 0.0
      %v836 = vadd.f32 %v834, %v835
      %v837 = vrot.slane %v836, 4
      %v838 = vadd.f32 %v836, %v837
      %v839 = vrot.slane %v838, 2
      %v840 = vadd.f32 %v838, %v839
      %v841 = vrot.slane %v840, 1
      %v842 = vadd.f32 %v840, %v841
      %vm843 = vcmask 253952
      %844 = vst.msk [vmem:[#allocation2] sm:$0x1] %vm843, %v806
      %845 = vst.msk [vmem:[#allocation2 + $0x8] sm:$0x1] %vm843, %v815
      %846 = vst.msk [vmem:[#allocation2 + $0x10] sm:$0x1] %vm843, %v824
      %847 = vst.msk [vmem:[#allocation2 + $0x18] sm:$0x1] %vm843, %v833
      %848 = vst.msk [vmem:[#allocation2 + $0x20] sm:$0x1] %vm843, %v842
      %v849 = vlaneseq
      %v850 = vshrl.u32 %v849, 7
      %v851 = vsub.s32 1, %v850
      %v852 = vrot.slane %v418, %v851
      %v853 = vadd.f32 %v370, %v852
      %v854 = vadd.f32 %v375, %v852
      %v855 = vadd.f32 %v380, %v852
      %v856 = vadd.f32 %v385, %v852
      %v857 = vadd.f32 %v390, %v852
      %v858 = vadd.f32 %v395, %v852
      %v859 = vadd.f32 %v400, %v852
      %v860 = vadd.f32 %v405, %v852
      %v861 = vadd.f32 %v410, %v852
      %v862 = vadd.f32 %v415, %v852
      %v863 = vtanh.pop %v853
      %v864 = vtanh.pop %v854
      %v865 = vtanh.pop %v855
      %v866 = vtanh.pop %v856
      %v867 = vtanh.pop %v857
      %v868 = vtanh.pop %v858
      %v869 = vtanh.pop %v859
      %v870 = vtanh.pop %v860
      %v871 = vtanh.pop %v861
      %v872 = vtanh.pop %v862
      %v873 = vmul.f32 %v863, %v448
      %v874 = vmul.f32 %v864, %v448
      %v875 = vmul.f32 %v865, %v448
      %v876 = vmul.f32 %v866, %v448
      %v877 = vmul.f32 %v867, %v448
      %v878 = vmul.f32 %v868, %v448
      %v879 = vmul.f32 %v869, %v448
      %v880 = vmul.f32 %v870, %v448
      %v881 = vmul.f32 %v871, %v448
      %v882 = vmul.f32 %v872, %v448
      %883 = vadd.xlane.f32.xlu0 %v873
      %v884 = vpop.xlane.xlu0 %883
      %885 = vadd.xlane.f32.xlu0 %v874
      %v886 = vpop.xlane.xlu0 %885
      %887 = vadd.xlane.f32.xlu0 %v875
      %v888 = vpop.xlane.xlu0 %887
      %889 = vadd.xlane.f32.xlu0 %v876
      %v890 = vpop.xlane.xlu0 %889
      %891 = vadd.xlane.f32.xlu0 %v877
      %v892 = vpop.xlane.xlu0 %891
      %893 = vadd.xlane.f32.xlu0 %v878
      %v894 = vpop.xlane.xlu0 %893
      %895 = vadd.xlane.f32.xlu0 %v879
      %v896 = vpop.xlane.xlu0 %895
      %897 = vadd.xlane.f32.xlu0 %v880
      %v898 = vpop.xlane.xlu0 %897
      %899 = vadd.xlane.f32.xlu0 %v881
      %v900 = vpop.xlane.xlu0 %899
      %901 = vadd.xlane.f32.xlu0 %v882
      %v902 = vpop.xlane.xlu0 %901
      %v913 = vlaneseq
      %v914 = vshrl.u32 %v913, 7
      %v915 = vsub.s32 %v491, %v914
      %v916 = vrot.slane %v884, %v915
      %v917 = vlaneseq
      %v918 = vshrl.u32 %v917, 7
      %v919 = vsub.s32 %v496, %v918
      %v920 = vrot.slane %v886, %v919
      %v921 = vsel %vm501, %v920, %v916
      %v922 = vlaneseq
      %v923 = vshrl.u32 %v922, 7
      %v924 = vsub.s32 %v491, %v923
      %v925 = vrot.slane %v888, %v924
      %v926 = vlaneseq
      %v927 = vshrl.u32 %v926, 7
      %v928 = vsub.s32 %v496, %v927
      %v929 = vrot.slane %v890, %v928
      %v930 = vsel %vm501, %v929, %v925
      %v931 = vlaneseq
      %v932 = vshrl.u32 %v931, 7
      %v933 = vsub.s32 %v491, %v932
      %v934 = vrot.slane %v892, %v933
      %v935 = vlaneseq
      %v936 = vshrl.u32 %v935, 7
      %v937 = vsub.s32 %v496, %v936
      %v938 = vrot.slane %v894, %v937
      %v939 = vsel %vm501, %v938, %v934
      %v940 = vlaneseq
      %v941 = vshrl.u32 %v940, 7
      %v942 = vsub.s32 %v491, %v941
      %v943 = vrot.slane %v896, %v942
      %v944 = vlaneseq
      %v945 = vshrl.u32 %v944, 7
      %v946 = vsub.s32 %v496, %v945
      %v947 = vrot.slane %v898, %v946
      %v948 = vsel %vm501, %v947, %v943
      %v949 = vlaneseq
      %v950 = vshrl.u32 %v949, 7
      %v951 = vsub.s32 %v491, %v950
      %v952 = vrot.slane %v900, %v951
      %v953 = vlaneseq
      %v954 = vshrl.u32 %v953, 7
      %v955 = vsub.s32 %v496, %v954
      %v956 = vrot.slane %v902, %v955
      %v957 = vsel %vm501, %v956, %v952
      %v958 = vsel %vm539, %v930, %v921
      %v959 = vsel %vm541, %v939, %v958
      %v960 = vsel %vm543, %v948, %v959
      %v961 = vsel %vm545, %v957, %v960
      %v963 = vsel %vm548, %v961, -inf
      %964 = vmax.xlane.f32.xlu0 %v963
      %v965 = vpop.xlane.xlu0 %964
      %v967 = vlaneseq
      %v968 = vshrl.u32 %v967, 7
      %v969 = vsub.s32 0, %v968
      %v970 = vrot.slane %v965, %v969
      %v971 = vlaneseq
      %v972 = vshrl.u32 %v971, 7
      %v973 = vsub.s32 1, %v972
      %v974 = vrot.slane %v965, %v973
      %v975 = vlaneseq
      %v976 = vshrl.u32 %v975, 7
      %v977 = vsub.s32 2, %v976
      %v978 = vrot.slane %v965, %v977
      %v979 = vlaneseq
      %v980 = vshrl.u32 %v979, 7
      %v981 = vsub.s32 3, %v980
      %v982 = vrot.slane %v965, %v981
      %v983 = vlaneseq
      %v984 = vshrl.u32 %v983, 7
      %v985 = vsub.s32 4, %v984
      %v986 = vrot.slane %v965, %v985
      %v992 = vsub.f32 %v884, %v970
      %v993 = vsub.f32 %v886, %v970
      %v994 = vsub.f32 %v888, %v974
      %v995 = vsub.f32 %v890, %v974
      %v996 = vsub.f32 %v892, %v978
      %v997 = vsub.f32 %v894, %v978
      %v998 = vsub.f32 %v896, %v982
      %v999 = vsub.f32 %v898, %v982
      %v1000 = vsub.f32 %v900, %v986
      %v1001 = vsub.f32 %v902, %v986
      %v1002 = vmul.f32 %v992, 1.442695
      %v1003 = vpow.pop %v1002
      %v1004 = vmul.f32 %v993, 1.442695
      %v1005 = vpow.pop %v1004
      %v1006 = vmul.f32 %v994, 1.442695
      %v1007 = vpow.pop %v1006
      %v1008 = vmul.f32 %v995, 1.442695
      %v1009 = vpow.pop %v1008
      %v1010 = vmul.f32 %v996, 1.442695
      %v1011 = vpow.pop %v1010
      %v1012 = vmul.f32 %v997, 1.442695
      %v1013 = vpow.pop %v1012
      %v1014 = vmul.f32 %v998, 1.442695
      %v1015 = vpow.pop %v1014
      %v1016 = vmul.f32 %v999, 1.442695
      %v1017 = vpow.pop %v1016
      %v1018 = vmul.f32 %v1000, 1.442695
      %v1019 = vpow.pop %v1018
      %v1020 = vmul.f32 %v1001, 1.442695
      %v1021 = vpow.pop %v1020
      %1032 = vset.pattern.permute.xlu0 0
      %1033 = vperm.xlu0 %1032, %v1003
      %v1034 = vpop.permute.xlu0 %1033
      %1035 = vset.pattern.permute.xlu0 0
      %1036 = vperm.xlu0 %1035, %v1005
      %v1037 = vpop.permute.xlu0 %1036
      %1038 = vset.pattern.permute.xlu0 0
      %1039 = vperm.xlu0 %1038, %v1007
      %v1040 = vpop.permute.xlu0 %1039
      %1041 = vset.pattern.permute.xlu0 0
      %1042 = vperm.xlu0 %1041, %v1009
      %v1043 = vpop.permute.xlu0 %1042
      %1044 = vset.pattern.permute.xlu0 0
      %1045 = vperm.xlu0 %1044, %v1011
      %v1046 = vpop.permute.xlu0 %1045
      %1047 = vset.pattern.permute.xlu0 0
      %1048 = vperm.xlu0 %1047, %v1013
      %v1049 = vpop.permute.xlu0 %1048
      %1050 = vset.pattern.permute.xlu0 0
      %1051 = vperm.xlu0 %1050, %v1015
      %v1052 = vpop.permute.xlu0 %1051
      %1053 = vset.pattern.permute.xlu0 0
      %1054 = vperm.xlu0 %1053, %v1017
      %v1055 = vpop.permute.xlu0 %1054
      %1056 = vset.pattern.permute.xlu0 0
      %1057 = vperm.xlu0 %1056, %v1019
      %v1058 = vpop.permute.xlu0 %1057
      %1059 = vset.pattern.permute.xlu0 0
      %1060 = vperm.xlu0 %1059, %v1021
      %v1061 = vpop.permute.xlu0 %1060
      %v1062 = vlaneseq
      %v1063 = vshrl.u32 %v1062, 7
      %v1064 = vsub.s32 %v491, %v1063
      %v1065 = vrot.slane %v1034, %v1064
      %v1066 = vlaneseq
      %v1067 = vshrl.u32 %v1066, 7
      %v1068 = vsub.s32 %v496, %v1067
      %v1069 = vrot.slane %v1037, %v1068
      %v1070 = vsel %vm501, %v1069, %v1065
      %v1071 = vlaneseq
      %v1072 = vshrl.u32 %v1071, 7
      %v1073 = vsub.s32 %v491, %v1072
      %v1074 = vrot.slane %v1040, %v1073
      %v1075 = vlaneseq
      %v1076 = vshrl.u32 %v1075, 7
      %v1077 = vsub.s32 %v496, %v1076
      %v1078 = vrot.slane %v1043, %v1077
      %v1079 = vsel %vm501, %v1078, %v1074
      %v1080 = vlaneseq
      %v1081 = vshrl.u32 %v1080, 7
      %v1082 = vsub.s32 %v491, %v1081
      %v1083 = vrot.slane %v1046, %v1082
      %v1084 = vlaneseq
      %v1085 = vshrl.u32 %v1084, 7
      %v1086 = vsub.s32 %v496, %v1085
      %v1087 = vrot.slane %v1049, %v1086
      %v1088 = vsel %vm501, %v1087, %v1083
      %v1089 = vlaneseq
      %v1090 = vshrl.u32 %v1089, 7
      %v1091 = vsub.s32 %v491, %v1090
      %v1092 = vrot.slane %v1052, %v1091
      %v1093 = vlaneseq
      %v1094 = vshrl.u32 %v1093, 7
      %v1095 = vsub.s32 %v496, %v1094
      %v1096 = vrot.slane %v1055, %v1095
      %v1097 = vsel %vm501, %v1096, %v1092
      %v1098 = vlaneseq
      %v1099 = vshrl.u32 %v1098, 7
      %v1100 = vsub.s32 %v491, %v1099
      %v1101 = vrot.slane %v1058, %v1100
      %v1102 = vlaneseq
      %v1103 = vshrl.u32 %v1102, 7
      %v1104 = vsub.s32 %v496, %v1103
      %v1105 = vrot.slane %v1061, %v1104
      %v1106 = vsel %vm501, %v1105, %v1101
      %v1107 = vsel %vm539, %v1079, %v1070
      %v1108 = vsel %vm541, %v1088, %v1107
      %v1109 = vsel %vm543, %v1097, %v1108
      %v1110 = vsel %vm545, %v1106, %v1109
      %v1112 = vsel %vm548, %v1110, 0.0
      %1113 = vadd.xlane.f32.xlu0 %v1112
      %v1114 = vpop.xlane.xlu0 %1113
      %v1115 = vrcp.pop %v1114
      %v1117 = vlaneseq
      %v1118 = vshrl.u32 %v1117, 7
      %v1119 = vsub.s32 0, %v1118
      %v1120 = vrot.slane %v1115, %v1119
      %v1121 = vlaneseq
      %v1122 = vshrl.u32 %v1121, 7
      %v1123 = vsub.s32 1, %v1122
      %v1124 = vrot.slane %v1115, %v1123
      %v1125 = vlaneseq
      %v1126 = vshrl.u32 %v1125, 7
      %v1127 = vsub.s32 2, %v1126
      %v1128 = vrot.slane %v1115, %v1127
      %v1129 = vlaneseq
      %v1130 = vshrl.u32 %v1129, 7
      %v1131 = vsub.s32 3, %v1130
      %v1132 = vrot.slane %v1115, %v1131
      %v1133 = vlaneseq
      %v1134 = vshrl.u32 %v1133, 7
      %v1135 = vsub.s32 4, %v1134
      %v1136 = vrot.slane %v1115, %v1135
      %v1142 = vmul.f32 %v1003, %v1120
      %v1143 = vmul.f32 %v1005, %v1120
      %v1144 = vmul.f32 %v1007, %v1124
      %v1145 = vmul.f32 %v1009, %v1124
      %v1146 = vmul.f32 %v1011, %v1128
      %v1147 = vmul.f32 %v1013, %v1128
      %v1148 = vmul.f32 %v1015, %v1132
      %v1149 = vmul.f32 %v1017, %v1132
      %v1150 = vmul.f32 %v1019, %v1136
      %v1151 = vmul.f32 %v1021, %v1136
      %1153 = vset.pattern.permute.xlu0 0
      %1154 = vperm.xlu0 %1153, %v1142
      %v1155 = vpop.permute.xlu0 %1154
      %1158 = vset.pattern.permute.xlu0 0
      %1159 = vperm.xlu0 %1158, %v1143
      %v1160 = vpop.permute.xlu0 %1159
      %1163 = vset.pattern.permute.xlu0 0
      %1164 = vperm.xlu0 %1163, %v1144
      %v1165 = vpop.permute.xlu0 %1164
      %1168 = vset.pattern.permute.xlu0 0
      %1169 = vperm.xlu0 %1168, %v1145
      %v1170 = vpop.permute.xlu0 %1169
      %1173 = vset.pattern.permute.xlu0 0
      %1174 = vperm.xlu0 %1173, %v1146
      %v1175 = vpop.permute.xlu0 %1174
      %1178 = vset.pattern.permute.xlu0 0
      %1179 = vperm.xlu0 %1178, %v1147
      %v1180 = vpop.permute.xlu0 %1179
      %1183 = vset.pattern.permute.xlu0 0
      %1184 = vperm.xlu0 %1183, %v1148
      %v1185 = vpop.permute.xlu0 %1184
      %1188 = vset.pattern.permute.xlu0 0
      %1189 = vperm.xlu0 %1188, %v1149
      %v1190 = vpop.permute.xlu0 %1189
      %1193 = vset.pattern.permute.xlu0 0
      %1194 = vperm.xlu0 %1193, %v1150
      %v1195 = vpop.permute.xlu0 %1194
      %1198 = vset.pattern.permute.xlu0 0
      %1199 = vperm.xlu0 %1198, %v1151
      %v1200 = vpop.permute.xlu0 %1199
      %v1202 = vmul.f32 %v1155, %v258
      %v1203 = vmul.f32 %v1160, %v259
      %v1204 = vmul.f32 %v1165, %v260
      %v1205 = vmul.f32 %v1170, %v261
      %v1206 = vmul.f32 %v1175, %v262
      %v1207 = vmul.f32 %v1180, %v263
      %v1208 = vmul.f32 %v1185, %v264
      %v1209 = vmul.f32 %v1190, %v265
      %v1210 = vmul.f32 %v1195, %v266
      %v1211 = vmul.f32 %v1200, %v267
      %v1212 = vsel %vm272, %v1202, 0.0
      %v1213 = vsel %vm272, %v1203, 0.0
      %v1214 = vadd.f32 %v1212, %v1213
      %v1215 = vrot.slane %v1214, 4
      %v1216 = vadd.f32 %v1214, %v1215
      %v1217 = vrot.slane %v1216, 2
      %v1218 = vadd.f32 %v1216, %v1217
      %v1219 = vrot.slane %v1218, 1
      %v1220 = vadd.f32 %v1218, %v1219
      %v1221 = vsel %vm272, %v1204, 0.0
      %v1222 = vsel %vm272, %v1205, 0.0
      %v1223 = vadd.f32 %v1221, %v1222
      %v1224 = vrot.slane %v1223, 4
      %v1225 = vadd.f32 %v1223, %v1224
      %v1226 = vrot.slane %v1225, 2
      %v1227 = vadd.f32 %v1225, %v1226
      %v1228 = vrot.slane %v1227, 1
      %v1229 = vadd.f32 %v1227, %v1228
      %v1230 = vsel %vm272, %v1206, 0.0
      %v1231 = vsel %vm272, %v1207, 0.0
      %v1232 = vadd.f32 %v1230, %v1231
      %v1233 = vrot.slane %v1232, 4
      %v1234 = vadd.f32 %v1232, %v1233
      %v1235 = vrot.slane %v1234, 2
      %v1236 = vadd.f32 %v1234, %v1235
      %v1237 = vrot.slane %v1236, 1
      %v1238 = vadd.f32 %v1236, %v1237
      %v1239 = vsel %vm272, %v1208, 0.0
      %v1240 = vsel %vm272, %v1209, 0.0
      %v1241 = vadd.f32 %v1239, %v1240
      %v1242 = vrot.slane %v1241, 4
      %v1243 = vadd.f32 %v1241, %v1242
      %v1244 = vrot.slane %v1243, 2
      %v1245 = vadd.f32 %v1243, %v1244
      %v1246 = vrot.slane %v1245, 1
      %v1247 = vadd.f32 %v1245, %v1246
      %v1248 = vsel %vm272, %v1210, 0.0
      %v1249 = vsel %vm272, %v1211, 0.0
      %v1250 = vadd.f32 %v1248, %v1249
      %v1251 = vrot.slane %v1250, 4
      %v1252 = vadd.f32 %v1250, %v1251
      %v1253 = vrot.slane %v1252, 2
      %v1254 = vadd.f32 %v1252, %v1253
      %v1255 = vrot.slane %v1254, 1
      %v1256 = vadd.f32 %v1254, %v1255
      %1257 = vst.msk [vmem:[#allocation2 + $0x1] sm:$0x1] %vm843, %v1220
      %1258 = vst.msk [vmem:[#allocation2 + $0x9] sm:$0x1] %vm843, %v1229
      %1259 = vst.msk [vmem:[#allocation2 + $0x11] sm:$0x1] %vm843, %v1238
      %1260 = vst.msk [vmem:[#allocation2 + $0x19] sm:$0x1] %vm843, %v1247
      %1261 = vst.msk [vmem:[#allocation2 + $0x21] sm:$0x1] %vm843, %v1256
      %v1262 = vlaneseq
      %v1263 = vshrl.u32 %v1262, 7
      %v1264 = vsub.s32 2, %v1263
      %v1265 = vrot.slane %v418, %v1264
      %v1266 = vadd.f32 %v370, %v1265
      %v1267 = vadd.f32 %v375, %v1265
      %v1268 = vadd.f32 %v380, %v1265
      %v1269 = vadd.f32 %v385, %v1265
      %v1270 = vadd.f32 %v390, %v1265
      %v1271 = vadd.f32 %v395, %v1265
      %v1272 = vadd.f32 %v400, %v1265
      %v1273 = vadd.f32 %v405, %v1265
      %v1274 = vadd.f32 %v410, %v1265
      %v1275 = vadd.f32 %v415, %v1265
      %v1276 = vtanh.pop %v1266
      %v1277 = vtanh.pop %v1267
      %v1278 = vtanh.pop %v1268
      %v1279 = vtanh.pop %v1269
      %v1280 = vtanh.pop %v1270
      %v1281 = vtanh.pop %v1271
      %v1282 = vtanh.pop %v1272
      %v1283 = vtanh.pop %v1273
      %v1284 = vtanh.pop %v1274
      %v1285 = vtanh.pop %v1275
      %v1286 = vmul.f32 %v1276, %v448
      %v1287 = vmul.f32 %v1277, %v448
      %v1288 = vmul.f32 %v1278, %v448
      %v1289 = vmul.f32 %v1279, %v448
      %v1290 = vmul.f32 %v1280, %v448
      %v1291 = vmul.f32 %v1281, %v448
      %v1292 = vmul.f32 %v1282, %v448
      %v1293 = vmul.f32 %v1283, %v448
      %v1294 = vmul.f32 %v1284, %v448
      %v1295 = vmul.f32 %v1285, %v448
      %1296 = vadd.xlane.f32.xlu0 %v1286
      %v1297 = vpop.xlane.xlu0 %1296
      %1298 = vadd.xlane.f32.xlu0 %v1287
      %v1299 = vpop.xlane.xlu0 %1298
      %1300 = vadd.xlane.f32.xlu0 %v1288
      %v1301 = vpop.xlane.xlu0 %1300
      %1302 = vadd.xlane.f32.xlu0 %v1289
      %v1303 = vpop.xlane.xlu0 %1302
      %1304 = vadd.xlane.f32.xlu0 %v1290
      %v1305 = vpop.xlane.xlu0 %1304
      %1306 = vadd.xlane.f32.xlu0 %v1291
      %v1307 = vpop.xlane.xlu0 %1306
      %1308 = vadd.xlane.f32.xlu0 %v1292
      %v1309 = vpop.xlane.xlu0 %1308
      %1310 = vadd.xlane.f32.xlu0 %v1293
      %v1311 = vpop.xlane.xlu0 %1310
      %1312 = vadd.xlane.f32.xlu0 %v1294
      %v1313 = vpop.xlane.xlu0 %1312
      %1314 = vadd.xlane.f32.xlu0 %v1295
      %v1315 = vpop.xlane.xlu0 %1314
      %v1326 = vlaneseq
      %v1327 = vshrl.u32 %v1326, 7
      %v1328 = vsub.s32 %v491, %v1327
      %v1329 = vrot.slane %v1297, %v1328
      %v1330 = vlaneseq
      %v1331 = vshrl.u32 %v1330, 7
      %v1332 = vsub.s32 %v496, %v1331
      %v1333 = vrot.slane %v1299, %v1332
      %v1334 = vsel %vm501, %v1333, %v1329
      %v1335 = vlaneseq
      %v1336 = vshrl.u32 %v1335, 7
      %v1337 = vsub.s32 %v491, %v1336
      %v1338 = vrot.slane %v1301, %v1337
      %v1339 = vlaneseq
      %v1340 = vshrl.u32 %v1339, 7
      %v1341 = vsub.s32 %v496, %v1340
      %v1342 = vrot.slane %v1303, %v1341
      %v1343 = vsel %vm501, %v1342, %v1338
      %v1344 = vlaneseq
      %v1345 = vshrl.u32 %v1344, 7
      %v1346 = vsub.s32 %v491, %v1345
      %v1347 = vrot.slane %v1305, %v1346
      %v1348 = vlaneseq
      %v1349 = vshrl.u32 %v1348, 7
      %v1350 = vsub.s32 %v496, %v1349
      %v1351 = vrot.slane %v1307, %v1350
      %v1352 = vsel %vm501, %v1351, %v1347
      %v1353 = vlaneseq
      %v1354 = vshrl.u32 %v1353, 7
      %v1355 = vsub.s32 %v491, %v1354
      %v1356 = vrot.slane %v1309, %v1355
      %v1357 = vlaneseq
      %v1358 = vshrl.u32 %v1357, 7
      %v1359 = vsub.s32 %v496, %v1358
      %v1360 = vrot.slane %v1311, %v1359
      %v1361 = vsel %vm501, %v1360, %v1356
      %v1362 = vlaneseq
      %v1363 = vshrl.u32 %v1362, 7
      %v1364 = vsub.s32 %v491, %v1363
      %v1365 = vrot.slane %v1313, %v1364
      %v1366 = vlaneseq
      %v1367 = vshrl.u32 %v1366, 7
      %v1368 = vsub.s32 %v496, %v1367
      %v1369 = vrot.slane %v1315, %v1368
      %v1370 = vsel %vm501, %v1369, %v1365
      %v1371 = vsel %vm539, %v1343, %v1334
      %v1372 = vsel %vm541, %v1352, %v1371
      %v1373 = vsel %vm543, %v1361, %v1372
      %v1374 = vsel %vm545, %v1370, %v1373
      %v1376 = vsel %vm548, %v1374, -inf
      %1377 = vmax.xlane.f32.xlu0 %v1376
      %v1378 = vpop.xlane.xlu0 %1377
      %v1380 = vlaneseq
      %v1381 = vshrl.u32 %v1380, 7
      %v1382 = vsub.s32 0, %v1381
      %v1383 = vrot.slane %v1378, %v1382
      %v1384 = vlaneseq
      %v1385 = vshrl.u32 %v1384, 7
      %v1386 = vsub.s32 1, %v1385
      %v1387 = vrot.slane %v1378, %v1386
      %v1388 = vlaneseq
      %v1389 = vshrl.u32 %v1388, 7
      %v1390 = vsub.s32 2, %v1389
      %v1391 = vrot.slane %v1378, %v1390
      %v1392 = vlaneseq
      %v1393 = vshrl.u32 %v1392, 7
      %v1394 = vsub.s32 3, %v1393
      %v1395 = vrot.slane %v1378, %v1394
      %v1396 = vlaneseq
      %v1397 = vshrl.u32 %v1396, 7
      %v1398 = vsub.s32 4, %v1397
      %v1399 = vrot.slane %v1378, %v1398
      %v1405 = vsub.f32 %v1297, %v1383
      %v1406 = vsub.f32 %v1299, %v1383
      %v1407 = vsub.f32 %v1301, %v1387
      %v1408 = vsub.f32 %v1303, %v1387
      %v1409 = vsub.f32 %v1305, %v1391
      %v1410 = vsub.f32 %v1307, %v1391
      %v1411 = vsub.f32 %v1309, %v1395
      %v1412 = vsub.f32 %v1311, %v1395
      %v1413 = vsub.f32 %v1313, %v1399
      %v1414 = vsub.f32 %v1315, %v1399
      %v1415 = vmul.f32 %v1405, 1.442695
      %v1416 = vpow.pop %v1415
      %v1417 = vmul.f32 %v1406, 1.442695
      %v1418 = vpow.pop %v1417
      %v1419 = vmul.f32 %v1407, 1.442695
      %v1420 = vpow.pop %v1419
      %v1421 = vmul.f32 %v1408, 1.442695
      %v1422 = vpow.pop %v1421
      %v1423 = vmul.f32 %v1409, 1.442695
      %v1424 = vpow.pop %v1423
      %v1425 = vmul.f32 %v1410, 1.442695
      %v1426 = vpow.pop %v1425
      %v1427 = vmul.f32 %v1411, 1.442695
      %v1428 = vpow.pop %v1427
      %v1429 = vmul.f32 %v1412, 1.442695
      %v1430 = vpow.pop %v1429
      %v1431 = vmul.f32 %v1413, 1.442695
      %v1432 = vpow.pop %v1431
      %v1433 = vmul.f32 %v1414, 1.442695
      %v1434 = vpow.pop %v1433
      %1445 = vset.pattern.permute.xlu0 0
      %1446 = vperm.xlu0 %1445, %v1416
      %v1447 = vpop.permute.xlu0 %1446
      %1448 = vset.pattern.permute.xlu0 0
      %1449 = vperm.xlu0 %1448, %v1418
      %v1450 = vpop.permute.xlu0 %1449
      %1451 = vset.pattern.permute.xlu0 0
      %1452 = vperm.xlu0 %1451, %v1420
      %v1453 = vpop.permute.xlu0 %1452
      %1454 = vset.pattern.permute.xlu0 0
      %1455 = vperm.xlu0 %1454, %v1422
      %v1456 = vpop.permute.xlu0 %1455
      %1457 = vset.pattern.permute.xlu0 0
      %1458 = vperm.xlu0 %1457, %v1424
      %v1459 = vpop.permute.xlu0 %1458
      %1460 = vset.pattern.permute.xlu0 0
      %1461 = vperm.xlu0 %1460, %v1426
      %v1462 = vpop.permute.xlu0 %1461
      %1463 = vset.pattern.permute.xlu0 0
      %1464 = vperm.xlu0 %1463, %v1428
      %v1465 = vpop.permute.xlu0 %1464
      %1466 = vset.pattern.permute.xlu0 0
      %1467 = vperm.xlu0 %1466, %v1430
      %v1468 = vpop.permute.xlu0 %1467
      %1469 = vset.pattern.permute.xlu0 0
      %1470 = vperm.xlu0 %1469, %v1432
      %v1471 = vpop.permute.xlu0 %1470
      %1472 = vset.pattern.permute.xlu0 0
      %1473 = vperm.xlu0 %1472, %v1434
      %v1474 = vpop.permute.xlu0 %1473
      %v1475 = vlaneseq
      %v1476 = vshrl.u32 %v1475, 7
      %v1477 = vsub.s32 %v491, %v1476
      %v1478 = vrot.slane %v1447, %v1477
      %v1479 = vlaneseq
      %v1480 = vshrl.u32 %v1479, 7
      %v1481 = vsub.s32 %v496, %v1480
      %v1482 = vrot.slane %v1450, %v1481
      %v1483 = vsel %vm501, %v1482, %v1478
      %v1484 = vlaneseq
      %v1485 = vshrl.u32 %v1484, 7
      %v1486 = vsub.s32 %v491, %v1485
      %v1487 = vrot.slane %v1453, %v1486
      %v1488 = vlaneseq
      %v1489 = vshrl.u32 %v1488, 7
      %v1490 = vsub.s32 %v496, %v1489
      %v1491 = vrot.slane %v1456, %v1490
      %v1492 = vsel %vm501, %v1491, %v1487
      %v1493 = vlaneseq
      %v1494 = vshrl.u32 %v1493, 7
      %v1495 = vsub.s32 %v491, %v1494
      %v1496 = vrot.slane %v1459, %v1495
      %v1497 = vlaneseq
      %v1498 = vshrl.u32 %v1497, 7
      %v1499 = vsub.s32 %v496, %v1498
      %v1500 = vrot.slane %v1462, %v1499
      %v1501 = vsel %vm501, %v1500, %v1496
      %v1502 = vlaneseq
      %v1503 = vshrl.u32 %v1502, 7
      %v1504 = vsub.s32 %v491, %v1503
      %v1505 = vrot.slane %v1465, %v1504
      %v1506 = vlaneseq
      %v1507 = vshrl.u32 %v1506, 7
      %v1508 = vsub.s32 %v496, %v1507
      %v1509 = vrot.slane %v1468, %v1508
      %v1510 = vsel %vm501, %v1509, %v1505
      %v1511 = vlaneseq
      %v1512 = vshrl.u32 %v1511, 7
      %v1513 = vsub.s32 %v491, %v1512
      %v1514 = vrot.slane %v1471, %v1513
      %v1515 = vlaneseq
      %v1516 = vshrl.u32 %v1515, 7
      %v1517 = vsub.s32 %v496, %v1516
      %v1518 = vrot.slane %v1474, %v1517
      %v1519 = vsel %vm501, %v1518, %v1514
      %v1520 = vsel %vm539, %v1492, %v1483
      %v1521 = vsel %vm541, %v1501, %v1520
      %v1522 = vsel %vm543, %v1510, %v1521
      %v1523 = vsel %vm545, %v1519, %v1522
      %v1525 = vsel %vm548, %v1523, 0.0
      %1526 = vadd.xlane.f32.xlu0 %v1525
      %v1527 = vpop.xlane.xlu0 %1526
      %v1528 = vrcp.pop %v1527
      %v1530 = vlaneseq
      %v1531 = vshrl.u32 %v1530, 7
      %v1532 = vsub.s32 0, %v1531
      %v1533 = vrot.slane %v1528, %v1532
      %v1534 = vlaneseq
      %v1535 = vshrl.u32 %v1534, 7
      %v1536 = vsub.s32 1, %v1535
      %v1537 = vrot.slane %v1528, %v1536
      %v1538 = vlaneseq
      %v1539 = vshrl.u32 %v1538, 7
      %v1540 = vsub.s32 2, %v1539
      %v1541 = vrot.slane %v1528, %v1540
      %v1542 = vlaneseq
      %v1543 = vshrl.u32 %v1542, 7
      %v1544 = vsub.s32 3, %v1543
      %v1545 = vrot.slane %v1528, %v1544
      %v1546 = vlaneseq
      %v1547 = vshrl.u32 %v1546, 7
      %v1548 = vsub.s32 4, %v1547
      %v1549 = vrot.slane %v1528, %v1548
      %v1555 = vmul.f32 %v1416, %v1533
      %v1556 = vmul.f32 %v1418, %v1533
      %v1557 = vmul.f32 %v1420, %v1537
      %v1558 = vmul.f32 %v1422, %v1537
      %v1559 = vmul.f32 %v1424, %v1541
      %v1560 = vmul.f32 %v1426, %v1541
      %v1561 = vmul.f32 %v1428, %v1545
      %v1562 = vmul.f32 %v1430, %v1545
      %v1563 = vmul.f32 %v1432, %v1549
      %v1564 = vmul.f32 %v1434, %v1549
      %1566 = vset.pattern.permute.xlu0 0
      %1567 = vperm.xlu0 %1566, %v1555
      %v1568 = vpop.permute.xlu0 %1567
      %1571 = vset.pattern.permute.xlu0 0
      %1572 = vperm.xlu0 %1571, %v1556
      %v1573 = vpop.permute.xlu0 %1572
      %1576 = vset.pattern.permute.xlu0 0
      %1577 = vperm.xlu0 %1576, %v1557
      %v1578 = vpop.permute.xlu0 %1577
      %1581 = vset.pattern.permute.xlu0 0
      %1582 = vperm.xlu0 %1581, %v1558
      %v1583 = vpop.permute.xlu0 %1582
      %1586 = vset.pattern.permute.xlu0 0
      %1587 = vperm.xlu0 %1586, %v1559
      %v1588 = vpop.permute.xlu0 %1587
      %1591 = vset.pattern.permute.xlu0 0
      %1592 = vperm.xlu0 %1591, %v1560
      %v1593 = vpop.permute.xlu0 %1592
      %1596 = vset.pattern.permute.xlu0 0
      %1597 = vperm.xlu0 %1596, %v1561
      %v1598 = vpop.permute.xlu0 %1597
      %1601 = vset.pattern.permute.xlu0 0
      %1602 = vperm.xlu0 %1601, %v1562
      %v1603 = vpop.permute.xlu0 %1602
      %1606 = vset.pattern.permute.xlu0 0
      %1607 = vperm.xlu0 %1606, %v1563
      %v1608 = vpop.permute.xlu0 %1607
      %1611 = vset.pattern.permute.xlu0 0
      %1612 = vperm.xlu0 %1611, %v1564
      %v1613 = vpop.permute.xlu0 %1612
      %v1615 = vmul.f32 %v1568, %v258
      %v1616 = vmul.f32 %v1573, %v259
      %v1617 = vmul.f32 %v1578, %v260
      %v1618 = vmul.f32 %v1583, %v261
      %v1619 = vmul.f32 %v1588, %v262
      %v1620 = vmul.f32 %v1593, %v263
      %v1621 = vmul.f32 %v1598, %v264
      %v1622 = vmul.f32 %v1603, %v265
      %v1623 = vmul.f32 %v1608, %v266
      %v1624 = vmul.f32 %v1613, %v267
      %v1625 = vsel %vm272, %v1615, 0.0
      %v1626 = vsel %vm272, %v1616, 0.0
      %v1627 = vadd.f32 %v1625, %v1626
      %v1628 = vrot.slane %v1627, 4
      %v1629 = vadd.f32 %v1627, %v1628
      %v1630 = vrot.slane %v1629, 2
      %v1631 = vadd.f32 %v1629, %v1630
      %v1632 = vrot.slane %v1631, 1
      %v1633 = vadd.f32 %v1631, %v1632
      %v1634 = vsel %vm272, %v1617, 0.0
      %v1635 = vsel %vm272, %v1618, 0.0
      %v1636 = vadd.f32 %v1634, %v1635
      %v1637 = vrot.slane %v1636, 4
      %v1638 = vadd.f32 %v1636, %v1637
      %v1639 = vrot.slane %v1638, 2
      %v1640 = vadd.f32 %v1638, %v1639
      %v1641 = vrot.slane %v1640, 1
      %v1642 = vadd.f32 %v1640, %v1641
      %v1643 = vsel %vm272, %v1619, 0.0
      %v1644 = vsel %vm272, %v1620, 0.0
      %v1645 = vadd.f32 %v1643, %v1644
      %v1646 = vrot.slane %v1645, 4
      %v1647 = vadd.f32 %v1645, %v1646
      %v1648 = vrot.slane %v1647, 2
      %v1649 = vadd.f32 %v1647, %v1648
      %v1650 = vrot.slane %v1649, 1
      %v1651 = vadd.f32 %v1649, %v1650
      %v1652 = vsel %vm272, %v1621, 0.0
      %v1653 = vsel %vm272, %v1622, 0.0
      %v1654 = vadd.f32 %v1652, %v1653
      %v1655 = vrot.slane %v1654, 4
      %v1656 = vadd.f32 %v1654, %v1655
      %v1657 = vrot.slane %v1656, 2
      %v1658 = vadd.f32 %v1656, %v1657
      %v1659 = vrot.slane %v1658, 1
      %v1660 = vadd.f32 %v1658, %v1659
      %v1661 = vsel %vm272, %v1623, 0.0
      %v1662 = vsel %vm272, %v1624, 0.0
      %v1663 = vadd.f32 %v1661, %v1662
      %v1664 = vrot.slane %v1663, 4
      %v1665 = vadd.f32 %v1663, %v1664
      %v1666 = vrot.slane %v1665, 2
      %v1667 = vadd.f32 %v1665, %v1666
      %v1668 = vrot.slane %v1667, 1
      %v1669 = vadd.f32 %v1667, %v1668
      %1670 = vst.msk [vmem:[#allocation2 + $0x2] sm:$0x1] %vm843, %v1633
      %1671 = vst.msk [vmem:[#allocation2 + $0xa] sm:$0x1] %vm843, %v1642
      %1672 = vst.msk [vmem:[#allocation2 + $0x12] sm:$0x1] %vm843, %v1651
      %1673 = vst.msk [vmem:[#allocation2 + $0x1a] sm:$0x1] %vm843, %v1660
      %1674 = vst.msk [vmem:[#allocation2 + $0x22] sm:$0x1] %vm843, %v1669
      %v1675 = vlaneseq
      %v1676 = vshrl.u32 %v1675, 7
      %v1677 = vsub.s32 3, %v1676
      %v1678 = vrot.slane %v418, %v1677
      %v1679 = vadd.f32 %v370, %v1678
      %v1680 = vadd.f32 %v375, %v1678
      %v1681 = vadd.f32 %v380, %v1678
      %v1682 = vadd.f32 %v385, %v1678
      %v1683 = vadd.f32 %v390, %v1678
      %v1684 = vadd.f32 %v395, %v1678
      %v1685 = vadd.f32 %v400, %v1678
      %v1686 = vadd.f32 %v405, %v1678
      %v1687 = vadd.f32 %v410, %v1678
      %v1688 = vadd.f32 %v415, %v1678
      %v1689 = vtanh.pop %v1679
      %v1690 = vtanh.pop %v1680
      %v1691 = vtanh.pop %v1681
      %v1692 = vtanh.pop %v1682
      %v1693 = vtanh.pop %v1683
      %v1694 = vtanh.pop %v1684
      %v1695 = vtanh.pop %v1685
      %v1696 = vtanh.pop %v1686
      %v1697 = vtanh.pop %v1687
      %v1698 = vtanh.pop %v1688
      %v1699 = vmul.f32 %v1689, %v448
      %v1700 = vmul.f32 %v1690, %v448
      %v1701 = vmul.f32 %v1691, %v448
      %v1702 = vmul.f32 %v1692, %v448
      %v1703 = vmul.f32 %v1693, %v448
      %v1704 = vmul.f32 %v1694, %v448
      %v1705 = vmul.f32 %v1695, %v448
      %v1706 = vmul.f32 %v1696, %v448
      %v1707 = vmul.f32 %v1697, %v448
      %v1708 = vmul.f32 %v1698, %v448
      %1709 = vadd.xlane.f32.xlu0 %v1699
      %v1710 = vpop.xlane.xlu0 %1709
      %1711 = vadd.xlane.f32.xlu0 %v1700
      %v1712 = vpop.xlane.xlu0 %1711
      %1713 = vadd.xlane.f32.xlu0 %v1701
      %v1714 = vpop.xlane.xlu0 %1713
      %1715 = vadd.xlane.f32.xlu0 %v1702
      %v1716 = vpop.xlane.xlu0 %1715
      %1717 = vadd.xlane.f32.xlu0 %v1703
      %v1718 = vpop.xlane.xlu0 %1717
      %1719 = vadd.xlane.f32.xlu0 %v1704
      %v1720 = vpop.xlane.xlu0 %1719
      %1721 = vadd.xlane.f32.xlu0 %v1705
      %v1722 = vpop.xlane.xlu0 %1721
      %1723 = vadd.xlane.f32.xlu0 %v1706
      %v1724 = vpop.xlane.xlu0 %1723
      %1725 = vadd.xlane.f32.xlu0 %v1707
      %v1726 = vpop.xlane.xlu0 %1725
      %1727 = vadd.xlane.f32.xlu0 %v1708
      %v1728 = vpop.xlane.xlu0 %1727
      %v1739 = vlaneseq
      %v1740 = vshrl.u32 %v1739, 7
      %v1741 = vsub.s32 %v491, %v1740
      %v1742 = vrot.slane %v1710, %v1741
      %v1743 = vlaneseq
      %v1744 = vshrl.u32 %v1743, 7
      %v1745 = vsub.s32 %v496, %v1744
      %v1746 = vrot.slane %v1712, %v1745
      %v1747 = vsel %vm501, %v1746, %v1742
      %v1748 = vlaneseq
      %v1749 = vshrl.u32 %v1748, 7
      %v1750 = vsub.s32 %v491, %v1749
      %v1751 = vrot.slane %v1714, %v1750
      %v1752 = vlaneseq
      %v1753 = vshrl.u32 %v1752, 7
      %v1754 = vsub.s32 %v496, %v1753
      %v1755 = vrot.slane %v1716, %v1754
      %v1756 = vsel %vm501, %v1755, %v1751
      %v1757 = vlaneseq
      %v1758 = vshrl.u32 %v1757, 7
      %v1759 = vsub.s32 %v491, %v1758
      %v1760 = vrot.slane %v1718, %v1759
      %v1761 = vlaneseq
      %v1762 = vshrl.u32 %v1761, 7
      %v1763 = vsub.s32 %v496, %v1762
      %v1764 = vrot.slane %v1720, %v1763
      %v1765 = vsel %vm501, %v1764, %v1760
      %v1766 = vlaneseq
      %v1767 = vshrl.u32 %v1766, 7
      %v1768 = vsub.s32 %v491, %v1767
      %v1769 = vrot.slane %v1722, %v1768
      %v1770 = vlaneseq
      %v1771 = vshrl.u32 %v1770, 7
      %v1772 = vsub.s32 %v496, %v1771
      %v1773 = vrot.slane %v1724, %v1772
      %v1774 = vsel %vm501, %v1773, %v1769
      %v1775 = vlaneseq
      %v1776 = vshrl.u32 %v1775, 7
      %v1777 = vsub.s32 %v491, %v1776
      %v1778 = vrot.slane %v1726, %v1777
      %v1779 = vlaneseq
      %v1780 = vshrl.u32 %v1779, 7
      %v1781 = vsub.s32 %v496, %v1780
      %v1782 = vrot.slane %v1728, %v1781
      %v1783 = vsel %vm501, %v1782, %v1778
      %v1784 = vsel %vm539, %v1756, %v1747
      %v1785 = vsel %vm541, %v1765, %v1784
      %v1786 = vsel %vm543, %v1774, %v1785
      %v1787 = vsel %vm545, %v1783, %v1786
      %v1789 = vsel %vm548, %v1787, -inf
      %1790 = vmax.xlane.f32.xlu0 %v1789
      %v1791 = vpop.xlane.xlu0 %1790
      %v1793 = vlaneseq
      %v1794 = vshrl.u32 %v1793, 7
      %v1795 = vsub.s32 0, %v1794
      %v1796 = vrot.slane %v1791, %v1795
      %v1797 = vlaneseq
      %v1798 = vshrl.u32 %v1797, 7
      %v1799 = vsub.s32 1, %v1798
      %v1800 = vrot.slane %v1791, %v1799
      %v1801 = vlaneseq
      %v1802 = vshrl.u32 %v1801, 7
      %v1803 = vsub.s32 2, %v1802
      %v1804 = vrot.slane %v1791, %v1803
      %v1805 = vlaneseq
      %v1806 = vshrl.u32 %v1805, 7
      %v1807 = vsub.s32 3, %v1806
      %v1808 = vrot.slane %v1791, %v1807
      %v1809 = vlaneseq
      %v1810 = vshrl.u32 %v1809, 7
      %v1811 = vsub.s32 4, %v1810
      %v1812 = vrot.slane %v1791, %v1811
      %v1818 = vsub.f32 %v1710, %v1796
      %v1819 = vsub.f32 %v1712, %v1796
      %v1820 = vsub.f32 %v1714, %v1800
      %v1821 = vsub.f32 %v1716, %v1800
      %v1822 = vsub.f32 %v1718, %v1804
      %v1823 = vsub.f32 %v1720, %v1804
      %v1824 = vsub.f32 %v1722, %v1808
      %v1825 = vsub.f32 %v1724, %v1808
      %v1826 = vsub.f32 %v1726, %v1812
      %v1827 = vsub.f32 %v1728, %v1812
      %v1828 = vmul.f32 %v1818, 1.442695
      %v1829 = vpow.pop %v1828
      %v1830 = vmul.f32 %v1819, 1.442695
      %v1831 = vpow.pop %v1830
      %v1832 = vmul.f32 %v1820, 1.442695
      %v1833 = vpow.pop %v1832
      %v1834 = vmul.f32 %v1821, 1.442695
      %v1835 = vpow.pop %v1834
      %v1836 = vmul.f32 %v1822, 1.442695
      %v1837 = vpow.pop %v1836
      %v1838 = vmul.f32 %v1823, 1.442695
      %v1839 = vpow.pop %v1838
      %v1840 = vmul.f32 %v1824, 1.442695
      %v1841 = vpow.pop %v1840
      %v1842 = vmul.f32 %v1825, 1.442695
      %v1843 = vpow.pop %v1842
      %v1844 = vmul.f32 %v1826, 1.442695
      %v1845 = vpow.pop %v1844
      %v1846 = vmul.f32 %v1827, 1.442695
      %v1847 = vpow.pop %v1846
      %1858 = vset.pattern.permute.xlu0 0
      %1859 = vperm.xlu0 %1858, %v1829
      %v1860 = vpop.permute.xlu0 %1859
      %1861 = vset.pattern.permute.xlu0 0
      %1862 = vperm.xlu0 %1861, %v1831
      %v1863 = vpop.permute.xlu0 %1862
      %1864 = vset.pattern.permute.xlu0 0
      %1865 = vperm.xlu0 %1864, %v1833
      %v1866 = vpop.permute.xlu0 %1865
      %1867 = vset.pattern.permute.xlu0 0
      %1868 = vperm.xlu0 %1867, %v1835
      %v1869 = vpop.permute.xlu0 %1868
      %1870 = vset.pattern.permute.xlu0 0
      %1871 = vperm.xlu0 %1870, %v1837
      %v1872 = vpop.permute.xlu0 %1871
      %1873 = vset.pattern.permute.xlu0 0
      %1874 = vperm.xlu0 %1873, %v1839
      %v1875 = vpop.permute.xlu0 %1874
      %1876 = vset.pattern.permute.xlu0 0
      %1877 = vperm.xlu0 %1876, %v1841
      %v1878 = vpop.permute.xlu0 %1877
      %1879 = vset.pattern.permute.xlu0 0
      %1880 = vperm.xlu0 %1879, %v1843
      %v1881 = vpop.permute.xlu0 %1880
      %1882 = vset.pattern.permute.xlu0 0
      %1883 = vperm.xlu0 %1882, %v1845
      %v1884 = vpop.permute.xlu0 %1883
      %1885 = vset.pattern.permute.xlu0 0
      %1886 = vperm.xlu0 %1885, %v1847
      %v1887 = vpop.permute.xlu0 %1886
      %v1888 = vlaneseq
      %v1889 = vshrl.u32 %v1888, 7
      %v1890 = vsub.s32 %v491, %v1889
      %v1891 = vrot.slane %v1860, %v1890
      %v1892 = vlaneseq
      %v1893 = vshrl.u32 %v1892, 7
      %v1894 = vsub.s32 %v496, %v1893
      %v1895 = vrot.slane %v1863, %v1894
      %v1896 = vsel %vm501, %v1895, %v1891
      %v1897 = vlaneseq
      %v1898 = vshrl.u32 %v1897, 7
      %v1899 = vsub.s32 %v491, %v1898
      %v1900 = vrot.slane %v1866, %v1899
      %v1901 = vlaneseq
      %v1902 = vshrl.u32 %v1901, 7
      %v1903 = vsub.s32 %v496, %v1902
      %v1904 = vrot.slane %v1869, %v1903
      %v1905 = vsel %vm501, %v1904, %v1900
      %v1906 = vlaneseq
      %v1907 = vshrl.u32 %v1906, 7
      %v1908 = vsub.s32 %v491, %v1907
      %v1909 = vrot.slane %v1872, %v1908
      %v1910 = vlaneseq
      %v1911 = vshrl.u32 %v1910, 7
      %v1912 = vsub.s32 %v496, %v1911
      %v1913 = vrot.slane %v1875, %v1912
      %v1914 = vsel %vm501, %v1913, %v1909
      %v1915 = vlaneseq
      %v1916 = vshrl.u32 %v1915, 7
      %v1917 = vsub.s32 %v491, %v1916
      %v1918 = vrot.slane %v1878, %v1917
      %v1919 = vlaneseq
      %v1920 = vshrl.u32 %v1919, 7
      %v1921 = vsub.s32 %v496, %v1920
      %v1922 = vrot.slane %v1881, %v1921
      %v1923 = vsel %vm501, %v1922, %v1918
      %v1924 = vlaneseq
      %v1925 = vshrl.u32 %v1924, 7
      %v1926 = vsub.s32 %v491, %v1925
      %v1927 = vrot.slane %v1884, %v1926
      %v1928 = vlaneseq
      %v1929 = vshrl.u32 %v1928, 7
      %v1930 = vsub.s32 %v496, %v1929
      %v1931 = vrot.slane %v1887, %v1930
      %v1932 = vsel %vm501, %v1931, %v1927
      %v1933 = vsel %vm539, %v1905, %v1896
      %v1934 = vsel %vm541, %v1914, %v1933
      %v1935 = vsel %vm543, %v1923, %v1934
      %v1936 = vsel %vm545, %v1932, %v1935
      %v1938 = vsel %vm548, %v1936, 0.0
      %1939 = vadd.xlane.f32.xlu0 %v1938
      %v1940 = vpop.xlane.xlu0 %1939
      %v1941 = vrcp.pop %v1940
      %v1943 = vlaneseq
      %v1944 = vshrl.u32 %v1943, 7
      %v1945 = vsub.s32 0, %v1944
      %v1946 = vrot.slane %v1941, %v1945
      %v1947 = vlaneseq
      %v1948 = vshrl.u32 %v1947, 7
      %v1949 = vsub.s32 1, %v1948
      %v1950 = vrot.slane %v1941, %v1949
      %v1951 = vlaneseq
      %v1952 = vshrl.u32 %v1951, 7
      %v1953 = vsub.s32 2, %v1952
      %v1954 = vrot.slane %v1941, %v1953
      %v1955 = vlaneseq
      %v1956 = vshrl.u32 %v1955, 7
      %v1957 = vsub.s32 3, %v1956
      %v1958 = vrot.slane %v1941, %v1957
      %v1959 = vlaneseq
      %v1960 = vshrl.u32 %v1959, 7
      %v1961 = vsub.s32 4, %v1960
      %v1962 = vrot.slane %v1941, %v1961
      %v1968 = vmul.f32 %v1829, %v1946
      %v1969 = vmul.f32 %v1831, %v1946
      %v1970 = vmul.f32 %v1833, %v1950
      %v1971 = vmul.f32 %v1835, %v1950
      %v1972 = vmul.f32 %v1837, %v1954
      %v1973 = vmul.f32 %v1839, %v1954
      %v1974 = vmul.f32 %v1841, %v1958
      %v1975 = vmul.f32 %v1843, %v1958
      %v1976 = vmul.f32 %v1845, %v1962
      %v1977 = vmul.f32 %v1847, %v1962
      %1979 = vset.pattern.permute.xlu0 0
      %1980 = vperm.xlu0 %1979, %v1968
      %v1981 = vpop.permute.xlu0 %1980
      %1984 = vset.pattern.permute.xlu0 0
      %1985 = vperm.xlu0 %1984, %v1969
      %v1986 = vpop.permute.xlu0 %1985
      %1989 = vset.pattern.permute.xlu0 0
      %1990 = vperm.xlu0 %1989, %v1970
      %v1991 = vpop.permute.xlu0 %1990
      %1994 = vset.pattern.permute.xlu0 0
      %1995 = vperm.xlu0 %1994, %v1971
      %v1996 = vpop.permute.xlu0 %1995
      %1999 = vset.pattern.permute.xlu0 0
      %2000 = vperm.xlu0 %1999, %v1972
      %v2001 = vpop.permute.xlu0 %2000
      %2004 = vset.pattern.permute.xlu0 0
      %2005 = vperm.xlu0 %2004, %v1973
      %v2006 = vpop.permute.xlu0 %2005
      %2009 = vset.pattern.permute.xlu0 0
      %2010 = vperm.xlu0 %2009, %v1974
      %v2011 = vpop.permute.xlu0 %2010
      %2014 = vset.pattern.permute.xlu0 0
      %2015 = vperm.xlu0 %2014, %v1975
      %v2016 = vpop.permute.xlu0 %2015
      %2019 = vset.pattern.permute.xlu0 0
      %2020 = vperm.xlu0 %2019, %v1976
      %v2021 = vpop.permute.xlu0 %2020
      %2024 = vset.pattern.permute.xlu0 0
      %2025 = vperm.xlu0 %2024, %v1977
      %v2026 = vpop.permute.xlu0 %2025
      %v2028 = vmul.f32 %v1981, %v258
      %v2029 = vmul.f32 %v1986, %v259
      %v2030 = vmul.f32 %v1991, %v260
      %v2031 = vmul.f32 %v1996, %v261
      %v2032 = vmul.f32 %v2001, %v262
      %v2033 = vmul.f32 %v2006, %v263
      %v2034 = vmul.f32 %v2011, %v264
      %v2035 = vmul.f32 %v2016, %v265
      %v2036 = vmul.f32 %v2021, %v266
      %v2037 = vmul.f32 %v2026, %v267
      %v2038 = vsel %vm272, %v2028, 0.0
      %v2039 = vsel %vm272, %v2029, 0.0
      %v2040 = vadd.f32 %v2038, %v2039
      %v2041 = vrot.slane %v2040, 4
      %v2042 = vadd.f32 %v2040, %v2041
      %v2043 = vrot.slane %v2042, 2
      %v2044 = vadd.f32 %v2042, %v2043
      %v2045 = vrot.slane %v2044, 1
      %v2046 = vadd.f32 %v2044, %v2045
      %v2047 = vsel %vm272, %v2030, 0.0
      %v2048 = vsel %vm272, %v2031, 0.0
      %v2049 = vadd.f32 %v2047, %v2048
      %v2050 = vrot.slane %v2049, 4
      %v2051 = vadd.f32 %v2049, %v2050
      %v2052 = vrot.slane %v2051, 2
      %v2053 = vadd.f32 %v2051, %v2052
      %v2054 = vrot.slane %v2053, 1
      %v2055 = vadd.f32 %v2053, %v2054
      %v2056 = vsel %vm272, %v2032, 0.0
      %v2057 = vsel %vm272, %v2033, 0.0
      %v2058 = vadd.f32 %v2056, %v2057
      %v2059 = vrot.slane %v2058, 4
      %v2060 = vadd.f32 %v2058, %v2059
      %v2061 = vrot.slane %v2060, 2
      %v2062 = vadd.f32 %v2060, %v2061
      %v2063 = vrot.slane %v2062, 1
      %v2064 = vadd.f32 %v2062, %v2063
      %v2065 = vsel %vm272, %v2034, 0.0
      %v2066 = vsel %vm272, %v2035, 0.0
      %v2067 = vadd.f32 %v2065, %v2066
      %v2068 = vrot.slane %v2067, 4
      %v2069 = vadd.f32 %v2067, %v2068
      %v2070 = vrot.slane %v2069, 2
      %v2071 = vadd.f32 %v2069, %v2070
      %v2072 = vrot.slane %v2071, 1
      %v2073 = vadd.f32 %v2071, %v2072
      %v2074 = vsel %vm272, %v2036, 0.0
      %v2075 = vsel %vm272, %v2037, 0.0
      %v2076 = vadd.f32 %v2074, %v2075
      %v2077 = vrot.slane %v2076, 4
      %v2078 = vadd.f32 %v2076, %v2077
      %v2079 = vrot.slane %v2078, 2
      %v2080 = vadd.f32 %v2078, %v2079
      %v2081 = vrot.slane %v2080, 1
      %v2082 = vadd.f32 %v2080, %v2081
      %2083 = vst.msk [vmem:[#allocation2 + $0x3] sm:$0x1] %vm843, %v2046
      %2084 = vst.msk [vmem:[#allocation2 + $0xb] sm:$0x1] %vm843, %v2055
      %2085 = vst.msk [vmem:[#allocation2 + $0x13] sm:$0x1] %vm843, %v2064
      %2086 = vst.msk [vmem:[#allocation2 + $0x1b] sm:$0x1] %vm843, %v2073
      %2087 = vst.msk [vmem:[#allocation2 + $0x23] sm:$0x1] %vm843, %v2082
      %v2088 = vlaneseq
      %v2089 = vshrl.u32 %v2088, 7
      %v2090 = vsub.s32 4, %v2089
      %v2091 = vrot.slane %v418, %v2090
      %v2092 = vadd.f32 %v370, %v2091
      %v2093 = vadd.f32 %v375, %v2091
      %v2094 = vadd.f32 %v380, %v2091
      %v2095 = vadd.f32 %v385, %v2091
      %v2096 = vadd.f32 %v390, %v2091
      %v2097 = vadd.f32 %v395, %v2091
      %v2098 = vadd.f32 %v400, %v2091
      %v2099 = vadd.f32 %v405, %v2091
      %v2100 = vadd.f32 %v410, %v2091
      %v2101 = vadd.f32 %v415, %v2091
      %v2102 = vtanh.pop %v2092
      %v2103 = vtanh.pop %v2093
      %v2104 = vtanh.pop %v2094
      %v2105 = vtanh.pop %v2095
      %v2106 = vtanh.pop %v2096
      %v2107 = vtanh.pop %v2097
      %v2108 = vtanh.pop %v2098
      %v2109 = vtanh.pop %v2099
      %v2110 = vtanh.pop %v2100
      %v2111 = vtanh.pop %v2101
      %v2112 = vmul.f32 %v2102, %v448
      %v2113 = vmul.f32 %v2103, %v448
      %v2114 = vmul.f32 %v2104, %v448
      %v2115 = vmul.f32 %v2105, %v448
      %v2116 = vmul.f32 %v2106, %v448
      %v2117 = vmul.f32 %v2107, %v448
      %v2118 = vmul.f32 %v2108, %v448
      %v2119 = vmul.f32 %v2109, %v448
      %v2120 = vmul.f32 %v2110, %v448
      %v2121 = vmul.f32 %v2111, %v448
      %2122 = vadd.xlane.f32.xlu0 %v2112
      %v2123 = vpop.xlane.xlu0 %2122
      %2124 = vadd.xlane.f32.xlu0 %v2113
      %v2125 = vpop.xlane.xlu0 %2124
      %2126 = vadd.xlane.f32.xlu0 %v2114
      %v2127 = vpop.xlane.xlu0 %2126
      %2128 = vadd.xlane.f32.xlu0 %v2115
      %v2129 = vpop.xlane.xlu0 %2128
      %2130 = vadd.xlane.f32.xlu0 %v2116
      %v2131 = vpop.xlane.xlu0 %2130
      %2132 = vadd.xlane.f32.xlu0 %v2117
      %v2133 = vpop.xlane.xlu0 %2132
      %2134 = vadd.xlane.f32.xlu0 %v2118
      %v2135 = vpop.xlane.xlu0 %2134
      %2136 = vadd.xlane.f32.xlu0 %v2119
      %v2137 = vpop.xlane.xlu0 %2136
      %2138 = vadd.xlane.f32.xlu0 %v2120
      %v2139 = vpop.xlane.xlu0 %2138
      %2140 = vadd.xlane.f32.xlu0 %v2121
      %v2141 = vpop.xlane.xlu0 %2140
      %v2152 = vlaneseq
      %v2153 = vshrl.u32 %v2152, 7
      %v2154 = vsub.s32 %v491, %v2153
      %v2155 = vrot.slane %v2123, %v2154
      %v2156 = vlaneseq
      %v2157 = vshrl.u32 %v2156, 7
      %v2158 = vsub.s32 %v496, %v2157
      %v2159 = vrot.slane %v2125, %v2158
      %v2160 = vsel %vm501, %v2159, %v2155
      %v2161 = vlaneseq
      %v2162 = vshrl.u32 %v2161, 7
      %v2163 = vsub.s32 %v491, %v2162
      %v2164 = vrot.slane %v2127, %v2163
      %v2165 = vlaneseq
      %v2166 = vshrl.u32 %v2165, 7
      %v2167 = vsub.s32 %v496, %v2166
      %v2168 = vrot.slane %v2129, %v2167
      %v2169 = vsel %vm501, %v2168, %v2164
      %v2170 = vlaneseq
      %v2171 = vshrl.u32 %v2170, 7
      %v2172 = vsub.s32 %v491, %v2171
      %v2173 = vrot.slane %v2131, %v2172
      %v2174 = vlaneseq
      %v2175 = vshrl.u32 %v2174, 7
      %v2176 = vsub.s32 %v496, %v2175
      %v2177 = vrot.slane %v2133, %v2176
      %v2178 = vsel %vm501, %v2177, %v2173
      %v2179 = vlaneseq
      %v2180 = vshrl.u32 %v2179, 7
      %v2181 = vsub.s32 %v491, %v2180
      %v2182 = vrot.slane %v2135, %v2181
      %v2183 = vlaneseq
      %v2184 = vshrl.u32 %v2183, 7
      %v2185 = vsub.s32 %v496, %v2184
      %v2186 = vrot.slane %v2137, %v2185
      %v2187 = vsel %vm501, %v2186, %v2182
      %v2188 = vlaneseq
      %v2189 = vshrl.u32 %v2188, 7
      %v2190 = vsub.s32 %v491, %v2189
      %v2191 = vrot.slane %v2139, %v2190
      %v2192 = vlaneseq
      %v2193 = vshrl.u32 %v2192, 7
      %v2194 = vsub.s32 %v496, %v2193
      %v2195 = vrot.slane %v2141, %v2194
      %v2196 = vsel %vm501, %v2195, %v2191
      %v2197 = vsel %vm539, %v2169, %v2160
      %v2198 = vsel %vm541, %v2178, %v2197
      %v2199 = vsel %vm543, %v2187, %v2198
      %v2200 = vsel %vm545, %v2196, %v2199
      %v2202 = vsel %vm548, %v2200, -inf
      %2203 = vmax.xlane.f32.xlu0 %v2202
      %v2204 = vpop.xlane.xlu0 %2203
      %v2206 = vlaneseq
      %v2207 = vshrl.u32 %v2206, 7
      %v2208 = vsub.s32 0, %v2207
      %v2209 = vrot.slane %v2204, %v2208
      %v2210 = vlaneseq
      %v2211 = vshrl.u32 %v2210, 7
      %v2212 = vsub.s32 1, %v2211
      %v2213 = vrot.slane %v2204, %v2212
      %v2214 = vlaneseq
      %v2215 = vshrl.u32 %v2214, 7
      %v2216 = vsub.s32 2, %v2215
      %v2217 = vrot.slane %v2204, %v2216
      %v2218 = vlaneseq
      %v2219 = vshrl.u32 %v2218, 7
      %v2220 = vsub.s32 3, %v2219
      %v2221 = vrot.slane %v2204, %v2220
      %v2222 = vlaneseq
      %v2223 = vshrl.u32 %v2222, 7
      %v2224 = vsub.s32 4, %v2223
      %v2225 = vrot.slane %v2204, %v2224
      %v2231 = vsub.f32 %v2123, %v2209
      %v2232 = vsub.f32 %v2125, %v2209
      %v2233 = vsub.f32 %v2127, %v2213
      %v2234 = vsub.f32 %v2129, %v2213
      %v2235 = vsub.f32 %v2131, %v2217
      %v2236 = vsub.f32 %v2133, %v2217
      %v2237 = vsub.f32 %v2135, %v2221
      %v2238 = vsub.f32 %v2137, %v2221
      %v2239 = vsub.f32 %v2139, %v2225
      %v2240 = vsub.f32 %v2141, %v2225
      %v2241 = vmul.f32 %v2231, 1.442695
      %v2242 = vpow.pop %v2241
      %v2243 = vmul.f32 %v2232, 1.442695
      %v2244 = vpow.pop %v2243
      %v2245 = vmul.f32 %v2233, 1.442695
      %v2246 = vpow.pop %v2245
      %v2247 = vmul.f32 %v2234, 1.442695
      %v2248 = vpow.pop %v2247
      %v2249 = vmul.f32 %v2235, 1.442695
      %v2250 = vpow.pop %v2249
      %v2251 = vmul.f32 %v2236, 1.442695
      %v2252 = vpow.pop %v2251
      %v2253 = vmul.f32 %v2237, 1.442695
      %v2254 = vpow.pop %v2253
      %v2255 = vmul.f32 %v2238, 1.442695
      %v2256 = vpow.pop %v2255
      %v2257 = vmul.f32 %v2239, 1.442695
      %v2258 = vpow.pop %v2257
      %v2259 = vmul.f32 %v2240, 1.442695
      %v2260 = vpow.pop %v2259
      %2271 = vset.pattern.permute.xlu0 0
      %2272 = vperm.xlu0 %2271, %v2242
      %v2273 = vpop.permute.xlu0 %2272
      %2274 = vset.pattern.permute.xlu0 0
      %2275 = vperm.xlu0 %2274, %v2244
      %v2276 = vpop.permute.xlu0 %2275
      %2277 = vset.pattern.permute.xlu0 0
      %2278 = vperm.xlu0 %2277, %v2246
      %v2279 = vpop.permute.xlu0 %2278
      %2280 = vset.pattern.permute.xlu0 0
      %2281 = vperm.xlu0 %2280, %v2248
      %v2282 = vpop.permute.xlu0 %2281
      %2283 = vset.pattern.permute.xlu0 0
      %2284 = vperm.xlu0 %2283, %v2250
      %v2285 = vpop.permute.xlu0 %2284
      %2286 = vset.pattern.permute.xlu0 0
      %2287 = vperm.xlu0 %2286, %v2252
      %v2288 = vpop.permute.xlu0 %2287
      %2289 = vset.pattern.permute.xlu0 0
      %2290 = vperm.xlu0 %2289, %v2254
      %v2291 = vpop.permute.xlu0 %2290
      %2292 = vset.pattern.permute.xlu0 0
      %2293 = vperm.xlu0 %2292, %v2256
      %v2294 = vpop.permute.xlu0 %2293
      %2295 = vset.pattern.permute.xlu0 0
      %2296 = vperm.xlu0 %2295, %v2258
      %v2297 = vpop.permute.xlu0 %2296
      %2298 = vset.pattern.permute.xlu0 0
      %2299 = vperm.xlu0 %2298, %v2260
      %v2300 = vpop.permute.xlu0 %2299
      %v2301 = vlaneseq
      %v2302 = vshrl.u32 %v2301, 7
      %v2303 = vsub.s32 %v491, %v2302
      %v2304 = vrot.slane %v2273, %v2303
      %v2305 = vlaneseq
      %v2306 = vshrl.u32 %v2305, 7
      %v2307 = vsub.s32 %v496, %v2306
      %v2308 = vrot.slane %v2276, %v2307
      %v2309 = vsel %vm501, %v2308, %v2304
      %v2310 = vlaneseq
      %v2311 = vshrl.u32 %v2310, 7
      %v2312 = vsub.s32 %v491, %v2311
      %v2313 = vrot.slane %v2279, %v2312
      %v2314 = vlaneseq
      %v2315 = vshrl.u32 %v2314, 7
      %v2316 = vsub.s32 %v496, %v2315
      %v2317 = vrot.slane %v2282, %v2316
      %v2318 = vsel %vm501, %v2317, %v2313
      %v2319 = vlaneseq
      %v2320 = vshrl.u32 %v2319, 7
      %v2321 = vsub.s32 %v491, %v2320
      %v2322 = vrot.slane %v2285, %v2321
      %v2323 = vlaneseq
      %v2324 = vshrl.u32 %v2323, 7
      %v2325 = vsub.s32 %v496, %v2324
      %v2326 = vrot.slane %v2288, %v2325
      %v2327 = vsel %vm501, %v2326, %v2322
      %v2328 = vlaneseq
      %v2329 = vshrl.u32 %v2328, 7
      %v2330 = vsub.s32 %v491, %v2329
      %v2331 = vrot.slane %v2291, %v2330
      %v2332 = vlaneseq
      %v2333 = vshrl.u32 %v2332, 7
      %v2334 = vsub.s32 %v496, %v2333
      %v2335 = vrot.slane %v2294, %v2334
      %v2336 = vsel %vm501, %v2335, %v2331
      %v2337 = vlaneseq
      %v2338 = vshrl.u32 %v2337, 7
      %v2339 = vsub.s32 %v491, %v2338
      %v2340 = vrot.slane %v2297, %v2339
      %v2341 = vlaneseq
      %v2342 = vshrl.u32 %v2341, 7
      %v2343 = vsub.s32 %v496, %v2342
      %v2344 = vrot.slane %v2300, %v2343
      %v2345 = vsel %vm501, %v2344, %v2340
      %v2346 = vsel %vm539, %v2318, %v2309
      %v2347 = vsel %vm541, %v2327, %v2346
      %v2348 = vsel %vm543, %v2336, %v2347
      %v2349 = vsel %vm545, %v2345, %v2348
      %v2351 = vsel %vm548, %v2349, 0.0
      %2352 = vadd.xlane.f32.xlu0 %v2351
      %v2353 = vpop.xlane.xlu0 %2352
      %v2354 = vrcp.pop %v2353
      %v2356 = vlaneseq
      %v2357 = vshrl.u32 %v2356, 7
      %v2358 = vsub.s32 0, %v2357
      %v2359 = vrot.slane %v2354, %v2358
      %v2360 = vlaneseq
      %v2361 = vshrl.u32 %v2360, 7
      %v2362 = vsub.s32 1, %v2361
      %v2363 = vrot.slane %v2354, %v2362
      %v2364 = vlaneseq
      %v2365 = vshrl.u32 %v2364, 7
      %v2366 = vsub.s32 2, %v2365
      %v2367 = vrot.slane %v2354, %v2366
      %v2368 = vlaneseq
      %v2369 = vshrl.u32 %v2368, 7
      %v2370 = vsub.s32 3, %v2369
      %v2371 = vrot.slane %v2354, %v2370
      %v2372 = vlaneseq
      %v2373 = vshrl.u32 %v2372, 7
      %v2374 = vsub.s32 4, %v2373
      %v2375 = vrot.slane %v2354, %v2374
      %v2381 = vmul.f32 %v2242, %v2359
      %v2382 = vmul.f32 %v2244, %v2359
      %v2383 = vmul.f32 %v2246, %v2363
      %v2384 = vmul.f32 %v2248, %v2363
      %v2385 = vmul.f32 %v2250, %v2367
      %v2386 = vmul.f32 %v2252, %v2367
      %v2387 = vmul.f32 %v2254, %v2371
      %v2388 = vmul.f32 %v2256, %v2371
      %v2389 = vmul.f32 %v2258, %v2375
      %v2390 = vmul.f32 %v2260, %v2375
      %2392 = vset.pattern.permute.xlu0 0
      %2393 = vperm.xlu0 %2392, %v2381
      %v2394 = vpop.permute.xlu0 %2393
      %2397 = vset.pattern.permute.xlu0 0
      %2398 = vperm.xlu0 %2397, %v2382
      %v2399 = vpop.permute.xlu0 %2398
      %2402 = vset.pattern.permute.xlu0 0
      %2403 = vperm.xlu0 %2402, %v2383
      %v2404 = vpop.permute.xlu0 %2403
      %2407 = vset.pattern.permute.xlu0 0
      %2408 = vperm.xlu0 %2407, %v2384
      %v2409 = vpop.permute.xlu0 %2408
      %2412 = vset.pattern.permute.xlu0 0
      %2413 = vperm.xlu0 %2412, %v2385
      %v2414 = vpop.permute.xlu0 %2413
      %2417 = vset.pattern.permute.xlu0 0
      %2418 = vperm.xlu0 %2417, %v2386
      %v2419 = vpop.permute.xlu0 %2418
      %2422 = vset.pattern.permute.xlu0 0
      %2423 = vperm.xlu0 %2422, %v2387
      %v2424 = vpop.permute.xlu0 %2423
      %2427 = vset.pattern.permute.xlu0 0
      %2428 = vperm.xlu0 %2427, %v2388
      %v2429 = vpop.permute.xlu0 %2428
      %2432 = vset.pattern.permute.xlu0 0
      %2433 = vperm.xlu0 %2432, %v2389
      %v2434 = vpop.permute.xlu0 %2433
      %2437 = vset.pattern.permute.xlu0 0
      %2438 = vperm.xlu0 %2437, %v2390
      %v2439 = vpop.permute.xlu0 %2438
      %v2441 = vmul.f32 %v2394, %v258
      %v2442 = vmul.f32 %v2399, %v259
      %v2443 = vmul.f32 %v2404, %v260
      %v2444 = vmul.f32 %v2409, %v261
      %v2445 = vmul.f32 %v2414, %v262
      %v2446 = vmul.f32 %v2419, %v263
      %v2447 = vmul.f32 %v2424, %v264
      %v2448 = vmul.f32 %v2429, %v265
      %v2449 = vmul.f32 %v2434, %v266
      %v2450 = vmul.f32 %v2439, %v267
      %v2451 = vsel %vm272, %v2441, 0.0
      %v2452 = vsel %vm272, %v2442, 0.0
      %v2453 = vadd.f32 %v2451, %v2452
      %v2454 = vrot.slane %v2453, 4
      %v2455 = vadd.f32 %v2453, %v2454
      %v2456 = vrot.slane %v2455, 2
      %v2457 = vadd.f32 %v2455, %v2456
      %v2458 = vrot.slane %v2457, 1
      %v2459 = vadd.f32 %v2457, %v2458
      %v2460 = vsel %vm272, %v2443, 0.0
      %v2461 = vsel %vm272, %v2444, 0.0
      %v2462 = vadd.f32 %v2460, %v2461
      %v2463 = vrot.slane %v2462, 4
      %v2464 = vadd.f32 %v2462, %v2463
      %v2465 = vrot.slane %v2464, 2
      %v2466 = vadd.f32 %v2464, %v2465
      %v2467 = vrot.slane %v2466, 1
      %v2468 = vadd.f32 %v2466, %v2467
      %v2469 = vsel %vm272, %v2445, 0.0
      %v2470 = vsel %vm272, %v2446, 0.0
      %v2471 = vadd.f32 %v2469, %v2470
      %v2472 = vrot.slane %v2471, 4
      %v2473 = vadd.f32 %v2471, %v2472
      %v2474 = vrot.slane %v2473, 2
      %v2475 = vadd.f32 %v2473, %v2474
      %v2476 = vrot.slane %v2475, 1
      %v2477 = vadd.f32 %v2475, %v2476
      %v2478 = vsel %vm272, %v2447, 0.0
      %v2479 = vsel %vm272, %v2448, 0.0
      %v2480 = vadd.f32 %v2478, %v2479
      %v2481 = vrot.slane %v2480, 4
      %v2482 = vadd.f32 %v2480, %v2481
      %v2483 = vrot.slane %v2482, 2
      %v2484 = vadd.f32 %v2482, %v2483
      %v2485 = vrot.slane %v2484, 1
      %v2486 = vadd.f32 %v2484, %v2485
      %v2487 = vsel %vm272, %v2449, 0.0
      %v2488 = vsel %vm272, %v2450, 0.0
      %v2489 = vadd.f32 %v2487, %v2488
      %v2490 = vrot.slane %v2489, 4
      %v2491 = vadd.f32 %v2489, %v2490
      %v2492 = vrot.slane %v2491, 2
      %v2493 = vadd.f32 %v2491, %v2492
      %v2494 = vrot.slane %v2493, 1
      %v2495 = vadd.f32 %v2493, %v2494
      %2496 = vst.msk [vmem:[#allocation2 + $0x4] sm:$0x1] %vm843, %v2459
      %2497 = vst.msk [vmem:[#allocation2 + $0xc] sm:$0x1] %vm843, %v2468
      %2498 = vst.msk [vmem:[#allocation2 + $0x14] sm:$0x1] %vm843, %v2477
      %2499 = vst.msk [vmem:[#allocation2 + $0x1c] sm:$0x1] %vm843, %v2486
      %2500 = vst.msk [vmem:[#allocation2 + $0x24] sm:$0x1] %vm843, %v2495
      %v2501 = vlaneseq
      %v2502 = vshrl.u32 %v2501, 7
      %v2503 = vsub.s32 5, %v2502
      %v2504 = vrot.slane %v418, %v2503
      %v2505 = vadd.f32 %v370, %v2504
      %v2506 = vadd.f32 %v375, %v2504
      %v2507 = vadd.f32 %v380, %v2504
      %v2508 = vadd.f32 %v385, %v2504
      %v2509 = vadd.f32 %v390, %v2504
      %v2510 = vadd.f32 %v395, %v2504
      %v2511 = vadd.f32 %v400, %v2504
      %v2512 = vadd.f32 %v405, %v2504
      %v2513 = vadd.f32 %v410, %v2504
      %v2514 = vadd.f32 %v415, %v2504
      %v2515 = vtanh.pop %v2505
      %v2516 = vtanh.pop %v2506
      %v2517 = vtanh.pop %v2507
      %v2518 = vtanh.pop %v2508
      %v2519 = vtanh.pop %v2509
      %v2520 = vtanh.pop %v2510
      %v2521 = vtanh.pop %v2511
      %v2522 = vtanh.pop %v2512
      %v2523 = vtanh.pop %v2513
      %v2524 = vtanh.pop %v2514
      %v2525 = vmul.f32 %v2515, %v448
      %v2526 = vmul.f32 %v2516, %v448
      %v2527 = vmul.f32 %v2517, %v448
      %v2528 = vmul.f32 %v2518, %v448
      %v2529 = vmul.f32 %v2519, %v448
      %v2530 = vmul.f32 %v2520, %v448
      %v2531 = vmul.f32 %v2521, %v448
      %v2532 = vmul.f32 %v2522, %v448
      %v2533 = vmul.f32 %v2523, %v448
      %v2534 = vmul.f32 %v2524, %v448
      %2535 = vadd.xlane.f32.xlu0 %v2525
      %v2536 = vpop.xlane.xlu0 %2535
      %2537 = vadd.xlane.f32.xlu0 %v2526
      %v2538 = vpop.xlane.xlu0 %2537
      %2539 = vadd.xlane.f32.xlu0 %v2527
      %v2540 = vpop.xlane.xlu0 %2539
      %2541 = vadd.xlane.f32.xlu0 %v2528
      %v2542 = vpop.xlane.xlu0 %2541
      %2543 = vadd.xlane.f32.xlu0 %v2529
      %v2544 = vpop.xlane.xlu0 %2543
      %2545 = vadd.xlane.f32.xlu0 %v2530
      %v2546 = vpop.xlane.xlu0 %2545
      %2547 = vadd.xlane.f32.xlu0 %v2531
      %v2548 = vpop.xlane.xlu0 %2547
      %2549 = vadd.xlane.f32.xlu0 %v2532
      %v2550 = vpop.xlane.xlu0 %2549
      %2551 = vadd.xlane.f32.xlu0 %v2533
      %v2552 = vpop.xlane.xlu0 %2551
      %2553 = vadd.xlane.f32.xlu0 %v2534
      %v2554 = vpop.xlane.xlu0 %2553
      %v2565 = vlaneseq
      %v2566 = vshrl.u32 %v2565, 7
      %v2567 = vsub.s32 %v491, %v2566
      %v2568 = vrot.slane %v2536, %v2567
      %v2569 = vlaneseq
      %v2570 = vshrl.u32 %v2569, 7
      %v2571 = vsub.s32 %v496, %v2570
      %v2572 = vrot.slane %v2538, %v2571
      %v2573 = vsel %vm501, %v2572, %v2568
      %v2574 = vlaneseq
      %v2575 = vshrl.u32 %v2574, 7
      %v2576 = vsub.s32 %v491, %v2575
      %v2577 = vrot.slane %v2540, %v2576
      %v2578 = vlaneseq
      %v2579 = vshrl.u32 %v2578, 7
      %v2580 = vsub.s32 %v496, %v2579
      %v2581 = vrot.slane %v2542, %v2580
      %v2582 = vsel %vm501, %v2581, %v2577
      %v2583 = vlaneseq
      %v2584 = vshrl.u32 %v2583, 7
      %v2585 = vsub.s32 %v491, %v2584
      %v2586 = vrot.slane %v2544, %v2585
      %v2587 = vlaneseq
      %v2588 = vshrl.u32 %v2587, 7
      %v2589 = vsub.s32 %v496, %v2588
      %v2590 = vrot.slane %v2546, %v2589
      %v2591 = vsel %vm501, %v2590, %v2586
      %v2592 = vlaneseq
      %v2593 = vshrl.u32 %v2592, 7
      %v2594 = vsub.s32 %v491, %v2593
      %v2595 = vrot.slane %v2548, %v2594
      %v2596 = vlaneseq
      %v2597 = vshrl.u32 %v2596, 7
      %v2598 = vsub.s32 %v496, %v2597
      %v2599 = vrot.slane %v2550, %v2598
      %v2600 = vsel %vm501, %v2599, %v2595
      %v2601 = vlaneseq
      %v2602 = vshrl.u32 %v2601, 7
      %v2603 = vsub.s32 %v491, %v2602
      %v2604 = vrot.slane %v2552, %v2603
      %v2605 = vlaneseq
      %v2606 = vshrl.u32 %v2605, 7
      %v2607 = vsub.s32 %v496, %v2606
      %v2608 = vrot.slane %v2554, %v2607
      %v2609 = vsel %vm501, %v2608, %v2604
      %v2610 = vsel %vm539, %v2582, %v2573
      %v2611 = vsel %vm541, %v2591, %v2610
      %v2612 = vsel %vm543, %v2600, %v2611
      %v2613 = vsel %vm545, %v2609, %v2612
      %v2615 = vsel %vm548, %v2613, -inf
      %2616 = vmax.xlane.f32.xlu0 %v2615
      %v2617 = vpop.xlane.xlu0 %2616
      %v2619 = vlaneseq
      %v2620 = vshrl.u32 %v2619, 7
      %v2621 = vsub.s32 0, %v2620
      %v2622 = vrot.slane %v2617, %v2621
      %v2623 = vlaneseq
      %v2624 = vshrl.u32 %v2623, 7
      %v2625 = vsub.s32 1, %v2624
      %v2626 = vrot.slane %v2617, %v2625
      %v2627 = vlaneseq
      %v2628 = vshrl.u32 %v2627, 7
      %v2629 = vsub.s32 2, %v2628
      %v2630 = vrot.slane %v2617, %v2629
      %v2631 = vlaneseq
      %v2632 = vshrl.u32 %v2631, 7
      %v2633 = vsub.s32 3, %v2632
      %v2634 = vrot.slane %v2617, %v2633
      %v2635 = vlaneseq
      %v2636 = vshrl.u32 %v2635, 7
      %v2637 = vsub.s32 4, %v2636
      %v2638 = vrot.slane %v2617, %v2637
      %v2644 = vsub.f32 %v2536, %v2622
      %v2645 = vsub.f32 %v2538, %v2622
      %v2646 = vsub.f32 %v2540, %v2626
      %v2647 = vsub.f32 %v2542, %v2626
      %v2648 = vsub.f32 %v2544, %v2630
      %v2649 = vsub.f32 %v2546, %v2630
      %v2650 = vsub.f32 %v2548, %v2634
      %v2651 = vsub.f32 %v2550, %v2634
      %v2652 = vsub.f32 %v2552, %v2638
      %v2653 = vsub.f32 %v2554, %v2638
      %v2654 = vmul.f32 %v2644, 1.442695
      %v2655 = vpow.pop %v2654
      %v2656 = vmul.f32 %v2645, 1.442695
      %v2657 = vpow.pop %v2656
      %v2658 = vmul.f32 %v2646, 1.442695
      %v2659 = vpow.pop %v2658
      %v2660 = vmul.f32 %v2647, 1.442695
      %v2661 = vpow.pop %v2660
      %v2662 = vmul.f32 %v2648, 1.442695
      %v2663 = vpow.pop %v2662
      %v2664 = vmul.f32 %v2649, 1.442695
      %v2665 = vpow.pop %v2664
      %v2666 = vmul.f32 %v2650, 1.442695
      %v2667 = vpow.pop %v2666
      %v2668 = vmul.f32 %v2651, 1.442695
      %v2669 = vpow.pop %v2668
      %v2670 = vmul.f32 %v2652, 1.442695
      %v2671 = vpow.pop %v2670
      %v2672 = vmul.f32 %v2653, 1.442695
      %v2673 = vpow.pop %v2672
      %2684 = vset.pattern.permute.xlu0 0
      %2685 = vperm.xlu0 %2684, %v2655
      %v2686 = vpop.permute.xlu0 %2685
      %2687 = vset.pattern.permute.xlu0 0
      %2688 = vperm.xlu0 %2687, %v2657
      %v2689 = vpop.permute.xlu0 %2688
      %2690 = vset.pattern.permute.xlu0 0
      %2691 = vperm.xlu0 %2690, %v2659
      %v2692 = vpop.permute.xlu0 %2691
      %2693 = vset.pattern.permute.xlu0 0
      %2694 = vperm.xlu0 %2693, %v2661
      %v2695 = vpop.permute.xlu0 %2694
      %2696 = vset.pattern.permute.xlu0 0
      %2697 = vperm.xlu0 %2696, %v2663
      %v2698 = vpop.permute.xlu0 %2697
      %2699 = vset.pattern.permute.xlu0 0
      %2700 = vperm.xlu0 %2699, %v2665
      %v2701 = vpop.permute.xlu0 %2700
      %2702 = vset.pattern.permute.xlu0 0
      %2703 = vperm.xlu0 %2702, %v2667
      %v2704 = vpop.permute.xlu0 %2703
      %2705 = vset.pattern.permute.xlu0 0
      %2706 = vperm.xlu0 %2705, %v2669
      %v2707 = vpop.permute.xlu0 %2706
      %2708 = vset.pattern.permute.xlu0 0
      %2709 = vperm.xlu0 %2708, %v2671
      %v2710 = vpop.permute.xlu0 %2709
      %2711 = vset.pattern.permute.xlu0 0
      %2712 = vperm.xlu0 %2711, %v2673
      %v2713 = vpop.permute.xlu0 %2712
      %v2714 = vlaneseq
      %v2715 = vshrl.u32 %v2714, 7
      %v2716 = vsub.s32 %v491, %v2715
      %v2717 = vrot.slane %v2686, %v2716
      %v2718 = vlaneseq
      %v2719 = vshrl.u32 %v2718, 7
      %v2720 = vsub.s32 %v496, %v2719
      %v2721 = vrot.slane %v2689, %v2720
      %v2722 = vsel %vm501, %v2721, %v2717
      %v2723 = vlaneseq
      %v2724 = vshrl.u32 %v2723, 7
      %v2725 = vsub.s32 %v491, %v2724
      %v2726 = vrot.slane %v2692, %v2725
      %v2727 = vlaneseq
      %v2728 = vshrl.u32 %v2727, 7
      %v2729 = vsub.s32 %v496, %v2728
      %v2730 = vrot.slane %v2695, %v2729
      %v2731 = vsel %vm501, %v2730, %v2726
      %v2732 = vlaneseq
      %v2733 = vshrl.u32 %v2732, 7
      %v2734 = vsub.s32 %v491, %v2733
      %v2735 = vrot.slane %v2698, %v2734
      %v2736 = vlaneseq
      %v2737 = vshrl.u32 %v2736, 7
      %v2738 = vsub.s32 %v496, %v2737
      %v2739 = vrot.slane %v2701, %v2738
      %v2740 = vsel %vm501, %v2739, %v2735
      %v2741 = vlaneseq
      %v2742 = vshrl.u32 %v2741, 7
      %v2743 = vsub.s32 %v491, %v2742
      %v2744 = vrot.slane %v2704, %v2743
      %v2745 = vlaneseq
      %v2746 = vshrl.u32 %v2745, 7
      %v2747 = vsub.s32 %v496, %v2746
      %v2748 = vrot.slane %v2707, %v2747
      %v2749 = vsel %vm501, %v2748, %v2744
      %v2750 = vlaneseq
      %v2751 = vshrl.u32 %v2750, 7
      %v2752 = vsub.s32 %v491, %v2751
      %v2753 = vrot.slane %v2710, %v2752
      %v2754 = vlaneseq
      %v2755 = vshrl.u32 %v2754, 7
      %v2756 = vsub.s32 %v496, %v2755
      %v2757 = vrot.slane %v2713, %v2756
      %v2758 = vsel %vm501, %v2757, %v2753
      %v2759 = vsel %vm539, %v2731, %v2722
      %v2760 = vsel %vm541, %v2740, %v2759
      %v2761 = vsel %vm543, %v2749, %v2760
      %v2762 = vsel %vm545, %v2758, %v2761
      %v2764 = vsel %vm548, %v2762, 0.0
      %2765 = vadd.xlane.f32.xlu0 %v2764
      %v2766 = vpop.xlane.xlu0 %2765
      %v2767 = vrcp.pop %v2766
      %v2769 = vlaneseq
      %v2770 = vshrl.u32 %v2769, 7
      %v2771 = vsub.s32 0, %v2770
      %v2772 = vrot.slane %v2767, %v2771
      %v2773 = vlaneseq
      %v2774 = vshrl.u32 %v2773, 7
      %v2775 = vsub.s32 1, %v2774
      %v2776 = vrot.slane %v2767, %v2775
      %v2777 = vlaneseq
      %v2778 = vshrl.u32 %v2777, 7
      %v2779 = vsub.s32 2, %v2778
      %v2780 = vrot.slane %v2767, %v2779
      %v2781 = vlaneseq
      %v2782 = vshrl.u32 %v2781, 7
      %v2783 = vsub.s32 3, %v2782
      %v2784 = vrot.slane %v2767, %v2783
      %v2785 = vlaneseq
      %v2786 = vshrl.u32 %v2785, 7
      %v2787 = vsub.s32 4, %v2786
      %v2788 = vrot.slane %v2767, %v2787
      %v2794 = vmul.f32 %v2655, %v2772
      %v2795 = vmul.f32 %v2657, %v2772
      %v2796 = vmul.f32 %v2659, %v2776
      %v2797 = vmul.f32 %v2661, %v2776
      %v2798 = vmul.f32 %v2663, %v2780
      %v2799 = vmul.f32 %v2665, %v2780
      %v2800 = vmul.f32 %v2667, %v2784
      %v2801 = vmul.f32 %v2669, %v2784
      %v2802 = vmul.f32 %v2671, %v2788
      %v2803 = vmul.f32 %v2673, %v2788
      %2805 = vset.pattern.permute.xlu0 0
      %2806 = vperm.xlu0 %2805, %v2794
      %v2807 = vpop.permute.xlu0 %2806
      %2810 = vset.pattern.permute.xlu0 0
      %2811 = vperm.xlu0 %2810, %v2795
      %v2812 = vpop.permute.xlu0 %2811
      %2815 = vset.pattern.permute.xlu0 0
      %2816 = vperm.xlu0 %2815, %v2796
      %v2817 = vpop.permute.xlu0 %2816
      %2820 = vset.pattern.permute.xlu0 0
      %2821 = vperm.xlu0 %2820, %v2797
      %v2822 = vpop.permute.xlu0 %2821
      %2825 = vset.pattern.permute.xlu0 0
      %2826 = vperm.xlu0 %2825, %v2798
      %v2827 = vpop.permute.xlu0 %2826
      %2830 = vset.pattern.permute.xlu0 0
      %2831 = vperm.xlu0 %2830, %v2799
      %v2832 = vpop.permute.xlu0 %2831
      %2835 = vset.pattern.permute.xlu0 0
      %2836 = vperm.xlu0 %2835, %v2800
      %v2837 = vpop.permute.xlu0 %2836
      %2840 = vset.pattern.permute.xlu0 0
      %2841 = vperm.xlu0 %2840, %v2801
      %v2842 = vpop.permute.xlu0 %2841
      %2845 = vset.pattern.permute.xlu0 0
      %2846 = vperm.xlu0 %2845, %v2802
      %v2847 = vpop.permute.xlu0 %2846
      %2850 = vset.pattern.permute.xlu0 0
      %2851 = vperm.xlu0 %2850, %v2803
      %v2852 = vpop.permute.xlu0 %2851
      %v2854 = vmul.f32 %v2807, %v258
      %v2855 = vmul.f32 %v2812, %v259
      %v2856 = vmul.f32 %v2817, %v260
      %v2857 = vmul.f32 %v2822, %v261
      %v2858 = vmul.f32 %v2827, %v262
      %v2859 = vmul.f32 %v2832, %v263
      %v2860 = vmul.f32 %v2837, %v264
      %v2861 = vmul.f32 %v2842, %v265
      %v2862 = vmul.f32 %v2847, %v266
      %v2863 = vmul.f32 %v2852, %v267
      %v2864 = vsel %vm272, %v2854, 0.0
      %v2865 = vsel %vm272, %v2855, 0.0
      %v2866 = vadd.f32 %v2864, %v2865
      %v2867 = vrot.slane %v2866, 4
      %v2868 = vadd.f32 %v2866, %v2867
      %v2869 = vrot.slane %v2868, 2
      %v2870 = vadd.f32 %v2868, %v2869
      %v2871 = vrot.slane %v2870, 1
      %v2872 = vadd.f32 %v2870, %v2871
      %v2873 = vsel %vm272, %v2856, 0.0
      %v2874 = vsel %vm272, %v2857, 0.0
      %v2875 = vadd.f32 %v2873, %v2874
      %v2876 = vrot.slane %v2875, 4
      %v2877 = vadd.f32 %v2875, %v2876
      %v2878 = vrot.slane %v2877, 2
      %v2879 = vadd.f32 %v2877, %v2878
      %v2880 = vrot.slane %v2879, 1
      %v2881 = vadd.f32 %v2879, %v2880
      %v2882 = vsel %vm272, %v2858, 0.0
      %v2883 = vsel %vm272, %v2859, 0.0
      %v2884 = vadd.f32 %v2882, %v2883
      %v2885 = vrot.slane %v2884, 4
      %v2886 = vadd.f32 %v2884, %v2885
      %v2887 = vrot.slane %v2886, 2
      %v2888 = vadd.f32 %v2886, %v2887
      %v2889 = vrot.slane %v2888, 1
      %v2890 = vadd.f32 %v2888, %v2889
      %v2891 = vsel %vm272, %v2860, 0.0
      %v2892 = vsel %vm272, %v2861, 0.0
      %v2893 = vadd.f32 %v2891, %v2892
      %v2894 = vrot.slane %v2893, 4
      %v2895 = vadd.f32 %v2893, %v2894
      %v2896 = vrot.slane %v2895, 2
      %v2897 = vadd.f32 %v2895, %v2896
      %v2898 = vrot.slane %v2897, 1
      %v2899 = vadd.f32 %v2897, %v2898
      %v2900 = vsel %vm272, %v2862, 0.0
      %v2901 = vsel %vm272, %v2863, 0.0
      %v2902 = vadd.f32 %v2900, %v2901
      %v2903 = vrot.slane %v2902, 4
      %v2904 = vadd.f32 %v2902, %v2903
      %v2905 = vrot.slane %v2904, 2
      %v2906 = vadd.f32 %v2904, %v2905
      %v2907 = vrot.slane %v2906, 1
      %v2908 = vadd.f32 %v2906, %v2907
      %2909 = vst.msk [vmem:[#allocation2 + $0x5] sm:$0x1] %vm843, %v2872
      %2910 = vst.msk [vmem:[#allocation2 + $0xd] sm:$0x1] %vm843, %v2881
      %2911 = vst.msk [vmem:[#allocation2 + $0x15] sm:$0x1] %vm843, %v2890
      %2912 = vst.msk [vmem:[#allocation2 + $0x1d] sm:$0x1] %vm843, %v2899
      %2913 = vst.msk [vmem:[#allocation2 + $0x25] sm:$0x1] %vm843, %v2908
      %v2914 = vlaneseq
      %v2915 = vshrl.u32 %v2914, 7
      %v2916 = vsub.s32 6, %v2915
      %v2917 = vrot.slane %v418, %v2916
      %v2918 = vadd.f32 %v370, %v2917
      %v2919 = vadd.f32 %v375, %v2917
      %v2920 = vadd.f32 %v380, %v2917
      %v2921 = vadd.f32 %v385, %v2917
      %v2922 = vadd.f32 %v390, %v2917
      %v2923 = vadd.f32 %v395, %v2917
      %v2924 = vadd.f32 %v400, %v2917
      %v2925 = vadd.f32 %v405, %v2917
      %v2926 = vadd.f32 %v410, %v2917
      %v2927 = vadd.f32 %v415, %v2917
      %v2928 = vtanh.pop %v2918
      %v2929 = vtanh.pop %v2919
      %v2930 = vtanh.pop %v2920
      %v2931 = vtanh.pop %v2921
      %v2932 = vtanh.pop %v2922
      %v2933 = vtanh.pop %v2923
      %v2934 = vtanh.pop %v2924
      %v2935 = vtanh.pop %v2925
      %v2936 = vtanh.pop %v2926
      %v2937 = vtanh.pop %v2927
      %v2938 = vmul.f32 %v2928, %v448
      %v2939 = vmul.f32 %v2929, %v448
      %v2940 = vmul.f32 %v2930, %v448
      %v2941 = vmul.f32 %v2931, %v448
      %v2942 = vmul.f32 %v2932, %v448
      %v2943 = vmul.f32 %v2933, %v448
      %v2944 = vmul.f32 %v2934, %v448
      %v2945 = vmul.f32 %v2935, %v448
      %v2946 = vmul.f32 %v2936, %v448
      %v2947 = vmul.f32 %v2937, %v448
      %2948 = vadd.xlane.f32.xlu0 %v2938
      %v2949 = vpop.xlane.xlu0 %2948
      %2950 = vadd.xlane.f32.xlu0 %v2939
      %v2951 = vpop.xlane.xlu0 %2950
      %2952 = vadd.xlane.f32.xlu0 %v2940
      %v2953 = vpop.xlane.xlu0 %2952
      %2954 = vadd.xlane.f32.xlu0 %v2941
      %v2955 = vpop.xlane.xlu0 %2954
      %2956 = vadd.xlane.f32.xlu0 %v2942
      %v2957 = vpop.xlane.xlu0 %2956
      %2958 = vadd.xlane.f32.xlu0 %v2943
      %v2959 = vpop.xlane.xlu0 %2958
      %2960 = vadd.xlane.f32.xlu0 %v2944
      %v2961 = vpop.xlane.xlu0 %2960
      %2962 = vadd.xlane.f32.xlu0 %v2945
      %v2963 = vpop.xlane.xlu0 %2962
      %2964 = vadd.xlane.f32.xlu0 %v2946
      %v2965 = vpop.xlane.xlu0 %2964
      %2966 = vadd.xlane.f32.xlu0 %v2947
      %v2967 = vpop.xlane.xlu0 %2966
      %v2978 = vlaneseq
      %v2979 = vshrl.u32 %v2978, 7
      %v2980 = vsub.s32 %v491, %v2979
      %v2981 = vrot.slane %v2949, %v2980
      %v2982 = vlaneseq
      %v2983 = vshrl.u32 %v2982, 7
      %v2984 = vsub.s32 %v496, %v2983
      %v2985 = vrot.slane %v2951, %v2984
      %v2986 = vsel %vm501, %v2985, %v2981
      %v2987 = vlaneseq
      %v2988 = vshrl.u32 %v2987, 7
      %v2989 = vsub.s32 %v491, %v2988
      %v2990 = vrot.slane %v2953, %v2989
      %v2991 = vlaneseq
      %v2992 = vshrl.u32 %v2991, 7
      %v2993 = vsub.s32 %v496, %v2992
      %v2994 = vrot.slane %v2955, %v2993
      %v2995 = vsel %vm501, %v2994, %v2990
      %v2996 = vlaneseq
      %v2997 = vshrl.u32 %v2996, 7
      %v2998 = vsub.s32 %v491, %v2997
      %v2999 = vrot.slane %v2957, %v2998
      %v3000 = vlaneseq
      %v3001 = vshrl.u32 %v3000, 7
      %v3002 = vsub.s32 %v496, %v3001
      %v3003 = vrot.slane %v2959, %v3002
      %v3004 = vsel %vm501, %v3003, %v2999
      %v3005 = vlaneseq
      %v3006 = vshrl.u32 %v3005, 7
      %v3007 = vsub.s32 %v491, %v3006
      %v3008 = vrot.slane %v2961, %v3007
      %v3009 = vlaneseq
      %v3010 = vshrl.u32 %v3009, 7
      %v3011 = vsub.s32 %v496, %v3010
      %v3012 = vrot.slane %v2963, %v3011
      %v3013 = vsel %vm501, %v3012, %v3008
      %v3014 = vlaneseq
      %v3015 = vshrl.u32 %v3014, 7
      %v3016 = vsub.s32 %v491, %v3015
      %v3017 = vrot.slane %v2965, %v3016
      %v3018 = vlaneseq
      %v3019 = vshrl.u32 %v3018, 7
      %v3020 = vsub.s32 %v496, %v3019
      %v3021 = vrot.slane %v2967, %v3020
      %v3022 = vsel %vm501, %v3021, %v3017
      %v3023 = vsel %vm539, %v2995, %v2986
      %v3024 = vsel %vm541, %v3004, %v3023
      %v3025 = vsel %vm543, %v3013, %v3024
      %v3026 = vsel %vm545, %v3022, %v3025
      %v3028 = vsel %vm548, %v3026, -inf
      %3029 = vmax.xlane.f32.xlu0 %v3028
      %v3030 = vpop.xlane.xlu0 %3029
      %v3032 = vlaneseq
      %v3033 = vshrl.u32 %v3032, 7
      %v3034 = vsub.s32 0, %v3033
      %v3035 = vrot.slane %v3030, %v3034
      %v3036 = vlaneseq
      %v3037 = vshrl.u32 %v3036, 7
      %v3038 = vsub.s32 1, %v3037
      %v3039 = vrot.slane %v3030, %v3038
      %v3040 = vlaneseq
      %v3041 = vshrl.u32 %v3040, 7
      %v3042 = vsub.s32 2, %v3041
      %v3043 = vrot.slane %v3030, %v3042
      %v3044 = vlaneseq
      %v3045 = vshrl.u32 %v3044, 7
      %v3046 = vsub.s32 3, %v3045
      %v3047 = vrot.slane %v3030, %v3046
      %v3048 = vlaneseq
      %v3049 = vshrl.u32 %v3048, 7
      %v3050 = vsub.s32 4, %v3049
      %v3051 = vrot.slane %v3030, %v3050
      %v3057 = vsub.f32 %v2949, %v3035
      %v3058 = vsub.f32 %v2951, %v3035
      %v3059 = vsub.f32 %v2953, %v3039
      %v3060 = vsub.f32 %v2955, %v3039
      %v3061 = vsub.f32 %v2957, %v3043
      %v3062 = vsub.f32 %v2959, %v3043
      %v3063 = vsub.f32 %v2961, %v3047
      %v3064 = vsub.f32 %v2963, %v3047
      %v3065 = vsub.f32 %v2965, %v3051
      %v3066 = vsub.f32 %v2967, %v3051
      %v3067 = vmul.f32 %v3057, 1.442695
      %v3068 = vpow.pop %v3067
      %v3069 = vmul.f32 %v3058, 1.442695
      %v3070 = vpow.pop %v3069
      %v3071 = vmul.f32 %v3059, 1.442695
      %v3072 = vpow.pop %v3071
      %v3073 = vmul.f32 %v3060, 1.442695
      %v3074 = vpow.pop %v3073
      %v3075 = vmul.f32 %v3061, 1.442695
      %v3076 = vpow.pop %v3075
      %v3077 = vmul.f32 %v3062, 1.442695
      %v3078 = vpow.pop %v3077
      %v3079 = vmul.f32 %v3063, 1.442695
      %v3080 = vpow.pop %v3079
      %v3081 = vmul.f32 %v3064, 1.442695
      %v3082 = vpow.pop %v3081
      %v3083 = vmul.f32 %v3065, 1.442695
      %v3084 = vpow.pop %v3083
      %v3085 = vmul.f32 %v3066, 1.442695
      %v3086 = vpow.pop %v3085
      %3097 = vset.pattern.permute.xlu0 0
      %3098 = vperm.xlu0 %3097, %v3068
      %v3099 = vpop.permute.xlu0 %3098
      %3100 = vset.pattern.permute.xlu0 0
      %3101 = vperm.xlu0 %3100, %v3070
      %v3102 = vpop.permute.xlu0 %3101
      %3103 = vset.pattern.permute.xlu0 0
      %3104 = vperm.xlu0 %3103, %v3072
      %v3105 = vpop.permute.xlu0 %3104
      %3106 = vset.pattern.permute.xlu0 0
      %3107 = vperm.xlu0 %3106, %v3074
      %v3108 = vpop.permute.xlu0 %3107
      %3109 = vset.pattern.permute.xlu0 0
      %3110 = vperm.xlu0 %3109, %v3076
      %v3111 = vpop.permute.xlu0 %3110
      %3112 = vset.pattern.permute.xlu0 0
      %3113 = vperm.xlu0 %3112, %v3078
      %v3114 = vpop.permute.xlu0 %3113
      %3115 = vset.pattern.permute.xlu0 0
      %3116 = vperm.xlu0 %3115, %v3080
      %v3117 = vpop.permute.xlu0 %3116
      %3118 = vset.pattern.permute.xlu0 0
      %3119 = vperm.xlu0 %3118, %v3082
      %v3120 = vpop.permute.xlu0 %3119
      %3121 = vset.pattern.permute.xlu0 0
      %3122 = vperm.xlu0 %3121, %v3084
      %v3123 = vpop.permute.xlu0 %3122
      %3124 = vset.pattern.permute.xlu0 0
      %3125 = vperm.xlu0 %3124, %v3086
      %v3126 = vpop.permute.xlu0 %3125
      %v3127 = vlaneseq
      %v3128 = vshrl.u32 %v3127, 7
      %v3129 = vsub.s32 %v491, %v3128
      %v3130 = vrot.slane %v3099, %v3129
      %v3131 = vlaneseq
      %v3132 = vshrl.u32 %v3131, 7
      %v3133 = vsub.s32 %v496, %v3132
      %v3134 = vrot.slane %v3102, %v3133
      %v3135 = vsel %vm501, %v3134, %v3130
      %v3136 = vlaneseq
      %v3137 = vshrl.u32 %v3136, 7
      %v3138 = vsub.s32 %v491, %v3137
      %v3139 = vrot.slane %v3105, %v3138
      %v3140 = vlaneseq
      %v3141 = vshrl.u32 %v3140, 7
      %v3142 = vsub.s32 %v496, %v3141
      %v3143 = vrot.slane %v3108, %v3142
      %v3144 = vsel %vm501, %v3143, %v3139
      %v3145 = vlaneseq
      %v3146 = vshrl.u32 %v3145, 7
      %v3147 = vsub.s32 %v491, %v3146
      %v3148 = vrot.slane %v3111, %v3147
      %v3149 = vlaneseq
      %v3150 = vshrl.u32 %v3149, 7
      %v3151 = vsub.s32 %v496, %v3150
      %v3152 = vrot.slane %v3114, %v3151
      %v3153 = vsel %vm501, %v3152, %v3148
      %v3154 = vlaneseq
      %v3155 = vshrl.u32 %v3154, 7
      %v3156 = vsub.s32 %v491, %v3155
      %v3157 = vrot.slane %v3117, %v3156
      %v3158 = vlaneseq
      %v3159 = vshrl.u32 %v3158, 7
      %v3160 = vsub.s32 %v496, %v3159
      %v3161 = vrot.slane %v3120, %v3160
      %v3162 = vsel %vm501, %v3161, %v3157
      %v3163 = vlaneseq
      %v3164 = vshrl.u32 %v3163, 7
      %v3165 = vsub.s32 %v491, %v3164
      %v3166 = vrot.slane %v3123, %v3165
      %v3167 = vlaneseq
      %v3168 = vshrl.u32 %v3167, 7
      %v3169 = vsub.s32 %v496, %v3168
      %v3170 = vrot.slane %v3126, %v3169
      %v3171 = vsel %vm501, %v3170, %v3166
      %v3172 = vsel %vm539, %v3144, %v3135
      %v3173 = vsel %vm541, %v3153, %v3172
      %v3174 = vsel %vm543, %v3162, %v3173
      %v3175 = vsel %vm545, %v3171, %v3174
      %v3177 = vsel %vm548, %v3175, 0.0
      %3178 = vadd.xlane.f32.xlu0 %v3177
      %v3179 = vpop.xlane.xlu0 %3178
      %v3180 = vrcp.pop %v3179
      %v3182 = vlaneseq
      %v3183 = vshrl.u32 %v3182, 7
      %v3184 = vsub.s32 0, %v3183
      %v3185 = vrot.slane %v3180, %v3184
      %v3186 = vlaneseq
      %v3187 = vshrl.u32 %v3186, 7
      %v3188 = vsub.s32 1, %v3187
      %v3189 = vrot.slane %v3180, %v3188
      %v3190 = vlaneseq
      %v3191 = vshrl.u32 %v3190, 7
      %v3192 = vsub.s32 2, %v3191
      %v3193 = vrot.slane %v3180, %v3192
      %v3194 = vlaneseq
      %v3195 = vshrl.u32 %v3194, 7
      %v3196 = vsub.s32 3, %v3195
      %v3197 = vrot.slane %v3180, %v3196
      %v3198 = vlaneseq
      %v3199 = vshrl.u32 %v3198, 7
      %v3200 = vsub.s32 4, %v3199
      %v3201 = vrot.slane %v3180, %v3200
      %v3207 = vmul.f32 %v3068, %v3185
      %v3208 = vmul.f32 %v3070, %v3185
      %v3209 = vmul.f32 %v3072, %v3189
      %v3210 = vmul.f32 %v3074, %v3189
      %v3211 = vmul.f32 %v3076, %v3193
      %v3212 = vmul.f32 %v3078, %v3193
      %v3213 = vmul.f32 %v3080, %v3197
      %v3214 = vmul.f32 %v3082, %v3197
      %v3215 = vmul.f32 %v3084, %v3201
      %v3216 = vmul.f32 %v3086, %v3201
      %3218 = vset.pattern.permute.xlu0 0
      %3219 = vperm.xlu0 %3218, %v3207
      %v3220 = vpop.permute.xlu0 %3219
      %3223 = vset.pattern.permute.xlu0 0
      %3224 = vperm.xlu0 %3223, %v3208
      %v3225 = vpop.permute.xlu0 %3224
      %3228 = vset.pattern.permute.xlu0 0
      %3229 = vperm.xlu0 %3228, %v3209
      %v3230 = vpop.permute.xlu0 %3229
      %3233 = vset.pattern.permute.xlu0 0
      %3234 = vperm.xlu0 %3233, %v3210
      %v3235 = vpop.permute.xlu0 %3234
      %3238 = vset.pattern.permute.xlu0 0
      %3239 = vperm.xlu0 %3238, %v3211
      %v3240 = vpop.permute.xlu0 %3239
      %3243 = vset.pattern.permute.xlu0 0
      %3244 = vperm.xlu0 %3243, %v3212
      %v3245 = vpop.permute.xlu0 %3244
      %3248 = vset.pattern.permute.xlu0 0
      %3249 = vperm.xlu0 %3248, %v3213
      %v3250 = vpop.permute.xlu0 %3249
      %3253 = vset.pattern.permute.xlu0 0
      %3254 = vperm.xlu0 %3253, %v3214
      %v3255 = vpop.permute.xlu0 %3254
      %3258 = vset.pattern.permute.xlu0 0
      %3259 = vperm.xlu0 %3258, %v3215
      %v3260 = vpop.permute.xlu0 %3259
      %3263 = vset.pattern.permute.xlu0 0
      %3264 = vperm.xlu0 %3263, %v3216
      %v3265 = vpop.permute.xlu0 %3264
      %v3267 = vmul.f32 %v3220, %v258
      %v3268 = vmul.f32 %v3225, %v259
      %v3269 = vmul.f32 %v3230, %v260
      %v3270 = vmul.f32 %v3235, %v261
      %v3271 = vmul.f32 %v3240, %v262
      %v3272 = vmul.f32 %v3245, %v263
      %v3273 = vmul.f32 %v3250, %v264
      %v3274 = vmul.f32 %v3255, %v265
      %v3275 = vmul.f32 %v3260, %v266
      %v3276 = vmul.f32 %v3265, %v267
      %v3277 = vsel %vm272, %v3267, 0.0
      %v3278 = vsel %vm272, %v3268, 0.0
      %v3279 = vadd.f32 %v3277, %v3278
      %v3280 = vrot.slane %v3279, 4
      %v3281 = vadd.f32 %v3279, %v3280
      %v3282 = vrot.slane %v3281, 2
      %v3283 = vadd.f32 %v3281, %v3282
      %v3284 = vrot.slane %v3283, 1
      %v3285 = vadd.f32 %v3283, %v3284
      %v3286 = vsel %vm272, %v3269, 0.0
      %v3287 = vsel %vm272, %v3270, 0.0
      %v3288 = vadd.f32 %v3286, %v3287
      %v3289 = vrot.slane %v3288, 4
      %v3290 = vadd.f32 %v3288, %v3289
      %v3291 = vrot.slane %v3290, 2
      %v3292 = vadd.f32 %v3290, %v3291
      %v3293 = vrot.slane %v3292, 1
      %v3294 = vadd.f32 %v3292, %v3293
      %v3295 = vsel %vm272, %v3271, 0.0
      %v3296 = vsel %vm272, %v3272, 0.0
      %v3297 = vadd.f32 %v3295, %v3296
      %v3298 = vrot.slane %v3297, 4
      %v3299 = vadd.f32 %v3297, %v3298
      %v3300 = vrot.slane %v3299, 2
      %v3301 = vadd.f32 %v3299, %v3300
      %v3302 = vrot.slane %v3301, 1
      %v3303 = vadd.f32 %v3301, %v3302
      %v3304 = vsel %vm272, %v3273, 0.0
      %v3305 = vsel %vm272, %v3274, 0.0
      %v3306 = vadd.f32 %v3304, %v3305
      %v3307 = vrot.slane %v3306, 4
      %v3308 = vadd.f32 %v3306, %v3307
      %v3309 = vrot.slane %v3308, 2
      %v3310 = vadd.f32 %v3308, %v3309
      %v3311 = vrot.slane %v3310, 1
      %v3312 = vadd.f32 %v3310, %v3311
      %v3313 = vsel %vm272, %v3275, 0.0
      %v3314 = vsel %vm272, %v3276, 0.0
      %v3315 = vadd.f32 %v3313, %v3314
      %v3316 = vrot.slane %v3315, 4
      %v3317 = vadd.f32 %v3315, %v3316
      %v3318 = vrot.slane %v3317, 2
      %v3319 = vadd.f32 %v3317, %v3318
      %v3320 = vrot.slane %v3319, 1
      %v3321 = vadd.f32 %v3319, %v3320
      %3322 = vst.msk [vmem:[#allocation2 + $0x6] sm:$0x1] %vm843, %v3285
      %3323 = vst.msk [vmem:[#allocation2 + $0xe] sm:$0x1] %vm843, %v3294
      %3324 = vst.msk [vmem:[#allocation2 + $0x16] sm:$0x1] %vm843, %v3303
      %3325 = vst.msk [vmem:[#allocation2 + $0x1e] sm:$0x1] %vm843, %v3312
      %3326 = vst.msk [vmem:[#allocation2 + $0x26] sm:$0x1] %vm843, %v3321
      %v3327 = vlaneseq
      %v3328 = vshrl.u32 %v3327, 7
      %v3329 = vsub.s32 7, %v3328
      %v3330 = vrot.slane %v418, %v3329
      %v3331 = vadd.f32 %v370, %v3330
      %v3332 = vadd.f32 %v375, %v3330
      %v3333 = vadd.f32 %v380, %v3330
      %v3334 = vadd.f32 %v385, %v3330
      %v3335 = vadd.f32 %v390, %v3330
      %v3336 = vadd.f32 %v395, %v3330
      %v3337 = vadd.f32 %v400, %v3330
      %v3338 = vadd.f32 %v405, %v3330
      %v3339 = vadd.f32 %v410, %v3330
      %v3340 = vadd.f32 %v415, %v3330
      %v3341 = vtanh.pop %v3331
      %v3342 = vtanh.pop %v3332
      %v3343 = vtanh.pop %v3333
      %v3344 = vtanh.pop %v3334
      %v3345 = vtanh.pop %v3335
      %v3346 = vtanh.pop %v3336
      %v3347 = vtanh.pop %v3337
      %v3348 = vtanh.pop %v3338
      %v3349 = vtanh.pop %v3339
      %v3350 = vtanh.pop %v3340
      %v3351 = vmul.f32 %v3341, %v448
      %v3352 = vmul.f32 %v3342, %v448
      %v3353 = vmul.f32 %v3343, %v448
      %v3354 = vmul.f32 %v3344, %v448
      %v3355 = vmul.f32 %v3345, %v448
      %v3356 = vmul.f32 %v3346, %v448
      %v3357 = vmul.f32 %v3347, %v448
      %v3358 = vmul.f32 %v3348, %v448
      %v3359 = vmul.f32 %v3349, %v448
      %v3360 = vmul.f32 %v3350, %v448
      %3361 = vadd.xlane.f32.xlu0 %v3351
      %v3362 = vpop.xlane.xlu0 %3361
      %3363 = vadd.xlane.f32.xlu0 %v3352
      %v3364 = vpop.xlane.xlu0 %3363
      %3365 = vadd.xlane.f32.xlu0 %v3353
      %v3366 = vpop.xlane.xlu0 %3365
      %3367 = vadd.xlane.f32.xlu0 %v3354
      %v3368 = vpop.xlane.xlu0 %3367
      %3369 = vadd.xlane.f32.xlu0 %v3355
      %v3370 = vpop.xlane.xlu0 %3369
      %3371 = vadd.xlane.f32.xlu0 %v3356
      %v3372 = vpop.xlane.xlu0 %3371
      %3373 = vadd.xlane.f32.xlu0 %v3357
      %v3374 = vpop.xlane.xlu0 %3373
      %3375 = vadd.xlane.f32.xlu0 %v3358
      %v3376 = vpop.xlane.xlu0 %3375
      %3377 = vadd.xlane.f32.xlu0 %v3359
      %v3378 = vpop.xlane.xlu0 %3377
      %3379 = vadd.xlane.f32.xlu0 %v3360
      %v3380 = vpop.xlane.xlu0 %3379
      %v3391 = vlaneseq
      %v3392 = vshrl.u32 %v3391, 7
      %v3393 = vsub.s32 %v491, %v3392
      %v3394 = vrot.slane %v3362, %v3393
      %v3395 = vlaneseq
      %v3396 = vshrl.u32 %v3395, 7
      %v3397 = vsub.s32 %v496, %v3396
      %v3398 = vrot.slane %v3364, %v3397
      %v3399 = vsel %vm501, %v3398, %v3394
      %v3400 = vlaneseq
      %v3401 = vshrl.u32 %v3400, 7
      %v3402 = vsub.s32 %v491, %v3401
      %v3403 = vrot.slane %v3366, %v3402
      %v3404 = vlaneseq
      %v3405 = vshrl.u32 %v3404, 7
      %v3406 = vsub.s32 %v496, %v3405
      %v3407 = vrot.slane %v3368, %v3406
      %v3408 = vsel %vm501, %v3407, %v3403
      %v3409 = vlaneseq
      %v3410 = vshrl.u32 %v3409, 7
      %v3411 = vsub.s32 %v491, %v3410
      %v3412 = vrot.slane %v3370, %v3411
      %v3413 = vlaneseq
      %v3414 = vshrl.u32 %v3413, 7
      %v3415 = vsub.s32 %v496, %v3414
      %v3416 = vrot.slane %v3372, %v3415
      %v3417 = vsel %vm501, %v3416, %v3412
      %v3418 = vlaneseq
      %v3419 = vshrl.u32 %v3418, 7
      %v3420 = vsub.s32 %v491, %v3419
      %v3421 = vrot.slane %v3374, %v3420
      %v3422 = vlaneseq
      %v3423 = vshrl.u32 %v3422, 7
      %v3424 = vsub.s32 %v496, %v3423
      %v3425 = vrot.slane %v3376, %v3424
      %v3426 = vsel %vm501, %v3425, %v3421
      %v3427 = vlaneseq
      %v3428 = vshrl.u32 %v3427, 7
      %v3429 = vsub.s32 %v491, %v3428
      %v3430 = vrot.slane %v3378, %v3429
      %v3431 = vlaneseq
      %v3432 = vshrl.u32 %v3431, 7
      %v3433 = vsub.s32 %v496, %v3432
      %v3434 = vrot.slane %v3380, %v3433
      %v3435 = vsel %vm501, %v3434, %v3430
      %v3436 = vsel %vm539, %v3408, %v3399
      %v3437 = vsel %vm541, %v3417, %v3436
      %v3438 = vsel %vm543, %v3426, %v3437
      %v3439 = vsel %vm545, %v3435, %v3438
      %v3441 = vsel %vm548, %v3439, -inf
      %3442 = vmax.xlane.f32.xlu0 %v3441
      %v3443 = vpop.xlane.xlu0 %3442
      %v3445 = vlaneseq
      %v3446 = vshrl.u32 %v3445, 7
      %v3447 = vsub.s32 0, %v3446
      %v3448 = vrot.slane %v3443, %v3447
      %v3449 = vlaneseq
      %v3450 = vshrl.u32 %v3449, 7
      %v3451 = vsub.s32 1, %v3450
      %v3452 = vrot.slane %v3443, %v3451
      %v3453 = vlaneseq
      %v3454 = vshrl.u32 %v3453, 7
      %v3455 = vsub.s32 2, %v3454
      %v3456 = vrot.slane %v3443, %v3455
      %v3457 = vlaneseq
      %v3458 = vshrl.u32 %v3457, 7
      %v3459 = vsub.s32 3, %v3458
      %v3460 = vrot.slane %v3443, %v3459
      %v3461 = vlaneseq
      %v3462 = vshrl.u32 %v3461, 7
      %v3463 = vsub.s32 4, %v3462
      %v3464 = vrot.slane %v3443, %v3463
      %v3470 = vsub.f32 %v3362, %v3448
      %v3471 = vsub.f32 %v3364, %v3448
      %v3472 = vsub.f32 %v3366, %v3452
      %v3473 = vsub.f32 %v3368, %v3452
      %v3474 = vsub.f32 %v3370, %v3456
      %v3475 = vsub.f32 %v3372, %v3456
      %v3476 = vsub.f32 %v3374, %v3460
      %v3477 = vsub.f32 %v3376, %v3460
      %v3478 = vsub.f32 %v3378, %v3464
      %v3479 = vsub.f32 %v3380, %v3464
      %v3480 = vmul.f32 %v3470, 1.442695
      %v3481 = vpow.pop %v3480
      %v3482 = vmul.f32 %v3471, 1.442695
      %v3483 = vpow.pop %v3482
      %v3484 = vmul.f32 %v3472, 1.442695
      %v3485 = vpow.pop %v3484
      %v3486 = vmul.f32 %v3473, 1.442695
      %v3487 = vpow.pop %v3486
      %v3488 = vmul.f32 %v3474, 1.442695
      %v3489 = vpow.pop %v3488
      %v3490 = vmul.f32 %v3475, 1.442695
      %v3491 = vpow.pop %v3490
      %v3492 = vmul.f32 %v3476, 1.442695
      %v3493 = vpow.pop %v3492
      %v3494 = vmul.f32 %v3477, 1.442695
      %v3495 = vpow.pop %v3494
      %v3496 = vmul.f32 %v3478, 1.442695
      %v3497 = vpow.pop %v3496
      %v3498 = vmul.f32 %v3479, 1.442695
      %v3499 = vpow.pop %v3498
      %3510 = vset.pattern.permute.xlu0 0
      %3511 = vperm.xlu0 %3510, %v3481
      %v3512 = vpop.permute.xlu0 %3511
      %3513 = vset.pattern.permute.xlu0 0
      %3514 = vperm.xlu0 %3513, %v3483
      %v3515 = vpop.permute.xlu0 %3514
      %3516 = vset.pattern.permute.xlu0 0
      %3517 = vperm.xlu0 %3516, %v3485
      %v3518 = vpop.permute.xlu0 %3517
      %3519 = vset.pattern.permute.xlu0 0
      %3520 = vperm.xlu0 %3519, %v3487
      %v3521 = vpop.permute.xlu0 %3520
      %3522 = vset.pattern.permute.xlu0 0
      %3523 = vperm.xlu0 %3522, %v3489
      %v3524 = vpop.permute.xlu0 %3523
      %3525 = vset.pattern.permute.xlu0 0
      %3526 = vperm.xlu0 %3525, %v3491
      %v3527 = vpop.permute.xlu0 %3526
      %3528 = vset.pattern.permute.xlu0 0
      %3529 = vperm.xlu0 %3528, %v3493
      %v3530 = vpop.permute.xlu0 %3529
      %3531 = vset.pattern.permute.xlu0 0
      %3532 = vperm.xlu0 %3531, %v3495
      %v3533 = vpop.permute.xlu0 %3532
      %3534 = vset.pattern.permute.xlu0 0
      %3535 = vperm.xlu0 %3534, %v3497
      %v3536 = vpop.permute.xlu0 %3535
      %3537 = vset.pattern.permute.xlu0 0
      %3538 = vperm.xlu0 %3537, %v3499
      %v3539 = vpop.permute.xlu0 %3538
      %v3540 = vlaneseq
      %v3541 = vshrl.u32 %v3540, 7
      %v3542 = vsub.s32 %v491, %v3541
      %v3543 = vrot.slane %v3512, %v3542
      %v3544 = vlaneseq
      %v3545 = vshrl.u32 %v3544, 7
      %v3546 = vsub.s32 %v496, %v3545
      %v3547 = vrot.slane %v3515, %v3546
      %v3548 = vsel %vm501, %v3547, %v3543
      %v3549 = vlaneseq
      %v3550 = vshrl.u32 %v3549, 7
      %v3551 = vsub.s32 %v491, %v3550
      %v3552 = vrot.slane %v3518, %v3551
      %v3553 = vlaneseq
      %v3554 = vshrl.u32 %v3553, 7
      %v3555 = vsub.s32 %v496, %v3554
      %v3556 = vrot.slane %v3521, %v3555
      %v3557 = vsel %vm501, %v3556, %v3552
      %v3558 = vlaneseq
      %v3559 = vshrl.u32 %v3558, 7
      %v3560 = vsub.s32 %v491, %v3559
      %v3561 = vrot.slane %v3524, %v3560
      %v3562 = vlaneseq
      %v3563 = vshrl.u32 %v3562, 7
      %v3564 = vsub.s32 %v496, %v3563
      %v3565 = vrot.slane %v3527, %v3564
      %v3566 = vsel %vm501, %v3565, %v3561
      %v3567 = vlaneseq
      %v3568 = vshrl.u32 %v3567, 7
      %v3569 = vsub.s32 %v491, %v3568
      %v3570 = vrot.slane %v3530, %v3569
      %v3571 = vlaneseq
      %v3572 = vshrl.u32 %v3571, 7
      %v3573 = vsub.s32 %v496, %v3572
      %v3574 = vrot.slane %v3533, %v3573
      %v3575 = vsel %vm501, %v3574, %v3570
      %v3576 = vlaneseq
      %v3577 = vshrl.u32 %v3576, 7
      %v3578 = vsub.s32 %v491, %v3577
      %v3579 = vrot.slane %v3536, %v3578
      %v3580 = vlaneseq
      %v3581 = vshrl.u32 %v3580, 7
      %v3582 = vsub.s32 %v496, %v3581
      %v3583 = vrot.slane %v3539, %v3582
      %v3584 = vsel %vm501, %v3583, %v3579
      %v3585 = vsel %vm539, %v3557, %v3548
      %v3586 = vsel %vm541, %v3566, %v3585
      %v3587 = vsel %vm543, %v3575, %v3586
      %v3588 = vsel %vm545, %v3584, %v3587
      %v3590 = vsel %vm548, %v3588, 0.0
      %3591 = vadd.xlane.f32.xlu0 %v3590
      %v3592 = vpop.xlane.xlu0 %3591
      %v3593 = vrcp.pop %v3592
      %v3595 = vlaneseq
      %v3596 = vshrl.u32 %v3595, 7
      %v3597 = vsub.s32 0, %v3596
      %v3598 = vrot.slane %v3593, %v3597
      %v3599 = vlaneseq
      %v3600 = vshrl.u32 %v3599, 7
      %v3601 = vsub.s32 1, %v3600
      %v3602 = vrot.slane %v3593, %v3601
      %v3603 = vlaneseq
      %v3604 = vshrl.u32 %v3603, 7
      %v3605 = vsub.s32 2, %v3604
      %v3606 = vrot.slane %v3593, %v3605
      %v3607 = vlaneseq
      %v3608 = vshrl.u32 %v3607, 7
      %v3609 = vsub.s32 3, %v3608
      %v3610 = vrot.slane %v3593, %v3609
      %v3611 = vlaneseq
      %v3612 = vshrl.u32 %v3611, 7
      %v3613 = vsub.s32 4, %v3612
      %v3614 = vrot.slane %v3593, %v3613
      %v3620 = vmul.f32 %v3481, %v3598
      %v3621 = vmul.f32 %v3483, %v3598
      %v3622 = vmul.f32 %v3485, %v3602
      %v3623 = vmul.f32 %v3487, %v3602
      %v3624 = vmul.f32 %v3489, %v3606
      %v3625 = vmul.f32 %v3491, %v3606
      %v3626 = vmul.f32 %v3493, %v3610
      %v3627 = vmul.f32 %v3495, %v3610
      %v3628 = vmul.f32 %v3497, %v3614
      %v3629 = vmul.f32 %v3499, %v3614
      %3631 = vset.pattern.permute.xlu0 0
      %3632 = vperm.xlu0 %3631, %v3620
      %v3633 = vpop.permute.xlu0 %3632
      %3636 = vset.pattern.permute.xlu0 0
      %3637 = vperm.xlu0 %3636, %v3621
      %v3638 = vpop.permute.xlu0 %3637
      %3641 = vset.pattern.permute.xlu0 0
      %3642 = vperm.xlu0 %3641, %v3622
      %v3643 = vpop.permute.xlu0 %3642
      %3646 = vset.pattern.permute.xlu0 0
      %3647 = vperm.xlu0 %3646, %v3623
      %v3648 = vpop.permute.xlu0 %3647
      %3651 = vset.pattern.permute.xlu0 0
      %3652 = vperm.xlu0 %3651, %v3624
      %v3653 = vpop.permute.xlu0 %3652
      %3656 = vset.pattern.permute.xlu0 0
      %3657 = vperm.xlu0 %3656, %v3625
      %v3658 = vpop.permute.xlu0 %3657
      %3661 = vset.pattern.permute.xlu0 0
      %3662 = vperm.xlu0 %3661, %v3626
      %v3663 = vpop.permute.xlu0 %3662
      %3666 = vset.pattern.permute.xlu0 0
      %3667 = vperm.xlu0 %3666, %v3627
      %v3668 = vpop.permute.xlu0 %3667
      %3671 = vset.pattern.permute.xlu0 0
      %3672 = vperm.xlu0 %3671, %v3628
      %v3673 = vpop.permute.xlu0 %3672
      %3676 = vset.pattern.permute.xlu0 0
      %3677 = vperm.xlu0 %3676, %v3629
      %v3678 = vpop.permute.xlu0 %3677
      %v3680 = vmul.f32 %v3633, %v258
      %v3681 = vmul.f32 %v3638, %v259
      %v3682 = vmul.f32 %v3643, %v260
      %v3683 = vmul.f32 %v3648, %v261
      %v3684 = vmul.f32 %v3653, %v262
      %v3685 = vmul.f32 %v3658, %v263
      %v3686 = vmul.f32 %v3663, %v264
      %v3687 = vmul.f32 %v3668, %v265
      %v3688 = vmul.f32 %v3673, %v266
      %v3689 = vmul.f32 %v3678, %v267
      %v3690 = vsel %vm272, %v3680, 0.0
      %v3691 = vsel %vm272, %v3681, 0.0
      %v3692 = vadd.f32 %v3690, %v3691
      %v3693 = vrot.slane %v3692, 4
      %v3694 = vadd.f32 %v3692, %v3693
      %v3695 = vrot.slane %v3694, 2
      %v3696 = vadd.f32 %v3694, %v3695
      %v3697 = vrot.slane %v3696, 1
      %v3698 = vadd.f32 %v3696, %v3697
      %v3699 = vsel %vm272, %v3682, 0.0
      %v3700 = vsel %vm272, %v3683, 0.0
      %v3701 = vadd.f32 %v3699, %v3700
      %v3702 = vrot.slane %v3701, 4
      %v3703 = vadd.f32 %v3701, %v3702
      %v3704 = vrot.slane %v3703, 2
      %v3705 = vadd.f32 %v3703, %v3704
      %v3706 = vrot.slane %v3705, 1
      %v3707 = vadd.f32 %v3705, %v3706
      %v3708 = vsel %vm272, %v3684, 0.0
      %v3709 = vsel %vm272, %v3685, 0.0
      %v3710 = vadd.f32 %v3708, %v3709
      %v3711 = vrot.slane %v3710, 4
      %v3712 = vadd.f32 %v3710, %v3711
      %v3713 = vrot.slane %v3712, 2
      %v3714 = vadd.f32 %v3712, %v3713
      %v3715 = vrot.slane %v3714, 1
      %v3716 = vadd.f32 %v3714, %v3715
      %v3717 = vsel %vm272, %v3686, 0.0
      %v3718 = vsel %vm272, %v3687, 0.0
      %v3719 = vadd.f32 %v3717, %v3718
      %v3720 = vrot.slane %v3719, 4
      %v3721 = vadd.f32 %v3719, %v3720
      %v3722 = vrot.slane %v3721, 2
      %v3723 = vadd.f32 %v3721, %v3722
      %v3724 = vrot.slane %v3723, 1
      %v3725 = vadd.f32 %v3723, %v3724
      %v3726 = vsel %vm272, %v3688, 0.0
      %v3727 = vsel %vm272, %v3689, 0.0
      %v3728 = vadd.f32 %v3726, %v3727
      %v3729 = vrot.slane %v3728, 4
      %v3730 = vadd.f32 %v3728, %v3729
      %v3731 = vrot.slane %v3730, 2
      %v3732 = vadd.f32 %v3730, %v3731
      %v3733 = vrot.slane %v3732, 1
      %v3734 = vadd.f32 %v3732, %v3733
      %3735 = vst.msk [vmem:[#allocation2 + $0x7] sm:$0x1] %vm843, %v3698
      %3736 = vst.msk [vmem:[#allocation2 + $0xf] sm:$0x1] %vm843, %v3707
      %3737 = vst.msk [vmem:[#allocation2 + $0x17] sm:$0x1] %vm843, %v3716
      %3738 = vst.msk [vmem:[#allocation2 + $0x1f] sm:$0x1] %vm843, %v3725
      %3739 = vst.msk [vmem:[#allocation2 + $0x27] sm:$0x1] %vm843, %v3734
      %v3740 = vld [vmem:[#allocation2] sm:$0xff]
      %v3741 = vld [vmem:[#allocation2 + $0x8] sm:$0xff]
      %v3742 = vld [vmem:[#allocation2 + $0x10] sm:$0xff]
      %v3743 = vld [vmem:[#allocation2 + $0x18] sm:$0xff]
      %v3744 = vld [vmem:[#allocation2 + $0x20] sm:$0xff]
      %v3745 = vld [vmem:[%s5] sm:$0xff]
      %v3746 = vld [vmem:[%s5 + $0x8] sm:$0xff]
      %v3747 = vld [vmem:[%s5 + $0x10] sm:$0xff]
      %v3748 = vld [vmem:[%s5 + $0x18] sm:$0xff]
      %v3750 = vsel %vm272, %v3740, 0
      %v3753 = vsel %vm272, %v3741, 0
      %v3756 = vsel %vm272, %v3742, 0
      %v3759 = vsel %vm272, %v3743, 0
      %v3762 = vsel %vm272, %v3744, 0
      %3764 = vmatprep.subr.mxu0 0.0
      %3765 = vmatpush1.msra.mxu0 %v3745
      %3766 = vmatprep.subr.mxu0 0.0
      %3767 = vmatpush1.msra.mxu0 %v3746
      %3768 = vmatprep.subr.mxu0 0.0
      %3769 = vmatpush1.msra.mxu0 %v3747
      %3770 = vmatprep.subr.mxu0 0.0
      %3771 = vmatpush1.msra.mxu0 %v3748
      %3772 = vmatprep.subr.mxu0 0.0
      %3773 = vmatpush1.msra.mxu0 0.0
      %3774 = vmatprep.subr.mxu0 0.0
      %3775 = vmatpush1.msra.mxu0 0.0
      %3776 = vmatprep.subr.mxu0 0.0
      %3777 = vmatpush1.msra.mxu0 0.0
      %3778 = vmatprep.subr.mxu0 0.0
      %3779 = vmatpush1.msra.mxu0 0.0
      %3780 = vmatprep.subr.mxu0 0.0
      %3781 = vmatpush1.msra.mxu0 0.0
      %3782 = vmatprep.subr.mxu0 0.0
      %3783 = vmatpush1.msra.mxu0 0.0
      %3784 = vmatprep.subr.mxu0 0.0
      %3785 = vmatpush1.msra.mxu0 0.0
      %3786 = vmatprep.subr.mxu0 0.0
      %3787 = vmatpush1.msra.mxu0 0.0
      %3788 = vmatprep.subr.mxu0 0.0
      %3789 = vmatpush1.msra.mxu0 0.0
      %3790 = vmatprep.subr.mxu0 0.0
      %3791 = vmatpush1.msra.mxu0 0.0
      %3792 = vmatprep.subr.mxu0 0.0
      %3793 = vmatpush1.msra.mxu0 0.0
      %3794 = vmatprep.subr.mxu0 0.0
      %3795 = vmatpush1.msra.mxu0 0.0
      %3796 = vmatprep.subr.mxu0 0.0
      %3797 = vmatpush1.msra.mxu0 0.0
      %3798 = vmatprep.subr.mxu0 0.0
      %3799 = vmatpush1.msra.mxu0 0.0
      %3800 = vmatprep.subr.mxu0 0.0
      %3801 = vmatpush1.msra.mxu0 0.0
      %3802 = vmatprep.subr.mxu0 0.0
      %3803 = vmatpush1.msra.mxu0 0.0
      %3804 = vmatprep.subr.mxu0 0.0
      %3805 = vmatpush1.msra.mxu0 0.0
      %3806 = vmatprep.subr.mxu0 0.0
      %3807 = vmatpush1.msra.mxu0 0.0
      %3808 = vmatprep.subr.mxu0 0.0
      %3809 = vmatpush1.msra.mxu0 0.0
      %3810 = vmatprep.subr.mxu0 0.0
      %3811 = vmatpush1.msra.mxu0 0.0
      %3812 = vmatprep.subr.mxu0 0.0
      %3813 = vmatpush1.msra.mxu0 0.0
      %3814 = vmatprep.subr.mxu0 0.0
      %3815 = vmatpush1.msra.mxu0 0.0
      %3816 = vmatprep.subr.mxu0 0.0
      %3817 = vmatpush1.msra.mxu0 0.0
      %3818 = vmatprep.subr.mxu0 0.0
      %3819 = vmatpush1.msra.mxu0 0.0
      %3820 = vmatprep.subr.mxu0 0.0
      %3821 = vmatpush1.msra.mxu0 0.0
      %3822 = vmatprep.subr.mxu0 0.0
      %3823 = vmatpush1.msra.mxu0 0.0
      %3824 = vmatprep.subr.mxu0 0.0
      %3825 = vmatpush1.msra.mxu0 0.0
      %3826 = vmatprep.subr.mxu0 0.0
      %3827 = vmatpush1.msra.mxu0 0.0
      %3828 = vmatprep.mubr.f32.mxu0 0.0
      %3829 = vmatmul.mubr.f32.gmra.mrb[0].mxu0 %v3750
      %v3830 = vpop.f32.mrb[0].mxu0
      %v3831 = vadd.f32 0.0, %v3830
      %v3832 = vpop.f32.mrb[0].mxu0
      %3833 = vmatprep.mubr.f32.mxu0 0.0
      %3834 = vmatmul.mubr.f32.gmra.mrb[0].mxu0 %v3753
      %v3835 = vpop.f32.mrb[0].mxu0
      %v3836 = vadd.f32 0.0, %v3835
      %v3837 = vpop.f32.mrb[0].mxu0
      %3838 = vmatprep.mubr.f32.mxu0 0.0
      %3839 = vmatmul.mubr.f32.gmra.mrb[0].mxu0 %v3756
      %v3840 = vpop.f32.mrb[0].mxu0
      %v3841 = vadd.f32 0.0, %v3840
      %v3842 = vpop.f32.mrb[0].mxu0
      %3843 = vmatprep.mubr.f32.mxu0 0.0
      %3844 = vmatmul.mubr.f32.gmra.mrb[0].mxu0 %v3759
      %v3845 = vpop.f32.mrb[0].mxu0
      %v3846 = vadd.f32 0.0, %v3845
      %v3847 = vpop.f32.mrb[0].mxu0
      %3848 = vmatprep.mubr.f32.mxu0 0.0
      %3849 = vmatmul.mubr.f32.gmra.mrb[0].mxu0 %v3762
      %v3850 = vpop.f32.mrb[0].mxu0
      %v3851 = vadd.f32 0.0, %v3850
      %v3852 = vpop.f32.mrb[0].mxu0
      %3853 = vdwg.mxu0
      %v3854 = vld [vmem:[%s2] sm:$0xff]
      %v3855 = vadd.f32 %v3831, %v3854
      %v3856 = vadd.f32 %v3836, %v3854
      %v3857 = vadd.f32 %v3841, %v3854
      %v3858 = vadd.f32 %v3846, %v3854
      %v3859 = vadd.f32 %v3851, %v3854
      %3860 = vst [vmem:[%s256] sm:$0xff] %v3855
      %3861 = vst [vmem:[%s256 + $0x8] sm:$0xff] %v3856
      %3862 = vst [vmem:[%s256 + $0x10] sm:$0xff] %v3857
      %3863 = vst [vmem:[%s256 + $0x18] sm:$0xff] %v3858
      %3864 = vst [vmem:[%s256 + $0x20] sm:$0xff] %v3859
      %s3865 = smul.u32 5, %s17
      %p3866 = scmp.lt.s32.totalorder %s3865, 9
      %s3867 = scalar_select %p3866, %s3865, 9
      %s3868 = smul.addr %s3867, 8
      %s3869 = scalar_lea.vmem %s6, %s3868
      // Predicated region
      $region45: #{nar_decoder_forward.1} parent=43 // pred_check
        %p3870 = pneg %p166
      $region46: #{nar_decoder_forward.1} parent=43 // pred_check_branch
        %3872 = sbr.rel (%p3870) target = $region48
      $region47: #{nar_decoder_forward.1} parent=43 // pred_region
        %s3873 = smul.u32 5, %s17
      $region48: #{nar_decoder_forward.1} parent=43 // pred_fallthru
        _
    $region44: #{nar_decoder_forward.1} parent=5 // pred_fallthru
      _
    %p3874 = scmp.le.s32.totalorder 2, %s12
    // Predicated region
    $region49: #{nar_decoder_forward.1} parent=5 // pred_check
      %p3875 = pneg %p3874
    $region50: #{nar_decoder_forward.1} parent=5 // pred_check_branch
      %3877 = sbr.rel (%p3875) target = $region52
    $region51: #{nar_decoder_forward.1} parent=5 // pred_region
      %s3878 = ssub.s32 %s12, 2
      // Predicated region
      $region53: #{nar_decoder_forward.1} parent=51 // pred_check
        %p3879 = pneg %p172
      $region54: #{nar_decoder_forward.1} parent=51 // pred_check_branch
        %3881 = sbr.rel (%p3879) target = $region56
      $region55: #{nar_decoder_forward.1} parent=51 // pred_region
        %s3882 = smul.u32 5, %s18
        %p3883 = scmp.lt.s32.totalorder %s3882, 9
        %s3884 = scalar_select %p3883, %s3882, 9
        %s3885 = smul.addr %s3884, 8
        %s3886 = scalar_lea.vmem %s6, %s3885
      $region56: #{nar_decoder_forward.1} parent=51 // pred_fallthru
        _
    $region52: #{nar_decoder_forward.1} parent=5 // pred_fallthru
      _
  $region6: #{nar_decoder_forward.1} parent=0 // loop_footer
    %s16 = sadd.s32 1, %s12
  $region7: #{nar_decoder_forward.1} parent=0 // loop_footer_branch
    %11 = sbr.rel target = $region3
  $region8: #{nar_decoder_forward.1} parent=0 // loop_exit
    _

</llo_original>
